<compile_context>
chip_gen: v5e
topology: v5e:2x2
jax: 0.10.0
libtpu: 0.0.40
codegen_flags: <defaults>
</compile_context>

<pallas_src>
import jax
import jax.numpy as jnp
from jax.experimental import pallas as pl
from jax.experimental.pallas import tpu as pltpu

EPS = 1e-5
D_IN = 2381


def _round_up(a, m):
    return ((a + m - 1) // m) * m


def ember_kernel(x_ref,
                 w1_ref, b1_ref,
                 w2_ref, s2_ref, t2_ref,
                 w3_ref, s3_ref, t3_ref,
                 w4_ref, s4_ref, t4_ref,
                 w5_ref, b5_ref,
                 out_ref):
    # In-kernel cast of the streamed tile (f32 or bf16 producer both fine).
    x = x_ref[...].astype(jnp.bfloat16)                        # [TB, 2381]

    # Layer 1: Linear(2381->128) + ReLU.  K=2381 is ragged; Mosaic masks the
    # last lane-tile of the MXU feed (no HBM-side K padding).
    h = jnp.dot(x, w1_ref[...], preferred_element_type=jnp.float32) + b1_ref[...]
    h = jnp.maximum(h, 0.0)

    # Layer 2: Linear(128->64) + folded BN + ReLU (dropout = identity at eval).
    h = jnp.dot(h.astype(jnp.bfloat16), w2_ref[...],
                preferred_element_type=jnp.float32)
    h = jnp.maximum(h * s2_ref[...] + t2_ref[...], 0.0)

    # Layer 3: Linear(64->32) + folded BN + ReLU
    h = jnp.dot(h.astype(jnp.bfloat16), w3_ref[...],
                preferred_element_type=jnp.float32)
    h = jnp.maximum(h * s3_ref[...] + t3_ref[...], 0.0)

    # Layer 4: Linear(32->16) + folded BN + ReLU
    h = jnp.dot(h.astype(jnp.bfloat16), w4_ref[...],
                preferred_element_type=jnp.float32)
    h = jnp.maximum(h * s4_ref[...] + t4_ref[...], 0.0)

    # Output layer 16->1: VPU multiply + XLU lane reduce (w5 is a (1,16) row),
    # then exact sigmoid.  Entirely hidden under the x DMA.
    logit = jnp.sum(h * w5_ref[...], axis=-1, keepdims=True) + b5_ref[...]
    out_ref[...] = 1.0 / (1.0 + jnp.exp(-logit))


def _pick_tile_b(batch, x_dtype):
    # VMEM budget for the double-buffered x stream (dominant allocation):
    #   bf16 x: 1024*2381*2B * 2 buffers ~= 9.3 MB
    #   f32  x:  512*2381*4B * 2 buffers ~= 9.3 MB
    # Both fit v5e's 16 MiB scoped-VMEM default (and v6e/v7x defaults) with the
    # ~1.2 MB of resident bf16 weights on top; no vmem_limit override needed.
    cap = 1024 if x_dtype == jnp.bfloat16 else 512
    # Shrink the tile so the grid has >=2 steps -> both v7x TensorCores issue
    # DMA on the "parallel" batch axis even for modest B.
    return max(128, min(cap, _round_up(pl.cdiv(batch, 2), 128)))


def ember_forward(x, params, *, tile_b=None):
    """x: [B, 2381] float32 (or bfloat16). Returns [B, 1] float32 probabilities.

    x is streamed into the kernel at its native dtype with no wrapper-side
    cast/pad pass; the batch axis is tiled with grid = cdiv(B, tile_b) and the
    ragged edge tile is masked by Pallas (no batch-pad copy).
    """
    B, d = x.shape
    assert d == D_IN
    (w1, b1, w2, s2, t2, w3, s3, t3, w4, s4, t4, w5, b5) = params

    if tile_b is None:
        tile_b = _pick_tile_b(B, x.dtype)
    n_tiles = pl.cdiv(B, tile_b)

    # Weights are tiny next to x; cast the MXU weights to bf16 once.  Constant
    # index maps keep them resident in VMEM across all grid steps.
    w1b = w1.astype(jnp.bfloat16)
    w2b = w2.astype(jnp.bfloat16)
    w3b = w3.astype(jnp.bfloat16)
    w4b = w4.astype(jnp.bfloat16)
    w5_row = w5.reshape(1, 16).astype(jnp.float32)   # (16,1) -> (1,16) row

    def resident(shape):
        # Same full block every grid step -> fetched once, held resident.
        return pl.BlockSpec(shape, lambda i: (0, 0))

    out = pl.pallas_call(
        ember_kernel,
        out_shape=jax.ShapeDtypeStruct((B, 1), jnp.float32),
        grid_spec=pltpu.PrefetchScalarGridSpec(
            num_scalar_prefetch=0,
            grid=(n_tiles,),
            in_specs=[
                # x tile: full-extent last dim (2381); edge batch tile masked.
                pl.BlockSpec((tile_b, D_IN), lambda i: (i, 0)),
                resident((D_IN, 128)), resident((1, 128)),                        # layer 1
                resident((128, 64)), resident((1, 64)), resident((1, 64)),        # layer 2
                resident((64, 32)), resident((1, 32)), resident((1, 32)),         # layer 3
                resident((32, 16)), resident((1, 16)), resident((1, 16)),         # layer 4
                resident((1, 16)), resident((1, 1)),                              # output layer
            ],
            out_specs=pl.BlockSpec((tile_b, 1), lambda i: (i, 0)),
        ),
        compiler_params=pltpu.CompilerParams(
            dimension_semantics=("parallel",)),
    )(x, w1b, b1, w2b, s2, t2, w3b, s3, t3, w4b, s4, t4, w5_row, b5)

    return out


def make_params(key):
    """Deterministic synthetic parameters matching Ember_model's shapes.

    Linear weights are stored as [in, out] (transposed from PyTorch's [out, in])
    so the kernel computes x @ W.  BatchNorm (gamma, beta, running stats) and
    the preceding linear bias are folded into per-feature scale/shift
    (eval-mode semantics).
    """
    keys = jax.random.split(key, 24)
    ki = iter(range(24))

    def lin(d_in, d_out):
        w = jax.random.normal(keys[next(ki)], (d_in, d_out), jnp.float32) * (1.0 / jnp.sqrt(d_in))
        b = jax.random.normal(keys[next(ki)], (1, d_out), jnp.float32) * 0.01
        return w, b

    def bn(d):
        gamma = 1.0 + 0.1 * jax.random.normal(keys[next(ki)], (1, d), jnp.float32)
        beta = 0.1 * jax.random.normal(keys[next(ki)], (1, d), jnp.float32)
        mean = 0.1 * jax.random.normal(keys[next(ki)], (1, d), jnp.float32)
        var = 0.5 + jnp.abs(jax.random.normal(keys[next(ki)], (1, d), jnp.float32))
        return gamma, beta, mean, var

    def fold(bias, gamma, beta, mean, var):
        scale = gamma / jnp.sqrt(var + EPS)
        shift = beta + (bias - mean) * scale
        return scale, shift

    w1, b1 = lin(2381, 128)
    w2, b2 = lin(128, 64)
    s2, t2 = fold(b2, *bn(64))
    w3, b3 = lin(64, 32)
    s3, t3 = fold(b3, *bn(32))
    w4, b4 = lin(32, 16)
    s4, t4 = fold(b4, *bn(16))
    w5, b5 = lin(16, 1)

    return (w1, b1, w2, s2, t2, w3, s3, t3, w4, s4, t4, w5, b5)


def ember_reference(x, params):
    """Pure-JAX reference mirroring the kernel's bf16/f32 numerics."""
    (w1, b1, w2, s2, t2, w3, s3, t3, w4, s4, t4, w5, b5) = params
    bf = jnp.bfloat16
    h = jnp.dot(x.astype(bf), w1.astype(bf),
                preferred_element_type=jnp.float32) + b1
    h = jnp.maximum(h, 0.0)
    h = jnp.dot(h.astype(bf), w2.astype(bf), preferred_element_type=jnp.float32)
    h = jnp.maximum(h * s2 + t2, 0.0)
    h = jnp.dot(h.astype(bf), w3.astype(bf), preferred_element_type=jnp.float32)
    h = jnp.maximum(h * s3 + t3, 0.0)
    h = jnp.dot(h.astype(bf), w4.astype(bf), preferred_element_type=jnp.float32)
    h = jnp.maximum(h * s4 + t4, 0.0)
    logit = jnp.dot(h, w5, preferred_element_type=jnp.float32) + b5
    return jax.nn.sigmoid(logit)


if __name__ == "__main__":
    key = jax.random.PRNGKey(0)
    k_param, k_x = jax.random.split(key)

    # Modest demo batch; 500 is not a multiple of the auto-picked tile (256),
    # exercising the masked-edge path and a 2-step "parallel" grid.
    B = 500
    params = make_params(k_param)
    x = jax.random.normal(k_x, (B, D_IN), jnp.float32)

    out = ember_forward(x, params)
    out = jax.block_until_ready(out)

    ref = ember_reference(x, params)
    assert out.shape == (B, 1)
    assert bool(jnp.all(jnp.isfinite(out)))
    assert jnp.allclose(out, ref, atol=3e-3, rtol=3e-3)

    print("KERNEL_OK")
</pallas_src>

<mosaic_0001>
module attributes {stable_mosaic.version = 11 : i64} {
  func.func @ember_kernel(%arg0: i32, %arg1: memref<256x2381xf32, #tpu.memory_space<vmem>>, %arg2: memref<2381x128xbf16, #tpu.memory_space<vmem>>, %arg3: memref<1x128xf32, #tpu.memory_space<vmem>>, %arg4: memref<128x64xbf16, #tpu.memory_space<vmem>>, %arg5: memref<1x64xf32, #tpu.memory_space<vmem>>, %arg6: memref<1x64xf32, #tpu.memory_space<vmem>>, %arg7: memref<64x32xbf16, #tpu.memory_space<vmem>>, %arg8: memref<1x32xf32, #tpu.memory_space<vmem>>, %arg9: memref<1x32xf32, #tpu.memory_space<vmem>>, %arg10: memref<32x16xbf16, #tpu.memory_space<vmem>>, %arg11: memref<1x16xf32, #tpu.memory_space<vmem>>, %arg12: memref<1x16xf32, #tpu.memory_space<vmem>>, %arg13: memref<1x16xf32, #tpu.memory_space<vmem>>, %arg14: memref<1x1xf32, #tpu.memory_space<vmem>>, %arg15: memref<256x1xf32, #tpu.memory_space<vmem>>) attributes {dimension_semantics = [#tpu.dimension_semantics<parallel>], iteration_bounds = array<i64: 2>, scalar_prefetch = 0 : i64, scratch_operands = 0 : i64, tpu.core_type = #tpu.core_type<tc>, window_params = [{transform_indices = @transform_0, window_bounds = array<i64: 256, 2381>}, {pipeline_mode = #tpu.pipeline_mode<synchronous>, transform_indices = @transform_1, window_bounds = array<i64: 2381, 128>}, {pipeline_mode = #tpu.pipeline_mode<synchronous>, transform_indices = @transform_2, window_bounds = array<i64: 1, 128>}, {pipeline_mode = #tpu.pipeline_mode<synchronous>, transform_indices = @transform_3, window_bounds = array<i64: 128, 64>}, {pipeline_mode = #tpu.pipeline_mode<synchronous>, transform_indices = @transform_4, window_bounds = array<i64: 1, 64>}, {pipeline_mode = #tpu.pipeline_mode<synchronous>, transform_indices = @transform_5, window_bounds = array<i64: 1, 64>}, {pipeline_mode = #tpu.pipeline_mode<synchronous>, transform_indices = @transform_6, window_bounds = array<i64: 64, 32>}, {pipeline_mode = #tpu.pipeline_mode<synchronous>, transform_indices = @transform_7, window_bounds = array<i64: 1, 32>}, {pipeline_mode = #tpu.pipeline_mode<synchronous>, transform_indices = @transform_8, window_bounds = array<i64: 1, 32>}, {pipeline_mode = #tpu.pipeline_mode<synchronous>, transform_indices = @transform_9, window_bounds = array<i64: 32, 16>}, {pipeline_mode = #tpu.pipeline_mode<synchronous>, transform_indices = @transform_10, window_bounds = array<i64: 1, 16>}, {pipeline_mode = #tpu.pipeline_mode<synchronous>, transform_indices = @transform_11, window_bounds = array<i64: 1, 16>}, {pipeline_mode = #tpu.pipeline_mode<synchronous>, transform_indices = @transform_12, window_bounds = array<i64: 1, 16>}, {pipeline_mode = #tpu.pipeline_mode<synchronous>, transform_indices = @transform_13, window_bounds = array<i64: 1, 1>}, {transform_indices = @transform_14, window_bounds = array<i64: 256, 1>}]} {
    %c0 = arith.constant 0 : index
    %c0_0 = arith.constant 0 : index
    %0 = vector.load %arg1[%c0, %c0_0] : memref<256x2381xf32, #tpu.memory_space<vmem>>, vector<256x2381xf32>
    %1 = arith.truncf %0 : vector<256x2381xf32> to vector<256x2381xbf16>
    %c0_1 = arith.constant 0 : index
    %c0_2 = arith.constant 0 : index
    %2 = vector.load %arg2[%c0_1, %c0_2] : memref<2381x128xbf16, #tpu.memory_space<vmem>>, vector<2381x128xbf16>
    %cst = arith.constant dense<0.000000e+00> : vector<256x128xf32>
    %3 = tpu.matmul %1, %2, %cst {dimension_numbers = #tpu.dot_dimension_numbers<[1], [0], [0], [1], [0, 0, 1, 1], [], []>} : vector<256x2381xbf16>, vector<2381x128xbf16>, vector<256x128xf32> -> vector<256x128xf32>
    %c0_3 = arith.constant 0 : index
    %c0_4 = arith.constant 0 : index
    %4 = vector.load %arg3[%c0_3, %c0_4] : memref<1x128xf32, #tpu.memory_space<vmem>>, vector<1x128xf32>
    %5 = vector.broadcast %4 : vector<1x128xf32> to vector<256x128xf32>
    %6 = arith.addf %3, %5 : vector<256x128xf32>
    %cst_5 = arith.constant 0.000000e+00 : f32
    %7 = vector.broadcast %cst_5 : f32 to vector<256x128xf32>
    %8 = arith.maximumf %6, %7 : vector<256x128xf32>
    %9 = arith.truncf %8 : vector<256x128xf32> to vector<256x128xbf16>
    %c0_6 = arith.constant 0 : index
    %c0_7 = arith.constant 0 : index
    %10 = vector.load %arg4[%c0_6, %c0_7] : memref<128x64xbf16, #tpu.memory_space<vmem>>, vector<128x64xbf16>
    %cst_8 = arith.constant dense<0.000000e+00> : vector<256x64xf32>
    %11 = tpu.matmul %9, %10, %cst_8 {dimension_numbers = #tpu.dot_dimension_numbers<[1], [0], [0], [1], [0, 0, 1, 1], [], []>} : vector<256x128xbf16>, vector<128x64xbf16>, vector<256x64xf32> -> vector<256x64xf32>
    %c0_9 = arith.constant 0 : index
    %c0_10 = arith.constant 0 : index
    %12 = vector.load %arg5[%c0_9, %c0_10] : memref<1x64xf32, #tpu.memory_space<vmem>>, vector<1x64xf32>
    %13 = vector.broadcast %12 : vector<1x64xf32> to vector<256x64xf32>
    %14 = arith.mulf %11, %13 : vector<256x64xf32>
    %c0_11 = arith.constant 0 : index
    %c0_12 = arith.constant 0 : index
    %15 = vector.load %arg6[%c0_11, %c0_12] : memref<1x64xf32, #tpu.memory_space<vmem>>, vector<1x64xf32>
    %16 = vector.broadcast %15 : vector<1x64xf32> to vector<256x64xf32>
    %17 = arith.addf %14, %16 : vector<256x64xf32>
    %cst_13 = arith.constant 0.000000e+00 : f32
    %18 = vector.broadcast %cst_13 : f32 to vector<256x64xf32>
    %19 = arith.maximumf %17, %18 : vector<256x64xf32>
    %20 = arith.truncf %19 : vector<256x64xf32> to vector<256x64xbf16>
    %c0_14 = arith.constant 0 : index
    %c0_15 = arith.constant 0 : index
    %21 = vector.load %arg7[%c0_14, %c0_15] : memref<64x32xbf16, #tpu.memory_space<vmem>>, vector<64x32xbf16>
    %cst_16 = arith.constant dense<0.000000e+00> : vector<256x32xf32>
    %22 = tpu.matmul %20, %21, %cst_16 {dimension_numbers = #tpu.dot_dimension_numbers<[1], [0], [0], [1], [0, 0, 1, 1], [], []>} : vector<256x64xbf16>, vector<64x32xbf16>, vector<256x32xf32> -> vector<256x32xf32>
    %c0_17 = arith.constant 0 : index
    %c0_18 = arith.constant 0 : index
    %23 = vector.load %arg8[%c0_17, %c0_18] : memref<1x32xf32, #tpu.memory_space<vmem>>, vector<1x32xf32>
    %24 = vector.broadcast %23 : vector<1x32xf32> to vector<256x32xf32>
    %25 = arith.mulf %22, %24 : vector<256x32xf32>
    %c0_19 = arith.constant 0 : index
    %c0_20 = arith.constant 0 : index
    %26 = vector.load %arg9[%c0_19, %c0_20] : memref<1x32xf32, #tpu.memory_space<vmem>>, vector<1x32xf32>
    %27 = vector.broadcast %26 : vector<1x32xf32> to vector<256x32xf32>
    %28 = arith.addf %25, %27 : vector<256x32xf32>
    %cst_21 = arith.constant 0.000000e+00 : f32
    %29 = vector.broadcast %cst_21 : f32 to vector<256x32xf32>
    %30 = arith.maximumf %28, %29 : vector<256x32xf32>
    %31 = arith.truncf %30 : vector<256x32xf32> to vector<256x32xbf16>
    %c0_22 = arith.constant 0 : index
    %c0_23 = arith.constant 0 : index
    %32 = vector.load %arg10[%c0_22, %c0_23] : memref<32x16xbf16, #tpu.memory_space<vmem>>, vector<32x16xbf16>
    %cst_24 = arith.constant dense<0.000000e+00> : vector<256x16xf32>
    %33 = tpu.matmul %31, %32, %cst_24 {dimension_numbers = #tpu.dot_dimension_numbers<[1], [0], [0], [1], [0, 0, 1, 1], [], []>} : vector<256x32xbf16>, vector<32x16xbf16>, vector<256x16xf32> -> vector<256x16xf32>
    %c0_25 = arith.constant 0 : index
    %c0_26 = arith.constant 0 : index
    %34 = vector.load %arg11[%c0_25, %c0_26] : memref<1x16xf32, #tpu.memory_space<vmem>>, vector<1x16xf32>
    %35 = vector.broadcast %34 : vector<1x16xf32> to vector<256x16xf32>
    %36 = arith.mulf %33, %35 : vector<256x16xf32>
    %c0_27 = arith.constant 0 : index
    %c0_28 = arith.constant 0 : index
    %37 = vector.load %arg12[%c0_27, %c0_28] : memref<1x16xf32, #tpu.memory_space<vmem>>, vector<1x16xf32>
    %38 = vector.broadcast %37 : vector<1x16xf32> to vector<256x16xf32>
    %39 = arith.addf %36, %38 : vector<256x16xf32>
    %cst_29 = arith.constant 0.000000e+00 : f32
    %40 = vector.broadcast %cst_29 : f32 to vector<256x16xf32>
    %41 = arith.maximumf %39, %40 : vector<256x16xf32>
    %c0_30 = arith.constant 0 : index
    %c0_31 = arith.constant 0 : index
    %42 = vector.load %arg13[%c0_30, %c0_31] : memref<1x16xf32, #tpu.memory_space<vmem>>, vector<1x16xf32>
    %43 = vector.broadcast %42 : vector<1x16xf32> to vector<256x16xf32>
    %44 = arith.mulf %41, %43 : vector<256x16xf32>
    %cst_32 = arith.constant dense<0.000000e+00> : vector<256xf32>
    %45 = vector.multi_reduction <add>, %44, %cst_32 [1] : vector<256x16xf32> to vector<256xf32>
    %46 = vector.shape_cast %45 : vector<256xf32> to vector<256x1xf32>
    %c0_33 = arith.constant 0 : index
    %c0_34 = arith.constant 0 : index
    %47 = vector.load %arg14[%c0_33, %c0_34] : memref<1x1xf32, #tpu.memory_space<vmem>>, vector<1x1xf32>
    %48 = vector.broadcast %47 : vector<1x1xf32> to vector<256x1xf32>
    %49 = arith.addf %46, %48 : vector<256x1xf32>
    %cst_35 = arith.constant 0.000000e+00 : f32
    %50 = vector.broadcast %cst_35 : f32 to vector<256x1xf32>
    %51 = arith.subf %50, %49 : vector<256x1xf32>
    %52 = math.exp %51 : vector<256x1xf32>
    %cst_36 = arith.constant 1.000000e+00 : f32
    %53 = vector.broadcast %cst_36 : f32 to vector<256x1xf32>
    %54 = arith.addf %53, %52 : vector<256x1xf32>
    %cst_37 = arith.constant 1.000000e+00 : f32
    %55 = vector.broadcast %cst_37 : f32 to vector<256x1xf32>
    %56 = arith.divf %55, %54 : vector<256x1xf32>
    %c0_38 = arith.constant 0 : index
    %c0_39 = arith.constant 0 : index
    %57 = vector.load %arg15[%c0_38, %c0_39] : memref<256x1xf32, #tpu.memory_space<vmem>>, vector<256x1xf32>
    tpu.vector_store %arg15[%c0_38, %c0_39], %56 {strides = array<i32>} : memref<256x1xf32, #tpu.memory_space<vmem>>, vector<256x1xf32>,
    return
  }
  func.func @transform_0(%arg0: i32) -> (i32, i32) {
    %c0_i32 = arith.constant 0 : i32
    %c0_i32_0 = arith.constant 0 : i32
    return %arg0, %c0_i32 : i32, i32
  }
  func.func @transform_1(%arg0: i32) -> (i32, i32) {
    %c0_i32 = arith.constant 0 : i32
    %c0_i32_0 = arith.constant 0 : i32
    %c0_i32_1 = arith.constant 0 : i32
    return %c0_i32, %c0_i32_0 : i32, i32
  }
  func.func @transform_2(%arg0: i32) -> (i32, i32) {
    %c0_i32 = arith.constant 0 : i32
    %c0_i32_0 = arith.constant 0 : i32
    %c0_i32_1 = arith.constant 0 : i32
    return %c0_i32, %c0_i32_0 : i32, i32
  }
  func.func @transform_3(%arg0: i32) -> (i32, i32) {
    %c0_i32 = arith.constant 0 : i32
    %c0_i32_0 = arith.constant 0 : i32
    %c0_i32_1 = arith.constant 0 : i32
    return %c0_i32, %c0_i32_0 : i32, i32
  }
  func.func @transform_4(%arg0: i32) -> (i32, i32) {
    %c0_i32 = arith.constant 0 : i32
    %c0_i32_0 = arith.constant 0 : i32
    %c0_i32_1 = arith.constant 0 : i32
    return %c0_i32, %c0_i32_0 : i32, i32
  }
  func.func @transform_5(%arg0: i32) -> (i32, i32) {
    %c0_i32 = arith.constant 0 : i32
    %c0_i32_0 = arith.constant 0 : i32
    %c0_i32_1 = arith.constant 0 : i32
    return %c0_i32, %c0_i32_0 : i32, i32
  }
  func.func @transform_6(%arg0: i32) -> (i32, i32) {
    %c0_i32 = arith.constant 0 : i32
    %c0_i32_0 = arith.constant 0 : i32
    %c0_i32_1 = arith.constant 0 : i32
    return %c0_i32, %c0_i32_0 : i32, i32
  }
  func.func @transform_7(%arg0: i32) -> (i32, i32) {
    %c0_i32 = arith.constant 0 : i32
    %c0_i32_0 = arith.constant 0 : i32
    %c0_i32_1 = arith.constant 0 : i32
    return %c0_i32, %c0_i32_0 : i32, i32
  }
  func.func @transform_8(%arg0: i32) -> (i32, i32) {
    %c0_i32 = arith.constant 0 : i32
    %c0_i32_0 = arith.constant 0 : i32
    %c0_i32_1 = arith.constant 0 : i32
    return %c0_i32, %c0_i32_0 : i32, i32
  }
  func.func @transform_9(%arg0: i32) -> (i32, i32) {
    %c0_i32 = arith.constant 0 : i32
    %c0_i32_0 = arith.constant 0 : i32
    %c0_i32_1 = arith.constant 0 : i32
    return %c0_i32, %c0_i32_0 : i32, i32
  }
  func.func @transform_10(%arg0: i32) -> (i32, i32) {
    %c0_i32 = arith.constant 0 : i32
    %c0_i32_0 = arith.constant 0 : i32
    %c0_i32_1 = arith.constant 0 : i32
    return %c0_i32, %c0_i32_0 : i32, i32
  }
  func.func @transform_11(%arg0: i32) -> (i32, i32) {
    %c0_i32 = arith.constant 0 : i32
    %c0_i32_0 = arith.constant 0 : i32
    %c0_i32_1 = arith.constant 0 : i32
    return %c0_i32, %c0_i32_0 : i32, i32
  }
  func.func @transform_12(%arg0: i32) -> (i32, i32) {
    %c0_i32 = arith.constant 0 : i32
    %c0_i32_0 = arith.constant 0 : i32
    %c0_i32_1 = arith.constant 0 : i32
    return %c0_i32, %c0_i32_0 : i32, i32
  }
  func.func @transform_13(%arg0: i32) -> (i32, i32) {
    %c0_i32 = arith.constant 0 : i32
    %c0_i32_0 = arith.constant 0 : i32
    %c0_i32_1 = arith.constant 0 : i32
    return %c0_i32, %c0_i32_0 : i32, i32
  }
  func.func @transform_14(%arg0: i32) -> (i32, i32) {
    %c0_i32 = arith.constant 0 : i32
    %c0_i32_0 = arith.constant 0 : i32
    return %arg0, %c0_i32 : i32, i32
  }
}

</mosaic_0001>

<llo_original>
// kernel: tpu_custom_call.1
$region0: #{tpu_custom_call.1}
  #allocation0 [shape = 'u32[]', space=smem, size = 0x4, offset = 0x4, fixed_abs, tag = 'smem constant byte address 0x4 - core index']
  #allocation1 [shape = 'u32[72,128]{1,0:T(1,128)}', space=vmem, size = 0x9000, scoped, tag = 'internal scratch']
  #allocation2 [shape = 'f32[1,1]{1,0:T(1,128)S(1)}', space=vmem, size = 0x200, scoped, tag = 'scoped memory for tpu_custom_call.1']
  %s0 = inlined_call_operand.vmem [shape: f32[500,2381], index: 0, kind: input, shape index: {}]
  %s1 = inlined_call_operand.vmem [shape: bf16[2381,128], index: 1, kind: input, shape index: {}]
  %s2 = inlined_call_operand.vmem [shape: f32[1,128], index: 2, kind: input, shape index: {}]
  %s3 = inlined_call_operand.vmem [shape: bf16[128,64], index: 3, kind: input, shape index: {}]
  %s4 = inlined_call_operand.vmem [shape: f32[1,64], index: 4, kind: input, shape index: {}]
  %s5 = inlined_call_operand.vmem [shape: f32[1,64], index: 5, kind: input, shape index: {}]
  %s6 = inlined_call_operand.vmem [shape: bf16[64,32], index: 6, kind: input, shape index: {}]
  %s7 = inlined_call_operand.vmem [shape: f32[1,32], index: 7, kind: input, shape index: {}]
  %s8 = inlined_call_operand.vmem [shape: f32[1,32], index: 8, kind: input, shape index: {}]
  %s9 = inlined_call_operand.vmem [shape: bf16[32,16], index: 9, kind: input, shape index: {}]
  %s10 = inlined_call_operand.vmem [shape: f32[1,16], index: 10, kind: input, shape index: {}]
  %s11 = inlined_call_operand.vmem [shape: f32[1,16], index: 11, kind: input, shape index: {}]
  %s12 = inlined_call_operand.vmem [shape: f32[1,16], index: 12, kind: input, shape index: {}]
  %s13 = inlined_call_operand.<no memory space> [shape: f32[1,1], index: 13, kind: input, shape index: {}]
  %s14 = inlined_call_operand.vmem [shape: f32[500,1], index: 14, kind: output, shape index: {}]
  %s15 = sld [smem:[#allocation0]]
  $region137: #{tpu_custom_call.1} parent=0
    _
  %s17 = ssub.s32 1, %s15
  %s18 = scalar_select 0, %s17, %s15
  %v19 = vstv %s13
  %20 = vst [vmem:[#allocation2] sm:$0x1] %v19
  $region1: #{tpu_custom_call.1} parent=0
    #allocation3 [shape = 'u8[262144]{0}', space=vmem, size = 0x40000, scoped, tag = 'output window, operand 0']
    loop: start=0, step=1, limit=4
    $region2: #{tpu_custom_call.1} parent=1 // loop_pre_header
      _
    $region3: #{tpu_custom_call.1} parent=1 // loop_header
      %s22 = sphi 0, %s26
      %p23 = scmp.ge.s32.totalorder %s22, 4
      %s32 = sphi 0, %s34
      %s35 = sphi 0, %s32
      %s36 = sphi 0, %s35
      %s52 = sphi 0, %s36
      %s56 = sphi 0, %s56
      %s58 = sphi 0, %s56
      %s59 = sphi 0, %s58
      %s73 = sphi 0, %s59
      %s77 = sphi 0, %s77
      %s79 = sphi 0, %s77
      %s80 = sphi 0, %s79
      %s94 = sphi 0, %s80
      %s98 = sphi 0, %s98
      %s100 = sphi 0, %s98
      %s101 = sphi 0, %s100
      %s115 = sphi 0, %s101
      %s119 = sphi 0, %s119
      %s121 = sphi 0, %s119
      %s122 = sphi 0, %s121
      %s136 = sphi 0, %s122
      %s140 = sphi 0, %s140
      %s142 = sphi 0, %s140
      %s143 = sphi 0, %s142
      %s157 = sphi 0, %s143
      %s161 = sphi 0, %s161
      %s163 = sphi 0, %s161
      %s164 = sphi 0, %s163
      %s178 = sphi 0, %s164
      %s182 = sphi 0, %s182
      %s184 = sphi 0, %s182
      %s185 = sphi 0, %s184
      %s199 = sphi 0, %s185
      %s203 = sphi 0, %s203
      %s205 = sphi 0, %s203
      %s206 = sphi 0, %s205
      %s220 = sphi 0, %s206
      %s224 = sphi 0, %s224
      %s226 = sphi 0, %s224
      %s227 = sphi 0, %s226
      %s241 = sphi 0, %s227
      %s245 = sphi 0, %s245
      %s247 = sphi 0, %s245
      %s248 = sphi 0, %s247
      %s262 = sphi 0, %s248
      %s266 = sphi 0, %s266
      %s268 = sphi 0, %s266
      %s269 = sphi 0, %s268
      %s283 = sphi 0, %s269
      %s287 = sphi 0, %s287
      %s289 = sphi 0, %s287
      %s290 = sphi 0, %s289
      %s304 = sphi 0, %s290
      %s308 = sphi 0, %s308
      %s310 = sphi 0, %s308
      %s311 = sphi 0, %s310
      %s325 = sphi 0, %s311
      %s331 = sphi 0, %s333
      %s334 = sphi 0, %s331
      %s335 = sphi 0, %s334
      %s351 = sphi 0, %s335
    $region4: #{tpu_custom_call.1} parent=1 // loop_header_branch
      %25 = sbr.rel (%p23) target = $region8
    $region5: #{tpu_custom_call.1} parent=1 // loop_body
      %s27 = ssub.s32 %s22, 1
      %s28 = ssub.s32 %s22, 2
      %s29 = sadd.s32 %s22, 1
      %s30 = ssub.s32 %s22, %s29
      %p31 = scmp.eq.s32.totalorder %s30, 0
      %s33 = sadd.s32 %s32, 1
      %s34 = scalar_select %p31, %s32, %s33
      %p37 = pneg %p31
      %p38 = scmp.eq.s32.totalorder %s22, 1
      %p39 = por %p37, %p38
      %p40 = scmp.ne.s32.totalorder %s32, %s35
      %p41 = scmp.eq.s32.totalorder %s22, 0
      %p42 = por %p40, %p41
      %p43 = scmp.ne.s32.totalorder %s32, %s35
      %p44 = scmp.eq.s32.totalorder %s27, 1
      %p45 = por %p43, %p44
      %p46 = scmp.ne.s32.totalorder %s35, %s36
      %p47 = scmp.eq.s32.totalorder %s27, 0
      %p48 = por %p46, %p47
      %p49 = scmp.ne.s32.totalorder %s35, %s36
      %p50 = scmp.eq.s32.totalorder %s28, 1
      %p51 = por %p49, %p50
      %p53 = scmp.ne.s32.totalorder %s36, %s52
      %p54 = scmp.eq.s32.totalorder %s28, 0
      %p55 = por %p53, %p54
      %s57 = sadd.s32 %s56, 1
      %p60 = scmp.eq.s32.totalorder %s22, 1
      %p61 = scmp.ne.s32.totalorder %s56, %s58
      %p62 = scmp.eq.s32.totalorder %s22, 0
      %p63 = por %p61, %p62
      %p64 = scmp.ne.s32.totalorder %s56, %s58
      %p65 = scmp.eq.s32.totalorder %s27, 1
      %p66 = por %p64, %p65
      %p67 = scmp.ne.s32.totalorder %s58, %s59
      %p68 = scmp.eq.s32.totalorder %s27, 0
      %p69 = por %p67, %p68
      %p70 = scmp.ne.s32.totalorder %s58, %s59
      %p71 = scmp.eq.s32.totalorder %s28, 1
      %p72 = por %p70, %p71
      %p74 = scmp.ne.s32.totalorder %s59, %s73
      %p75 = scmp.eq.s32.totalorder %s28, 0
      %p76 = por %p74, %p75
      %s78 = sadd.s32 %s77, 1
      %p81 = scmp.eq.s32.totalorder %s22, 1
      %p82 = scmp.ne.s32.totalorder %s77, %s79
      %p83 = scmp.eq.s32.totalorder %s22, 0
      %p84 = por %p82, %p83
      %p85 = scmp.ne.s32.totalorder %s77, %s79
      %p86 = scmp.eq.s32.totalorder %s27, 1
      %p87 = por %p85, %p86
      %p88 = scmp.ne.s32.totalorder %s79, %s80
      %p89 = scmp.eq.s32.totalorder %s27, 0
      %p90 = por %p88, %p89
      %p91 = scmp.ne.s32.totalorder %s79, %s80
      %p92 = scmp.eq.s32.totalorder %s28, 1
      %p93 = por %p91, %p92
      %p95 = scmp.ne.s32.totalorder %s80, %s94
      %p96 = scmp.eq.s32.totalorder %s28, 0
      %p97 = por %p95, %p96
      %s99 = sadd.s32 %s98, 1
      %p102 = scmp.eq.s32.totalorder %s22, 1
      %p103 = scmp.ne.s32.totalorder %s98, %s100
      %p104 = scmp.eq.s32.totalorder %s22, 0
      %p105 = por %p103, %p104
      %p106 = scmp.ne.s32.totalorder %s98, %s100
      %p107 = scmp.eq.s32.totalorder %s27, 1
      %p108 = por %p106, %p107
      %p109 = scmp.ne.s32.totalorder %s100, %s101
      %p110 = scmp.eq.s32.totalorder %s27, 0
      %p111 = por %p109, %p110
      %p112 = scmp.ne.s32.totalorder %s100, %s101
      %p113 = scmp.eq.s32.totalorder %s28, 1
      %p114 = por %p112, %p113
      %p116 = scmp.ne.s32.totalorder %s101, %s115
      %p117 = scmp.eq.s32.totalorder %s28, 0
      %p118 = por %p116, %p117
      %s120 = sadd.s32 %s119, 1
      %p123 = scmp.eq.s32.totalorder %s22, 1
      %p124 = scmp.ne.s32.totalorder %s119, %s121
      %p125 = scmp.eq.s32.totalorder %s22, 0
      %p126 = por %p124, %p125
      %p127 = scmp.ne.s32.totalorder %s119, %s121
      %p128 = scmp.eq.s32.totalorder %s27, 1
      %p129 = por %p127, %p128
      %p130 = scmp.ne.s32.totalorder %s121, %s122
      %p131 = scmp.eq.s32.totalorder %s27, 0
      %p132 = por %p130, %p131
      %p133 = scmp.ne.s32.totalorder %s121, %s122
      %p134 = scmp.eq.s32.totalorder %s28, 1
      %p135 = por %p133, %p134
      %p137 = scmp.ne.s32.totalorder %s122, %s136
      %p138 = scmp.eq.s32.totalorder %s28, 0
      %p139 = por %p137, %p138
      %s141 = sadd.s32 %s140, 1
      %p144 = scmp.eq.s32.totalorder %s22, 1
      %p145 = scmp.ne.s32.totalorder %s140, %s142
      %p146 = scmp.eq.s32.totalorder %s22, 0
      %p147 = por %p145, %p146
      %p148 = scmp.ne.s32.totalorder %s140, %s142
      %p149 = scmp.eq.s32.totalorder %s27, 1
      %p150 = por %p148, %p149
      %p151 = scmp.ne.s32.totalorder %s142, %s143
      %p152 = scmp.eq.s32.totalorder %s27, 0
      %p153 = por %p151, %p152
      %p154 = scmp.ne.s32.totalorder %s142, %s143
      %p155 = scmp.eq.s32.totalorder %s28, 1
      %p156 = por %p154, %p155
      %p158 = scmp.ne.s32.totalorder %s143, %s157
      %p159 = scmp.eq.s32.totalorder %s28, 0
      %p160 = por %p158, %p159
      %s162 = sadd.s32 %s161, 1
      %p165 = scmp.eq.s32.totalorder %s22, 1
      %p166 = scmp.ne.s32.totalorder %s161, %s163
      %p167 = scmp.eq.s32.totalorder %s22, 0
      %p168 = por %p166, %p167
      %p169 = scmp.ne.s32.totalorder %s161, %s163
      %p170 = scmp.eq.s32.totalorder %s27, 1
      %p171 = por %p169, %p170
      %p172 = scmp.ne.s32.totalorder %s163, %s164
      %p173 = scmp.eq.s32.totalorder %s27, 0
      %p174 = por %p172, %p173
      %p175 = scmp.ne.s32.totalorder %s163, %s164
      %p176 = scmp.eq.s32.totalorder %s28, 1
      %p177 = por %p175, %p176
      %p179 = scmp.ne.s32.totalorder %s164, %s178
      %p180 = scmp.eq.s32.totalorder %s28, 0
      %p181 = por %p179, %p180
      %s183 = sadd.s32 %s182, 1
      %p186 = scmp.eq.s32.totalorder %s22, 1
      %p187 = scmp.ne.s32.totalorder %s182, %s184
      %p188 = scmp.eq.s32.totalorder %s22, 0
      %p189 = por %p187, %p188
      %p190 = scmp.ne.s32.totalorder %s182, %s184
      %p191 = scmp.eq.s32.totalorder %s27, 1
      %p192 = por %p190, %p191
      %p193 = scmp.ne.s32.totalorder %s184, %s185
      %p194 = scmp.eq.s32.totalorder %s27, 0
      %p195 = por %p193, %p194
      %p196 = scmp.ne.s32.totalorder %s184, %s185
      %p197 = scmp.eq.s32.totalorder %s28, 1
      %p198 = por %p196, %p197
      %p200 = scmp.ne.s32.totalorder %s185, %s199
      %p201 = scmp.eq.s32.totalorder %s28, 0
      %p202 = por %p200, %p201
      %s204 = sadd.s32 %s203, 1
      %p207 = scmp.eq.s32.totalorder %s22, 1
      %p208 = scmp.ne.s32.totalorder %s203, %s205
      %p209 = scmp.eq.s32.totalorder %s22, 0
      %p210 = por %p208, %p209
      %p211 = scmp.ne.s32.totalorder %s203, %s205
      %p212 = scmp.eq.s32.totalorder %s27, 1
      %p213 = por %p211, %p212
      %p214 = scmp.ne.s32.totalorder %s205, %s206
      %p215 = scmp.eq.s32.totalorder %s27, 0
      %p216 = por %p214, %p215
      %p217 = scmp.ne.s32.totalorder %s205, %s206
      %p218 = scmp.eq.s32.totalorder %s28, 1
      %p219 = por %p217, %p218
      %p221 = scmp.ne.s32.totalorder %s206, %s220
      %p222 = scmp.eq.s32.totalorder %s28, 0
      %p223 = por %p221, %p222
      %s225 = sadd.s32 %s224, 1
      %p228 = scmp.eq.s32.totalorder %s22, 1
      %p229 = scmp.ne.s32.totalorder %s224, %s226
      %p230 = scmp.eq.s32.totalorder %s22, 0
      %p231 = por %p229, %p230
      %p232 = scmp.ne.s32.totalorder %s224, %s226
      %p233 = scmp.eq.s32.totalorder %s27, 1
      %p234 = por %p232, %p233
      %p235 = scmp.ne.s32.totalorder %s226, %s227
      %p236 = scmp.eq.s32.totalorder %s27, 0
      %p237 = por %p235, %p236
      %p238 = scmp.ne.s32.totalorder %s226, %s227
      %p239 = scmp.eq.s32.totalorder %s28, 1
      %p240 = por %p238, %p239
      %p242 = scmp.ne.s32.totalorder %s227, %s241
      %p243 = scmp.eq.s32.totalorder %s28, 0
      %p244 = por %p242, %p243
      %s246 = sadd.s32 %s245, 1
      %p249 = scmp.eq.s32.totalorder %s22, 1
      %p250 = scmp.ne.s32.totalorder %s245, %s247
      %p251 = scmp.eq.s32.totalorder %s22, 0
      %p252 = por %p250, %p251
      %p253 = scmp.ne.s32.totalorder %s245, %s247
      %p254 = scmp.eq.s32.totalorder %s27, 1
      %p255 = por %p253, %p254
      %p256 = scmp.ne.s32.totalorder %s247, %s248
      %p257 = scmp.eq.s32.totalorder %s27, 0
      %p258 = por %p256, %p257
      %p259 = scmp.ne.s32.totalorder %s247, %s248
      %p260 = scmp.eq.s32.totalorder %s28, 1
      %p261 = por %p259, %p260
      %p263 = scmp.ne.s32.totalorder %s248, %s262
      %p264 = scmp.eq.s32.totalorder %s28, 0
      %p265 = por %p263, %p264
      %s267 = sadd.s32 %s266, 1
      %p270 = scmp.eq.s32.totalorder %s22, 1
      %p271 = scmp.ne.s32.totalorder %s266, %s268
      %p272 = scmp.eq.s32.totalorder %s22, 0
      %p273 = por %p271, %p272
      %p274 = scmp.ne.s32.totalorder %s266, %s268
      %p275 = scmp.eq.s32.totalorder %s27, 1
      %p276 = por %p274, %p275
      %p277 = scmp.ne.s32.totalorder %s268, %s269
      %p278 = scmp.eq.s32.totalorder %s27, 0
      %p279 = por %p277, %p278
      %p280 = scmp.ne.s32.totalorder %s268, %s269
      %p281 = scmp.eq.s32.totalorder %s28, 1
      %p282 = por %p280, %p281
      %p284 = scmp.ne.s32.totalorder %s269, %s283
      %p285 = scmp.eq.s32.totalorder %s28, 0
      %p286 = por %p284, %p285
      %s288 = sadd.s32 %s287, 1
      %p291 = scmp.eq.s32.totalorder %s22, 1
      %p292 = scmp.ne.s32.totalorder %s287, %s289
      %p293 = scmp.eq.s32.totalorder %s22, 0
      %p294 = por %p292, %p293
      %p295 = scmp.ne.s32.totalorder %s287, %s289
      %p296 = scmp.eq.s32.totalorder %s27, 1
      %p297 = por %p295, %p296
      %p298 = scmp.ne.s32.totalorder %s289, %s290
      %p299 = scmp.eq.s32.totalorder %s27, 0
      %p300 = por %p298, %p299
      %p301 = scmp.ne.s32.totalorder %s289, %s290
      %p302 = scmp.eq.s32.totalorder %s28, 1
      %p303 = por %p301, %p302
      %p305 = scmp.ne.s32.totalorder %s290, %s304
      %p306 = scmp.eq.s32.totalorder %s28, 0
      %p307 = por %p305, %p306
      %s309 = sadd.s32 %s308, 1
      %p312 = scmp.eq.s32.totalorder %s22, 1
      %p313 = scmp.ne.s32.totalorder %s308, %s310
      %p314 = scmp.eq.s32.totalorder %s22, 0
      %p315 = por %p313, %p314
      %p316 = scmp.ne.s32.totalorder %s308, %s310
      %p317 = scmp.eq.s32.totalorder %s27, 1
      %p318 = por %p316, %p317
      %p319 = scmp.ne.s32.totalorder %s310, %s311
      %p320 = scmp.eq.s32.totalorder %s27, 0
      %p321 = por %p319, %p320
      %p322 = scmp.ne.s32.totalorder %s310, %s311
      %p323 = scmp.eq.s32.totalorder %s28, 1
      %p324 = por %p322, %p323
      %p326 = scmp.ne.s32.totalorder %s311, %s325
      %p327 = scmp.eq.s32.totalorder %s28, 0
      %p328 = por %p326, %p327
      %s329 = ssub.s32 %s22, %s29
      %p330 = scmp.eq.s32.totalorder %s329, 0
      %s332 = sadd.s32 %s331, 1
      %s333 = scalar_select %p330, %s331, %s332
      %p336 = pneg %p330
      %p337 = scmp.eq.s32.totalorder %s22, 1
      %p338 = por %p336, %p337
      %p339 = scmp.ne.s32.totalorder %s331, %s334
      %p340 = scmp.eq.s32.totalorder %s22, 0
      %p341 = por %p339, %p340
      %p342 = scmp.ne.s32.totalorder %s331, %s334
      %p343 = scmp.eq.s32.totalorder %s27, 1
      %p344 = por %p342, %p343
      %p345 = scmp.ne.s32.totalorder %s334, %s335
      %p346 = scmp.eq.s32.totalorder %s27, 0
      %p347 = por %p345, %p346
      %p348 = scmp.ne.s32.totalorder %s334, %s335
      %p349 = scmp.eq.s32.totalorder %s28, 1
      %p350 = por %p348, %p349
      %p352 = scmp.ne.s32.totalorder %s335, %s351
      %p353 = scmp.eq.s32.totalorder %s28, 0
      %p354 = por %p352, %p353
      %p355 = scmp.le.s32.totalorder 1, %s22
      %p356 = scmp.lt.s32.totalorder %s22, 3
      %p357 = pnand %p355, %p356
      %p358 = pneg %p357
      // Predicated region
      $region9: #{tpu_custom_call.1} parent=5 // pred_check
        _
      $region10: #{tpu_custom_call.1} parent=5 // pred_check_branch
        %360 = sbr.rel (%p357) target = $region12
      $region11: #{tpu_custom_call.1} parent=5 // pred_region
        %s361 = ssub.s32 %s22, 1
        // Predicated region
        $region13: #{tpu_custom_call.1} parent=11 // pred_check
          %p362 = pneg %p69
        $region14: #{tpu_custom_call.1} parent=11 // pred_check_branch
          %364 = sbr.rel (%p362) target = $region16
        $region15: #{tpu_custom_call.1} parent=11 // pred_region
          _
        $region16: #{tpu_custom_call.1} parent=11 // pred_fallthru
          _
        // Predicated region
        $region17: #{tpu_custom_call.1} parent=11 // pred_check
          %p365 = pneg %p90
        $region18: #{tpu_custom_call.1} parent=11 // pred_check_branch
          %367 = sbr.rel (%p365) target = $region20
        $region19: #{tpu_custom_call.1} parent=11 // pred_region
          _
        $region20: #{tpu_custom_call.1} parent=11 // pred_fallthru
          _
        // Predicated region
        $region21: #{tpu_custom_call.1} parent=11 // pred_check
          %p368 = pneg %p111
        $region22: #{tpu_custom_call.1} parent=11 // pred_check_branch
          %370 = sbr.rel (%p368) target = $region24
        $region23: #{tpu_custom_call.1} parent=11 // pred_region
          _
        $region24: #{tpu_custom_call.1} parent=11 // pred_fallthru
          _
        // Predicated region
        $region25: #{tpu_custom_call.1} parent=11 // pred_check
          %p371 = pneg %p132
        $region26: #{tpu_custom_call.1} parent=11 // pred_check_branch
          %373 = sbr.rel (%p371) target = $region28
        $region27: #{tpu_custom_call.1} parent=11 // pred_region
          _
        $region28: #{tpu_custom_call.1} parent=11 // pred_fallthru
          _
        // Predicated region
        $region29: #{tpu_custom_call.1} parent=11 // pred_check
          %p374 = pneg %p153
        $region30: #{tpu_custom_call.1} parent=11 // pred_check_branch
          %376 = sbr.rel (%p374) target = $region32
        $region31: #{tpu_custom_call.1} parent=11 // pred_region
          _
        $region32: #{tpu_custom_call.1} parent=11 // pred_fallthru
          _
        // Predicated region
        $region33: #{tpu_custom_call.1} parent=11 // pred_check
          %p377 = pneg %p174
        $region34: #{tpu_custom_call.1} parent=11 // pred_check_branch
          %379 = sbr.rel (%p377) target = $region36
        $region35: #{tpu_custom_call.1} parent=11 // pred_region
          _
        $region36: #{tpu_custom_call.1} parent=11 // pred_fallthru
          _
        // Predicated region
        $region37: #{tpu_custom_call.1} parent=11 // pred_check
          %p380 = pneg %p195
        $region38: #{tpu_custom_call.1} parent=11 // pred_check_branch
          %382 = sbr.rel (%p380) target = $region40
        $region39: #{tpu_custom_call.1} parent=11 // pred_region
          _
        $region40: #{tpu_custom_call.1} parent=11 // pred_fallthru
          _
        // Predicated region
        $region41: #{tpu_custom_call.1} parent=11 // pred_check
          %p383 = pneg %p216
        $region42: #{tpu_custom_call.1} parent=11 // pred_check_branch
          %385 = sbr.rel (%p383) target = $region44
        $region43: #{tpu_custom_call.1} parent=11 // pred_region
          _
        $region44: #{tpu_custom_call.1} parent=11 // pred_fallthru
          _
        // Predicated region
        $region45: #{tpu_custom_call.1} parent=11 // pred_check
          %p386 = pneg %p237
        $region46: #{tpu_custom_call.1} parent=11 // pred_check_branch
          %388 = sbr.rel (%p386) target = $region48
        $region47: #{tpu_custom_call.1} parent=11 // pred_region
          _
        $region48: #{tpu_custom_call.1} parent=11 // pred_fallthru
          _
        // Predicated region
        $region49: #{tpu_custom_call.1} parent=11 // pred_check
          %p389 = pneg %p258
        $region50: #{tpu_custom_call.1} parent=11 // pred_check_branch
          %391 = sbr.rel (%p389) target = $region52
        $region51: #{tpu_custom_call.1} parent=11 // pred_region
          _
        $region52: #{tpu_custom_call.1} parent=11 // pred_fallthru
          _
        // Predicated region
        $region53: #{tpu_custom_call.1} parent=11 // pred_check
          %p392 = pneg %p279
        $region54: #{tpu_custom_call.1} parent=11 // pred_check_branch
          %394 = sbr.rel (%p392) target = $region56
        $region55: #{tpu_custom_call.1} parent=11 // pred_region
          _
        $region56: #{tpu_custom_call.1} parent=11 // pred_fallthru
          _
        // Predicated region
        $region57: #{tpu_custom_call.1} parent=11 // pred_check
          %p395 = pneg %p300
        $region58: #{tpu_custom_call.1} parent=11 // pred_check_branch
          %397 = sbr.rel (%p395) target = $region60
        $region59: #{tpu_custom_call.1} parent=11 // pred_region
          _
        $region60: #{tpu_custom_call.1} parent=11 // pred_fallthru
          _
        // Predicated region
        $region61: #{tpu_custom_call.1} parent=11 // pred_check
          %p398 = pneg %p321
        $region62: #{tpu_custom_call.1} parent=11 // pred_check_branch
          %400 = sbr.rel (%p398) target = $region64
        $region63: #{tpu_custom_call.1} parent=11 // pred_region
          _
        $region64: #{tpu_custom_call.1} parent=11 // pred_fallthru
          _
      $region12: #{tpu_custom_call.1} parent=5 // pred_fallthru
        _
      %p401 = scmp.lt.s32.totalorder %s22, 2
      // Predicated region
      $region65: #{tpu_custom_call.1} parent=5 // pred_check
        %p402 = pneg %p401
      $region66: #{tpu_custom_call.1} parent=5 // pred_check_branch
        %404 = sbr.rel (%p402) target = $region68
      $region67: #{tpu_custom_call.1} parent=5 // pred_region
        // Predicated region
        $region69: #{tpu_custom_call.1} parent=67 // pred_check
          %p405 = pneg %p42
        $region70: #{tpu_custom_call.1} parent=67 // pred_check_branch
          %407 = sbr.rel (%p405) target = $region72
        $region71: #{tpu_custom_call.1} parent=67 // pred_region
          %s408 = smul.u32 32, %s22
          %s409 = ssub.s32 63, %s408
          %p410 = scmp.lt.s32.totalorder %s409, 32
          %s411 = scalar_select %p410, %s409, 32
          %s412 = smul.u32 8, %s411
          %s413 = smul.u32 %s412, 19
          %p414 = scmp.lt.s32.totalorder %s408, 62
          %s415 = scalar_select %p414, %s408, 62
          %s416 = smul.addr %s415, 19
          %s417 = smul.addr %s416, 8
          %s418 = scalar_lea.vmem %s0, %s417
          %s419 = smul.u32 32, %s22
          %s420 = ssub.s32 63, %s419
          %p421 = scmp.lt.s32.totalorder %s420, 32
          %s422 = scalar_select %p421, %s420, 32
          %s423 = smul.u32 8, %s422
          %s424 = smul.u32 %s423, 19
        $region72: #{tpu_custom_call.1} parent=67 // pred_fallthru
          _
      $region68: #{tpu_custom_call.1} parent=5 // pred_fallthru
        _
      %p425 = scmp.le.s32.totalorder 1, %s22
      %p426 = scmp.lt.s32.totalorder %s22, 3
      %p427 = pnand %p425, %p426
      %p428 = pneg %p427
      // Predicated region
      $region73: #{tpu_custom_call.1} parent=5 // pred_check
        _
      $region74: #{tpu_custom_call.1} parent=5 // pred_check_branch
        %430 = sbr.rel (%p427) target = $region76
      $region75: #{tpu_custom_call.1} parent=5 // pred_region
        %s431 = ssub.s32 %s22, 1
        %s432 = smul.u32 32, %s27
        %s433 = ssub.s32 63, %s432
        %p434 = scmp.lt.s32.totalorder %s433, 32
        %s435 = scalar_select %p434, %s433, 32
        %s436 = smul.u32 8, %s435
        %s437 = smul.u32 %s436, 19
        %p438 = scmp.lt.s32.totalorder %s432, 62
        %s439 = scalar_select %p438, %s432, 62
        %s440 = smul.addr %s439, 19
        %s441 = smul.addr %s440, 8
        %s442 = scalar_lea.vmem %s0, %s441
        %p443 = pneg %p48
        %p444 = pneg %p45
        %p445 = pneg %p69
        %p446 = pneg %p66
        %p447 = pneg %p90
        %p448 = pneg %p87
        %p449 = pneg %p111
        %p450 = pneg %p108
        %p451 = pneg %p132
        %p452 = pneg %p129
        %p453 = pneg %p153
        %p454 = pneg %p150
        %p455 = pneg %p174
        %p456 = pneg %p171
        %p457 = pneg %p195
        %p458 = pneg %p192
        %p459 = pneg %p216
        %p460 = pneg %p213
        %p461 = pneg %p237
        %p462 = pneg %p234
        %p463 = pneg %p258
        %p464 = pneg %p255
        %p465 = pneg %p279
        %p466 = pneg %p276
        %p467 = pneg %p300
        %p468 = pneg %p297
        %p469 = pneg %p321
        %p470 = pneg %p318
        %p471 = pneg %p347
        %p472 = pneg %p344
        %s473 = sand.u32 %s334, 1
        %s474 = sand.u32 %s334, 1
        %s475 = smul.addr %s474, 256
        %s476 = scalar_lea.vmem [#allocation3], %s475
        %s477 = smul.u32 32, %s27
        %s478 = ssub.s32 63, %s477
        %p479 = scmp.lt.s32.totalorder %s478, 32
        %s480 = scalar_select %p479, %s478, 32
        %s481 = smul.u32 8, %s480
        %s482 = smul.u32 %s481, 19
        %p483 = scmp.lt.s32.totalorder %s477, 62
        %s484 = scalar_select %p483, %s477, 62
        %s485 = smul.addr %s484, 19
        %s486 = smul.addr %s485, 8
        %s487 = scalar_lea.vmem %s0, %s486
        %s488 = smul.u32 32, %s27
        %s489 = ssub.s32 63, %s488
        %p490 = scmp.lt.s32.totalorder %s489, 32
        %s491 = scalar_select %p490, %s489, 32
        %s492 = smul.u32 8, %s491
        %s493 = smul.u32 %s492, 19
        %s494 = smul.u32 32, %s27
        %s495 = ssub.s32 63, %s494
        %p496 = scmp.lt.s32.totalorder %s495, 32
        %s497 = scalar_select %p496, %s495, 32
        %s498 = smul.u32 8, %s497
        %v500 = vld [vmem:[%s487] sm:$0xff]
        %v501 = vld [vmem:[%s487 + $0x8] sm:$0xff]
        %v502 = vld [vmem:[%s487 + $0x10] sm:$0xff]
        %v503 = vld [vmem:[%s487 + $0x18] sm:$0xff]
        %v504 = vld [vmem:[%s487 + $0x20] sm:$0xff]
        %v505 = vld [vmem:[%s487 + $0x28] sm:$0xff]
        %v506 = vld [vmem:[%s487 + $0x30] sm:$0xff]
        %v507 = vld [vmem:[%s487 + $0x38] sm:$0xff]
        %v508 = vld [vmem:[%s487 + $0x40] sm:$0xff]
        %v509 = vld [vmem:[%s487 + $0x48] sm:$0xff]
        %v510 = vld [vmem:[%s487 + $0x50] sm:$0xff]
        %v511 = vld [vmem:[%s487 + $0x58] sm:$0xff]
        %v512 = vld [vmem:[%s487 + $0x60] sm:$0xff]
        %v513 = vld [vmem:[%s487 + $0x68] sm:$0xff]
        %v514 = vld [vmem:[%s487 + $0x70] sm:$0xff]
        %v515 = vld [vmem:[%s487 + $0x78] sm:$0xff]
        %v516 = vld [vmem:[%s487 + $0x80] sm:$0xff]
        %v517 = vld [vmem:[%s487 + $0x88] sm:$0xff]
        %v518 = vld [vmem:[%s487 + $0x90] sm:$0xff]
        %v519 = vld [vmem:[%s487 + $0x98] sm:$0xff]
        %v520 = vld [vmem:[%s487 + $0xa0] sm:$0xff]
        %v521 = vld [vmem:[%s487 + $0xa8] sm:$0xff]
        %v522 = vld [vmem:[%s487 + $0xb0] sm:$0xff]
        %v523 = vld [vmem:[%s487 + $0xb8] sm:$0xff]
        %v524 = vld [vmem:[%s487 + $0xc0] sm:$0xff]
        %v525 = vld [vmem:[%s487 + $0xc8] sm:$0xff]
        %v526 = vld [vmem:[%s487 + $0xd0] sm:$0xff]
        %v527 = vld [vmem:[%s487 + $0xd8] sm:$0xff]
        %v528 = vld [vmem:[%s487 + $0xe0] sm:$0xff]
        %v529 = vld [vmem:[%s487 + $0xe8] sm:$0xff]
        %v530 = vld [vmem:[%s487 + $0xf0] sm:$0xff]
        %v531 = vld [vmem:[%s487 + $0xf8] sm:$0xff]
        %v532 = vld [vmem:[%s487 + $0x100] sm:$0xff]
        %v533 = vld [vmem:[%s487 + $0x108] sm:$0xff]
        %v534 = vld [vmem:[%s487 + $0x110] sm:$0xff]
        %v535 = vld [vmem:[%s487 + $0x118] sm:$0xff]
        %v536 = vld [vmem:[%s487 + $0x120] sm:$0xff]
        %v537 = vld [vmem:[%s487 + $0x128] sm:$0xff]
        %v538 = vld [vmem:[%s487 + $0x130] sm:$0xff]
        %v539 = vld [vmem:[%s487 + $0x138] sm:$0xff]
        %v540 = vld [vmem:[%s487 + $0x140] sm:$0xff]
        %v541 = vld [vmem:[%s487 + $0x148] sm:$0xff]
        %v542 = vld [vmem:[%s487 + $0x150] sm:$0xff]
        %v543 = vld [vmem:[%s487 + $0x158] sm:$0xff]
        %v544 = vld [vmem:[%s487 + $0x160] sm:$0xff]
        %v545 = vld [vmem:[%s487 + $0x168] sm:$0xff]
        %v546 = vld [vmem:[%s487 + $0x170] sm:$0xff]
        %v547 = vld [vmem:[%s487 + $0x178] sm:$0xff]
        %v548 = vld [vmem:[%s487 + $0x180] sm:$0xff]
        %v549 = vld [vmem:[%s487 + $0x188] sm:$0xff]
        %v550 = vld [vmem:[%s487 + $0x190] sm:$0xff]
        %v551 = vld [vmem:[%s487 + $0x198] sm:$0xff]
        %v552 = vld [vmem:[%s487 + $0x1a0] sm:$0xff]
        %v553 = vld [vmem:[%s487 + $0x1a8] sm:$0xff]
        %v554 = vld [vmem:[%s487 + $0x1b0] sm:$0xff]
        %v555 = vld [vmem:[%s487 + $0x1b8] sm:$0xff]
        %v556 = vld [vmem:[%s487 + $0x1c0] sm:$0xff]
        %v557 = vld [vmem:[%s487 + $0x1c8] sm:$0xff]
        %v558 = vld [vmem:[%s487 + $0x1d0] sm:$0xff]
        %v559 = vld [vmem:[%s487 + $0x1d8] sm:$0xff]
        %v560 = vld [vmem:[%s487 + $0x1e0] sm:$0xff]
        %v561 = vld [vmem:[%s487 + $0x1e8] sm:$0xff]
        %v562 = vld [vmem:[%s487 + $0x1f0] sm:$0xff]
        %v563 = vld [vmem:[%s487 + $0x1f8] sm:$0xff]
        %v564 = vld [vmem:[%s487 + $0x200] sm:$0xff]
        %v565 = vld [vmem:[%s487 + $0x208] sm:$0xff]
        %v566 = vld [vmem:[%s487 + $0x210] sm:$0xff]
        %v567 = vld [vmem:[%s487 + $0x218] sm:$0xff]
        %v568 = vld [vmem:[%s487 + $0x220] sm:$0xff]
        %v569 = vld [vmem:[%s487 + $0x228] sm:$0xff]
        %v570 = vld [vmem:[%s487 + $0x230] sm:$0xff]
        %v571 = vld [vmem:[%s487 + $0x238] sm:$0xff]
        %v572 = vld [vmem:[%s487 + $0x240] sm:$0xff]
        %v573 = vld [vmem:[%s487 + $0x248] sm:$0xff]
        %v574 = vld [vmem:[%s487 + $0x250] sm:$0xff]
        %v575 = vld [vmem:[%s487 + $0x258] sm:$0xff]
        %v576 = vld [vmem:[%s487 + $0x260] sm:$0xff]
        %v577 = vld [vmem:[%s487 + $0x268] sm:$0xff]
        %v578 = vld [vmem:[%s487 + $0x270] sm:$0xff]
        %v579 = vld [vmem:[%s487 + $0x278] sm:$0xff]
        %v580 = vld [vmem:[%s487 + $0x280] sm:$0xff]
        %v581 = vld [vmem:[%s487 + $0x288] sm:$0xff]
        %v582 = vld [vmem:[%s487 + $0x290] sm:$0xff]
        %v583 = vld [vmem:[%s487 + $0x298] sm:$0xff]
        %v584 = vld [vmem:[%s487 + $0x2a0] sm:$0xff]
        %v585 = vld [vmem:[%s487 + $0x2a8] sm:$0xff]
        %v586 = vld [vmem:[%s487 + $0x2b0] sm:$0xff]
        %v587 = vld [vmem:[%s487 + $0x2b8] sm:$0xff]
        %v588 = vld [vmem:[%s487 + $0x2c0] sm:$0xff]
        %v589 = vld [vmem:[%s487 + $0x2c8] sm:$0xff]
        %v590 = vld [vmem:[%s487 + $0x2d0] sm:$0xff]
        %v591 = vld [vmem:[%s487 + $0x2d8] sm:$0xff]
        %v592 = vld [vmem:[%s487 + $0x2e0] sm:$0xff]
        %v593 = vld [vmem:[%s487 + $0x2e8] sm:$0xff]
        %v594 = vld [vmem:[%s487 + $0x2f0] sm:$0xff]
        %v595 = vld [vmem:[%s487 + $0x2f8] sm:$0xff]
        %v596 = vld [vmem:[%s487 + $0x300] sm:$0xff]
        %v597 = vld [vmem:[%s487 + $0x308] sm:$0xff]
        %v598 = vld [vmem:[%s487 + $0x310] sm:$0xff]
        %v599 = vld [vmem:[%s487 + $0x318] sm:$0xff]
        %v600 = vld [vmem:[%s487 + $0x320] sm:$0xff]
        %v601 = vld [vmem:[%s487 + $0x328] sm:$0xff]
        %v602 = vld [vmem:[%s487 + $0x330] sm:$0xff]
        %v603 = vld [vmem:[%s487 + $0x338] sm:$0xff]
        %v604 = vld [vmem:[%s487 + $0x340] sm:$0xff]
        %v605 = vld [vmem:[%s487 + $0x348] sm:$0xff]
        %v606 = vld [vmem:[%s487 + $0x350] sm:$0xff]
        %v607 = vld [vmem:[%s487 + $0x358] sm:$0xff]
        %v608 = vld [vmem:[%s487 + $0x360] sm:$0xff]
        %v609 = vld [vmem:[%s487 + $0x368] sm:$0xff]
        %v610 = vld [vmem:[%s487 + $0x370] sm:$0xff]
        %v611 = vld [vmem:[%s487 + $0x378] sm:$0xff]
        %v612 = vld [vmem:[%s487 + $0x380] sm:$0xff]
        %v613 = vld [vmem:[%s487 + $0x388] sm:$0xff]
        %v614 = vld [vmem:[%s487 + $0x390] sm:$0xff]
        %v615 = vld [vmem:[%s487 + $0x398] sm:$0xff]
        %v616 = vld [vmem:[%s487 + $0x3a0] sm:$0xff]
        %v617 = vld [vmem:[%s487 + $0x3a8] sm:$0xff]
        %v618 = vld [vmem:[%s487 + $0x3b0] sm:$0xff]
        %v619 = vld [vmem:[%s487 + $0x3b8] sm:$0xff]
        %v620 = vld [vmem:[%s487 + $0x3c0] sm:$0xff]
        %v621 = vld [vmem:[%s487 + $0x3c8] sm:$0xff]
        %v622 = vld [vmem:[%s487 + $0x3d0] sm:$0xff]
        %v623 = vld [vmem:[%s487 + $0x3d8] sm:$0xff]
        %v624 = vld [vmem:[%s487 + $0x3e0] sm:$0xff]
        %v625 = vld [vmem:[%s487 + $0x3e8] sm:$0xff]
        %v626 = vld [vmem:[%s487 + $0x3f0] sm:$0xff]
        %v627 = vld [vmem:[%s487 + $0x3f8] sm:$0xff]
        %v628 = vld [vmem:[%s487 + $0x400] sm:$0xff]
        %v629 = vld [vmem:[%s487 + $0x408] sm:$0xff]
        %v630 = vld [vmem:[%s487 + $0x410] sm:$0xff]
        %v631 = vld [vmem:[%s487 + $0x418] sm:$0xff]
        %v632 = vld [vmem:[%s487 + $0x420] sm:$0xff]
        %v633 = vld [vmem:[%s487 + $0x428] sm:$0xff]
        %v634 = vld [vmem:[%s487 + $0x430] sm:$0xff]
        %v635 = vld [vmem:[%s487 + $0x438] sm:$0xff]
        %v636 = vld [vmem:[%s487 + $0x440] sm:$0xff]
        %v637 = vld [vmem:[%s487 + $0x448] sm:$0xff]
        %v638 = vld [vmem:[%s487 + $0x450] sm:$0xff]
        %v639 = vld [vmem:[%s487 + $0x458] sm:$0xff]
        %v640 = vld [vmem:[%s487 + $0x460] sm:$0xff]
        %v641 = vld [vmem:[%s487 + $0x468] sm:$0xff]
        %v642 = vld [vmem:[%s487 + $0x470] sm:$0xff]
        %v643 = vld [vmem:[%s487 + $0x478] sm:$0xff]
        %v644 = vld [vmem:[%s487 + $0x480] sm:$0xff]
        %v645 = vld [vmem:[%s487 + $0x488] sm:$0xff]
        %v646 = vld [vmem:[%s487 + $0x490] sm:$0xff]
        %v647 = vld [vmem:[%s487 + $0x498] sm:$0xff]
        %v648 = vld [vmem:[%s487 + $0x4a0] sm:$0xff]
        %v649 = vld [vmem:[%s487 + $0x4a8] sm:$0xff]
        %v650 = vld [vmem:[%s487 + $0x4b0] sm:$0xff]
        %v651 = vld [vmem:[%s487 + $0x4b8] sm:$0xff]
        %v652 = vld [vmem:[%s487 + $0x4c0] sm:$0xff]
        %v653 = vld [vmem:[%s487 + $0x4c8] sm:$0xff]
        %v654 = vld [vmem:[%s487 + $0x4d0] sm:$0xff]
        %v655 = vld [vmem:[%s487 + $0x4d8] sm:$0xff]
        %v656 = vld [vmem:[%s487 + $0x4e0] sm:$0xff]
        %v657 = vld [vmem:[%s487 + $0x4e8] sm:$0xff]
        %v658 = vld [vmem:[%s487 + $0x4f0] sm:$0xff]
        %v659 = vld [vmem:[%s487 + $0x4f8] sm:$0xff]
        %v660 = vld [vmem:[%s487 + $0x500] sm:$0xff]
        %v661 = vld [vmem:[%s487 + $0x508] sm:$0xff]
        %v662 = vld [vmem:[%s487 + $0x510] sm:$0xff]
        %v663 = vld [vmem:[%s487 + $0x518] sm:$0xff]
        %v664 = vld [vmem:[%s487 + $0x520] sm:$0xff]
        %v665 = vld [vmem:[%s487 + $0x528] sm:$0xff]
        %v666 = vld [vmem:[%s487 + $0x530] sm:$0xff]
        %v667 = vld [vmem:[%s487 + $0x538] sm:$0xff]
        %v668 = vld [vmem:[%s487 + $0x540] sm:$0xff]
        %v669 = vld [vmem:[%s487 + $0x548] sm:$0xff]
        %v670 = vld [vmem:[%s487 + $0x550] sm:$0xff]
        %v671 = vld [vmem:[%s487 + $0x558] sm:$0xff]
        %v672 = vld [vmem:[%s487 + $0x560] sm:$0xff]
        %v673 = vld [vmem:[%s487 + $0x568] sm:$0xff]
        %v674 = vld [vmem:[%s487 + $0x570] sm:$0xff]
        %v675 = vld [vmem:[%s487 + $0x578] sm:$0xff]
        %v676 = vld [vmem:[%s487 + $0x580] sm:$0xff]
        %v677 = vld [vmem:[%s487 + $0x588] sm:$0xff]
        %v678 = vld [vmem:[%s487 + $0x590] sm:$0xff]
        %v679 = vld [vmem:[%s487 + $0x598] sm:$0xff]
        %v680 = vld [vmem:[%s487 + $0x5a0] sm:$0xff]
        %v681 = vld [vmem:[%s487 + $0x5a8] sm:$0xff]
        %v682 = vld [vmem:[%s487 + $0x5b0] sm:$0xff]
        %v683 = vld [vmem:[%s487 + $0x5b8] sm:$0xff]
        %v684 = vld [vmem:[%s487 + $0x5c0] sm:$0xff]
        %v685 = vld [vmem:[%s487 + $0x5c8] sm:$0xff]
        %v686 = vld [vmem:[%s487 + $0x5d0] sm:$0xff]
        %v687 = vld [vmem:[%s487 + $0x5d8] sm:$0xff]
        %v688 = vld [vmem:[%s487 + $0x5e0] sm:$0xff]
        %v689 = vld [vmem:[%s487 + $0x5e8] sm:$0xff]
        %v690 = vld [vmem:[%s487 + $0x5f0] sm:$0xff]
        %v691 = vld [vmem:[%s487 + $0x5f8] sm:$0xff]
        %v692 = vld [vmem:[%s487 + $0x600] sm:$0xff]
        %v693 = vld [vmem:[%s487 + $0x608] sm:$0xff]
        %v694 = vld [vmem:[%s487 + $0x610] sm:$0xff]
        %v695 = vld [vmem:[%s487 + $0x618] sm:$0xff]
        %v696 = vld [vmem:[%s487 + $0x620] sm:$0xff]
        %v697 = vld [vmem:[%s487 + $0x628] sm:$0xff]
        %v698 = vld [vmem:[%s487 + $0x630] sm:$0xff]
        %v699 = vld [vmem:[%s487 + $0x638] sm:$0xff]
        %v700 = vld [vmem:[%s487 + $0x640] sm:$0xff]
        %v701 = vld [vmem:[%s487 + $0x648] sm:$0xff]
        %v702 = vld [vmem:[%s487 + $0x650] sm:$0xff]
        %v703 = vld [vmem:[%s487 + $0x658] sm:$0xff]
        %v704 = vld [vmem:[%s487 + $0x660] sm:$0xff]
        %v705 = vld [vmem:[%s487 + $0x668] sm:$0xff]
        %v706 = vld [vmem:[%s487 + $0x670] sm:$0xff]
        %v707 = vld [vmem:[%s487 + $0x678] sm:$0xff]
        %v708 = vld [vmem:[%s487 + $0x680] sm:$0xff]
        %v709 = vld [vmem:[%s487 + $0x688] sm:$0xff]
        %v710 = vld [vmem:[%s487 + $0x690] sm:$0xff]
        %v711 = vld [vmem:[%s487 + $0x698] sm:$0xff]
        %v712 = vld [vmem:[%s487 + $0x6a0] sm:$0xff]
        %v713 = vld [vmem:[%s487 + $0x6a8] sm:$0xff]
        %v714 = vld [vmem:[%s487 + $0x6b0] sm:$0xff]
        %v715 = vld [vmem:[%s487 + $0x6b8] sm:$0xff]
        %v716 = vld [vmem:[%s487 + $0x6c0] sm:$0xff]
        %v717 = vld [vmem:[%s487 + $0x6c8] sm:$0xff]
        %v718 = vld [vmem:[%s487 + $0x6d0] sm:$0xff]
        %v719 = vld [vmem:[%s487 + $0x6d8] sm:$0xff]
        %v720 = vld [vmem:[%s487 + $0x6e0] sm:$0xff]
        %v721 = vld [vmem:[%s487 + $0x6e8] sm:$0xff]
        %v722 = vld [vmem:[%s487 + $0x6f0] sm:$0xff]
        %v723 = vld [vmem:[%s487 + $0x6f8] sm:$0xff]
        %v724 = vld [vmem:[%s487 + $0x700] sm:$0xff]
        %v725 = vld [vmem:[%s487 + $0x708] sm:$0xff]
        %v726 = vld [vmem:[%s487 + $0x710] sm:$0xff]
        %v727 = vld [vmem:[%s487 + $0x718] sm:$0xff]
        %v728 = vld [vmem:[%s487 + $0x720] sm:$0xff]
        %v729 = vld [vmem:[%s487 + $0x728] sm:$0xff]
        %v730 = vld [vmem:[%s487 + $0x730] sm:$0xff]
        %v731 = vld [vmem:[%s487 + $0x738] sm:$0xff]
        %v732 = vld [vmem:[%s487 + $0x740] sm:$0xff]
        %v733 = vld [vmem:[%s487 + $0x748] sm:$0xff]
        %v734 = vld [vmem:[%s487 + $0x750] sm:$0xff]
        %v735 = vld [vmem:[%s487 + $0x758] sm:$0xff]
        %v736 = vld [vmem:[%s487 + $0x760] sm:$0xff]
        %v737 = vld [vmem:[%s487 + $0x768] sm:$0xff]
        %v738 = vld [vmem:[%s487 + $0x770] sm:$0xff]
        %v739 = vld [vmem:[%s487 + $0x778] sm:$0xff]
        %v740 = vld [vmem:[%s487 + $0x780] sm:$0xff]
        %v741 = vld [vmem:[%s487 + $0x788] sm:$0xff]
        %v742 = vld [vmem:[%s487 + $0x790] sm:$0xff]
        %v743 = vld [vmem:[%s487 + $0x798] sm:$0xff]
        %v744 = vld [vmem:[%s487 + $0x7a0] sm:$0xff]
        %v745 = vld [vmem:[%s487 + $0x7a8] sm:$0xff]
        %v746 = vld [vmem:[%s487 + $0x7b0] sm:$0xff]
        %v747 = vld [vmem:[%s487 + $0x7b8] sm:$0xff]
        %v748 = vld [vmem:[%s487 + $0x7c0] sm:$0xff]
        %v749 = vld [vmem:[%s487 + $0x7c8] sm:$0xff]
        %v750 = vld [vmem:[%s487 + $0x7d0] sm:$0xff]
        %v751 = vld [vmem:[%s487 + $0x7d8] sm:$0xff]
        %v752 = vld [vmem:[%s487 + $0x7e0] sm:$0xff]
        %v753 = vld [vmem:[%s487 + $0x7e8] sm:$0xff]
        %v754 = vld [vmem:[%s487 + $0x7f0] sm:$0xff]
        %v755 = vld [vmem:[%s487 + $0x7f8] sm:$0xff]
        %v756 = vld [vmem:[%s487 + $0x800] sm:$0xff]
        %v757 = vld [vmem:[%s487 + $0x808] sm:$0xff]
        %v758 = vld [vmem:[%s487 + $0x810] sm:$0xff]
        %v759 = vld [vmem:[%s487 + $0x818] sm:$0xff]
        %v760 = vld [vmem:[%s487 + $0x820] sm:$0xff]
        %v761 = vld [vmem:[%s487 + $0x828] sm:$0xff]
        %v762 = vld [vmem:[%s487 + $0x830] sm:$0xff]
        %v763 = vld [vmem:[%s487 + $0x838] sm:$0xff]
        %v764 = vld [vmem:[%s487 + $0x840] sm:$0xff]
        %v765 = vld [vmem:[%s487 + $0x848] sm:$0xff]
        %v766 = vld [vmem:[%s487 + $0x850] sm:$0xff]
        %v767 = vld [vmem:[%s487 + $0x858] sm:$0xff]
        %v768 = vld [vmem:[%s487 + $0x860] sm:$0xff]
        %v769 = vld [vmem:[%s487 + $0x868] sm:$0xff]
        %v770 = vld [vmem:[%s487 + $0x870] sm:$0xff]
        %v771 = vld [vmem:[%s487 + $0x878] sm:$0xff]
        %v772 = vld [vmem:[%s487 + $0x880] sm:$0xff]
        %v773 = vld [vmem:[%s487 + $0x888] sm:$0xff]
        %v774 = vld [vmem:[%s487 + $0x890] sm:$0xff]
        %v775 = vld [vmem:[%s487 + $0x898] sm:$0xff]
        %v776 = vld [vmem:[%s487 + $0x8a0] sm:$0xff]
        %v777 = vld [vmem:[%s487 + $0x8a8] sm:$0xff]
        %v778 = vld [vmem:[%s487 + $0x8b0] sm:$0xff]
        %v779 = vld [vmem:[%s487 + $0x8b8] sm:$0xff]
        %v780 = vld [vmem:[%s487 + $0x8c0] sm:$0xff]
        %v781 = vld [vmem:[%s487 + $0x8c8] sm:$0xff]
        %v782 = vld [vmem:[%s487 + $0x8d0] sm:$0xff]
        %v783 = vld [vmem:[%s487 + $0x8d8] sm:$0xff]
        %v784 = vld [vmem:[%s487 + $0x8e0] sm:$0xff]
        %v785 = vld [vmem:[%s487 + $0x8e8] sm:$0xff]
        %v786 = vld [vmem:[%s487 + $0x8f0] sm:$0xff]
        %v787 = vld [vmem:[%s487 + $0x8f8] sm:$0xff]
        %v788 = vld [vmem:[%s487 + $0x900] sm:$0xff]
        %v789 = vld [vmem:[%s487 + $0x908] sm:$0xff]
        %v790 = vld [vmem:[%s487 + $0x910] sm:$0xff]
        %v791 = vld [vmem:[%s487 + $0x918] sm:$0xff]
        %v792 = vld [vmem:[%s487 + $0x920] sm:$0xff]
        %v793 = vld [vmem:[%s487 + $0x928] sm:$0xff]
        %v794 = vld [vmem:[%s487 + $0x930] sm:$0xff]
        %v795 = vld [vmem:[%s487 + $0x938] sm:$0xff]
        %v796 = vld [vmem:[%s487 + $0x940] sm:$0xff]
        %v797 = vld [vmem:[%s487 + $0x948] sm:$0xff]
        %v798 = vld [vmem:[%s487 + $0x950] sm:$0xff]
        %v799 = vld [vmem:[%s487 + $0x958] sm:$0xff]
        %v800 = vld [vmem:[%s487 + $0x960] sm:$0xff]
        %v801 = vld [vmem:[%s487 + $0x968] sm:$0xff]
        %v802 = vld [vmem:[%s487 + $0x970] sm:$0xff]
        %v803 = vld [vmem:[%s487 + $0x978] sm:$0xff]
        %v804 = vld [vmem:[%s487 + $0x980] sm:$0xff]
        %v805 = vld [vmem:[%s487 + $0x988] sm:$0xff]
        %v806 = vld [vmem:[%s487 + $0x990] sm:$0xff]
        %v807 = vld [vmem:[%s487 + $0x998] sm:$0xff]
        %v808 = vld [vmem:[%s487 + $0x9a0] sm:$0xff]
        %v809 = vld [vmem:[%s487 + $0x9a8] sm:$0xff]
        %v810 = vld [vmem:[%s487 + $0x9b0] sm:$0xff]
        %v811 = vld [vmem:[%s487 + $0x9b8] sm:$0xff]
        %v812 = vld [vmem:[%s487 + $0x9c0] sm:$0xff]
        %v813 = vld [vmem:[%s487 + $0x9c8] sm:$0xff]
        %v814 = vld [vmem:[%s487 + $0x9d0] sm:$0xff]
        %v815 = vld [vmem:[%s487 + $0x9d8] sm:$0xff]
        %v816 = vld [vmem:[%s487 + $0x9e0] sm:$0xff]
        %v817 = vld [vmem:[%s487 + $0x9e8] sm:$0xff]
        %v818 = vld [vmem:[%s487 + $0x9f0] sm:$0xff]
        %v819 = vld [vmem:[%s487 + $0x9f8] sm:$0xff]
        %v820 = vld [vmem:[%s487 + $0xa00] sm:$0xff]
        %v821 = vld [vmem:[%s487 + $0xa08] sm:$0xff]
        %v822 = vld [vmem:[%s487 + $0xa10] sm:$0xff]
        %v823 = vld [vmem:[%s487 + $0xa18] sm:$0xff]
        %v824 = vld [vmem:[%s487 + $0xa20] sm:$0xff]
        %v825 = vld [vmem:[%s487 + $0xa28] sm:$0xff]
        %v826 = vld [vmem:[%s487 + $0xa30] sm:$0xff]
        %v827 = vld [vmem:[%s487 + $0xa38] sm:$0xff]
        %v828 = vld [vmem:[%s487 + $0xa40] sm:$0xff]
        %v829 = vld [vmem:[%s487 + $0xa48] sm:$0xff]
        %v830 = vld [vmem:[%s487 + $0xa50] sm:$0xff]
        %v831 = vld [vmem:[%s487 + $0xa58] sm:$0xff]
        %v832 = vld [vmem:[%s487 + $0xa60] sm:$0xff]
        %v833 = vld [vmem:[%s487 + $0xa68] sm:$0xff]
        %v834 = vld [vmem:[%s487 + $0xa70] sm:$0xff]
        %v835 = vld [vmem:[%s487 + $0xa78] sm:$0xff]
        %v836 = vld [vmem:[%s487 + $0xa80] sm:$0xff]
        %v837 = vld [vmem:[%s487 + $0xa88] sm:$0xff]
        %v838 = vld [vmem:[%s487 + $0xa90] sm:$0xff]
        %v839 = vld [vmem:[%s487 + $0xa98] sm:$0xff]
        %v840 = vld [vmem:[%s487 + $0xaa0] sm:$0xff]
        %v841 = vld [vmem:[%s487 + $0xaa8] sm:$0xff]
        %v842 = vld [vmem:[%s487 + $0xab0] sm:$0xff]
        %v843 = vld [vmem:[%s487 + $0xab8] sm:$0xff]
        %v844 = vld [vmem:[%s487 + $0xac0] sm:$0xff]
        %v845 = vld [vmem:[%s487 + $0xac8] sm:$0xff]
        %v846 = vld [vmem:[%s487 + $0xad0] sm:$0xff]
        %v847 = vld [vmem:[%s487 + $0xad8] sm:$0xff]
        %v848 = vld [vmem:[%s487 + $0xae0] sm:$0xff]
        %v849 = vld [vmem:[%s487 + $0xae8] sm:$0xff]
        %v850 = vld [vmem:[%s487 + $0xaf0] sm:$0xff]
        %v851 = vld [vmem:[%s487 + $0xaf8] sm:$0xff]
        %v852 = vld [vmem:[%s487 + $0xb00] sm:$0xff]
        %v853 = vld [vmem:[%s487 + $0xb08] sm:$0xff]
        %v854 = vld [vmem:[%s487 + $0xb10] sm:$0xff]
        %v855 = vld [vmem:[%s487 + $0xb18] sm:$0xff]
        %v856 = vld [vmem:[%s487 + $0xb20] sm:$0xff]
        %v857 = vld [vmem:[%s487 + $0xb28] sm:$0xff]
        %v858 = vld [vmem:[%s487 + $0xb30] sm:$0xff]
        %v859 = vld [vmem:[%s487 + $0xb38] sm:$0xff]
        %v860 = vld [vmem:[%s487 + $0xb40] sm:$0xff]
        %v861 = vld [vmem:[%s487 + $0xb48] sm:$0xff]
        %v862 = vld [vmem:[%s487 + $0xb50] sm:$0xff]
        %v863 = vld [vmem:[%s487 + $0xb58] sm:$0xff]
        %v864 = vld [vmem:[%s487 + $0xb60] sm:$0xff]
        %v865 = vld [vmem:[%s487 + $0xb68] sm:$0xff]
        %v866 = vld [vmem:[%s487 + $0xb70] sm:$0xff]
        %v867 = vld [vmem:[%s487 + $0xb78] sm:$0xff]
        %v868 = vld [vmem:[%s487 + $0xb80] sm:$0xff]
        %v869 = vld [vmem:[%s487 + $0xb88] sm:$0xff]
        %v870 = vld [vmem:[%s487 + $0xb90] sm:$0xff]
        %v871 = vld [vmem:[%s487 + $0xb98] sm:$0xff]
        %v872 = vld [vmem:[%s487 + $0xba0] sm:$0xff]
        %v873 = vld [vmem:[%s487 + $0xba8] sm:$0xff]
        %v874 = vld [vmem:[%s487 + $0xbb0] sm:$0xff]
        %v875 = vld [vmem:[%s487 + $0xbb8] sm:$0xff]
        %v876 = vld [vmem:[%s487 + $0xbc0] sm:$0xff]
        %v877 = vld [vmem:[%s487 + $0xbc8] sm:$0xff]
        %v878 = vld [vmem:[%s487 + $0xbd0] sm:$0xff]
        %v879 = vld [vmem:[%s487 + $0xbd8] sm:$0xff]
        %v880 = vld [vmem:[%s487 + $0xbe0] sm:$0xff]
        %v881 = vld [vmem:[%s487 + $0xbe8] sm:$0xff]
        %v882 = vld [vmem:[%s487 + $0xbf0] sm:$0xff]
        %v883 = vld [vmem:[%s487 + $0xbf8] sm:$0xff]
        %v884 = vld [vmem:[%s487 + $0xc00] sm:$0xff]
        %v885 = vld [vmem:[%s487 + $0xc08] sm:$0xff]
        %v886 = vld [vmem:[%s487 + $0xc10] sm:$0xff]
        %v887 = vld [vmem:[%s487 + $0xc18] sm:$0xff]
        %v888 = vld [vmem:[%s487 + $0xc20] sm:$0xff]
        %v889 = vld [vmem:[%s487 + $0xc28] sm:$0xff]
        %v890 = vld [vmem:[%s487 + $0xc30] sm:$0xff]
        %v891 = vld [vmem:[%s487 + $0xc38] sm:$0xff]
        %v892 = vld [vmem:[%s487 + $0xc40] sm:$0xff]
        %v893 = vld [vmem:[%s487 + $0xc48] sm:$0xff]
        %v894 = vld [vmem:[%s487 + $0xc50] sm:$0xff]
        %v895 = vld [vmem:[%s487 + $0xc58] sm:$0xff]
        %v896 = vld [vmem:[%s487 + $0xc60] sm:$0xff]
        %v897 = vld [vmem:[%s487 + $0xc68] sm:$0xff]
        %v898 = vld [vmem:[%s487 + $0xc70] sm:$0xff]
        %v899 = vld [vmem:[%s487 + $0xc78] sm:$0xff]
        %v900 = vld [vmem:[%s487 + $0xc80] sm:$0xff]
        %v901 = vld [vmem:[%s487 + $0xc88] sm:$0xff]
        %v902 = vld [vmem:[%s487 + $0xc90] sm:$0xff]
        %v903 = vld [vmem:[%s487 + $0xc98] sm:$0xff]
        %v904 = vld [vmem:[%s487 + $0xca0] sm:$0xff]
        %v905 = vld [vmem:[%s487 + $0xca8] sm:$0xff]
        %v906 = vld [vmem:[%s487 + $0xcb0] sm:$0xff]
        %v907 = vld [vmem:[%s487 + $0xcb8] sm:$0xff]
        %v908 = vld [vmem:[%s487 + $0xcc0] sm:$0xff]
        %v909 = vld [vmem:[%s487 + $0xcc8] sm:$0xff]
        %v910 = vld [vmem:[%s487 + $0xcd0] sm:$0xff]
        %v911 = vld [vmem:[%s487 + $0xcd8] sm:$0xff]
        %v912 = vld [vmem:[%s487 + $0xce0] sm:$0xff]
        %v913 = vld [vmem:[%s487 + $0xce8] sm:$0xff]
        %v914 = vld [vmem:[%s487 + $0xcf0] sm:$0xff]
        %v915 = vld [vmem:[%s487 + $0xcf8] sm:$0xff]
        %v916 = vld [vmem:[%s487 + $0xd00] sm:$0xff]
        %v917 = vld [vmem:[%s487 + $0xd08] sm:$0xff]
        %v918 = vld [vmem:[%s487 + $0xd10] sm:$0xff]
        %v919 = vld [vmem:[%s487 + $0xd18] sm:$0xff]
        %v920 = vld [vmem:[%s487 + $0xd20] sm:$0xff]
        %v921 = vld [vmem:[%s487 + $0xd28] sm:$0xff]
        %v922 = vld [vmem:[%s487 + $0xd30] sm:$0xff]
        %v923 = vld [vmem:[%s487 + $0xd38] sm:$0xff]
        %v924 = vld [vmem:[%s487 + $0xd40] sm:$0xff]
        %v925 = vld [vmem:[%s487 + $0xd48] sm:$0xff]
        %v926 = vld [vmem:[%s487 + $0xd50] sm:$0xff]
        %v927 = vld [vmem:[%s487 + $0xd58] sm:$0xff]
        %v928 = vld [vmem:[%s487 + $0xd60] sm:$0xff]
        %v929 = vld [vmem:[%s487 + $0xd68] sm:$0xff]
        %v930 = vld [vmem:[%s487 + $0xd70] sm:$0xff]
        %v931 = vld [vmem:[%s487 + $0xd78] sm:$0xff]
        %v932 = vld [vmem:[%s487 + $0xd80] sm:$0xff]
        %v933 = vld [vmem:[%s487 + $0xd88] sm:$0xff]
        %v934 = vld [vmem:[%s487 + $0xd90] sm:$0xff]
        %v935 = vld [vmem:[%s487 + $0xd98] sm:$0xff]
        %v936 = vld [vmem:[%s487 + $0xda0] sm:$0xff]
        %v937 = vld [vmem:[%s487 + $0xda8] sm:$0xff]
        %v938 = vld [vmem:[%s487 + $0xdb0] sm:$0xff]
        %v939 = vld [vmem:[%s487 + $0xdb8] sm:$0xff]
        %v940 = vld [vmem:[%s487 + $0xdc0] sm:$0xff]
        %v941 = vld [vmem:[%s487 + $0xdc8] sm:$0xff]
        %v942 = vld [vmem:[%s487 + $0xdd0] sm:$0xff]
        %v943 = vld [vmem:[%s487 + $0xdd8] sm:$0xff]
        %v944 = vld [vmem:[%s487 + $0xde0] sm:$0xff]
        %v945 = vld [vmem:[%s487 + $0xde8] sm:$0xff]
        %v946 = vld [vmem:[%s487 + $0xdf0] sm:$0xff]
        %v947 = vld [vmem:[%s487 + $0xdf8] sm:$0xff]
        %v948 = vld [vmem:[%s487 + $0xe00] sm:$0xff]
        %v949 = vld [vmem:[%s487 + $0xe08] sm:$0xff]
        %v950 = vld [vmem:[%s487 + $0xe10] sm:$0xff]
        %v951 = vld [vmem:[%s487 + $0xe18] sm:$0xff]
        %v952 = vld [vmem:[%s487 + $0xe20] sm:$0xff]
        %v953 = vld [vmem:[%s487 + $0xe28] sm:$0xff]
        %v954 = vld [vmem:[%s487 + $0xe30] sm:$0xff]
        %v955 = vld [vmem:[%s487 + $0xe38] sm:$0xff]
        %v956 = vld [vmem:[%s487 + $0xe40] sm:$0xff]
        %v957 = vld [vmem:[%s487 + $0xe48] sm:$0xff]
        %v958 = vld [vmem:[%s487 + $0xe50] sm:$0xff]
        %v959 = vld [vmem:[%s487 + $0xe58] sm:$0xff]
        %v960 = vld [vmem:[%s487 + $0xe60] sm:$0xff]
        %v961 = vld [vmem:[%s487 + $0xe68] sm:$0xff]
        %v962 = vld [vmem:[%s487 + $0xe70] sm:$0xff]
        %v963 = vld [vmem:[%s487 + $0xe78] sm:$0xff]
        %v964 = vld [vmem:[%s487 + $0xe80] sm:$0xff]
        %v965 = vld [vmem:[%s487 + $0xe88] sm:$0xff]
        %v966 = vld [vmem:[%s487 + $0xe90] sm:$0xff]
        %v967 = vld [vmem:[%s487 + $0xe98] sm:$0xff]
        %v968 = vld [vmem:[%s487 + $0xea0] sm:$0xff]
        %v969 = vld [vmem:[%s487 + $0xea8] sm:$0xff]
        %v970 = vld [vmem:[%s487 + $0xeb0] sm:$0xff]
        %v971 = vld [vmem:[%s487 + $0xeb8] sm:$0xff]
        %v972 = vld [vmem:[%s487 + $0xec0] sm:$0xff]
        %v973 = vld [vmem:[%s487 + $0xec8] sm:$0xff]
        %v974 = vld [vmem:[%s487 + $0xed0] sm:$0xff]
        %v975 = vld [vmem:[%s487 + $0xed8] sm:$0xff]
        %v976 = vld [vmem:[%s487 + $0xee0] sm:$0xff]
        %v977 = vld [vmem:[%s487 + $0xee8] sm:$0xff]
        %v978 = vld [vmem:[%s487 + $0xef0] sm:$0xff]
        %v979 = vld [vmem:[%s487 + $0xef8] sm:$0xff]
        %v980 = vld [vmem:[%s487 + $0xf00] sm:$0xff]
        %v981 = vld [vmem:[%s487 + $0xf08] sm:$0xff]
        %v982 = vld [vmem:[%s487 + $0xf10] sm:$0xff]
        %v983 = vld [vmem:[%s487 + $0xf18] sm:$0xff]
        %v984 = vld [vmem:[%s487 + $0xf20] sm:$0xff]
        %v985 = vld [vmem:[%s487 + $0xf28] sm:$0xff]
        %v986 = vld [vmem:[%s487 + $0xf30] sm:$0xff]
        %v987 = vld [vmem:[%s487 + $0xf38] sm:$0xff]
        %v988 = vld [vmem:[%s487 + $0xf40] sm:$0xff]
        %v989 = vld [vmem:[%s487 + $0xf48] sm:$0xff]
        %v990 = vld [vmem:[%s487 + $0xf50] sm:$0xff]
        %v991 = vld [vmem:[%s487 + $0xf58] sm:$0xff]
        %v992 = vld [vmem:[%s487 + $0xf60] sm:$0xff]
        %v993 = vld [vmem:[%s487 + $0xf68] sm:$0xff]
        %v994 = vld [vmem:[%s487 + $0xf70] sm:$0xff]
        %v995 = vld [vmem:[%s487 + $0xf78] sm:$0xff]
        %v996 = vld [vmem:[%s487 + $0xf80] sm:$0xff]
        %v997 = vld [vmem:[%s487 + $0xf88] sm:$0xff]
        %v998 = vld [vmem:[%s487 + $0xf90] sm:$0xff]
        %v999 = vld [vmem:[%s487 + $0xf98] sm:$0xff]
        %v1000 = vld [vmem:[%s487 + $0xfa0] sm:$0xff]
        %v1001 = vld [vmem:[%s487 + $0xfa8] sm:$0xff]
        %v1002 = vld [vmem:[%s487 + $0xfb0] sm:$0xff]
        %v1003 = vld [vmem:[%s487 + $0xfb8] sm:$0xff]
        %v1004 = vld [vmem:[%s487 + $0xfc0] sm:$0xff]
        %v1005 = vld [vmem:[%s487 + $0xfc8] sm:$0xff]
        %v1006 = vld [vmem:[%s487 + $0xfd0] sm:$0xff]
        %v1007 = vld [vmem:[%s487 + $0xfd8] sm:$0xff]
        %v1008 = vld [vmem:[%s487 + $0xfe0] sm:$0xff]
        %v1009 = vld [vmem:[%s487 + $0xfe8] sm:$0xff]
        %v1010 = vld [vmem:[%s487 + $0xff0] sm:$0xff]
        %v1011 = vld [vmem:[%s487 + $0xff8] sm:$0xff]
        %v1012 = vld [vmem:[%s487 + $0x1000] sm:$0xff]
        %v1013 = vld [vmem:[%s487 + $0x1008] sm:$0xff]
        %v1014 = vld [vmem:[%s487 + $0x1010] sm:$0xff]
        %v1015 = vld [vmem:[%s487 + $0x1018] sm:$0xff]
        %v1016 = vld [vmem:[%s487 + $0x1020] sm:$0xff]
        %v1017 = vld [vmem:[%s487 + $0x1028] sm:$0xff]
        %v1018 = vld [vmem:[%s487 + $0x1030] sm:$0xff]
        %v1019 = vld [vmem:[%s487 + $0x1038] sm:$0xff]
        %v1020 = vld [vmem:[%s487 + $0x1040] sm:$0xff]
        %v1021 = vld [vmem:[%s487 + $0x1048] sm:$0xff]
        %v1022 = vld [vmem:[%s487 + $0x1050] sm:$0xff]
        %v1023 = vld [vmem:[%s487 + $0x1058] sm:$0xff]
        %v1024 = vld [vmem:[%s487 + $0x1060] sm:$0xff]
        %v1025 = vld [vmem:[%s487 + $0x1068] sm:$0xff]
        %v1026 = vld [vmem:[%s487 + $0x1070] sm:$0xff]
        %v1027 = vld [vmem:[%s487 + $0x1078] sm:$0xff]
        %v1028 = vld [vmem:[%s487 + $0x1080] sm:$0xff]
        %v1029 = vld [vmem:[%s487 + $0x1088] sm:$0xff]
        %v1030 = vld [vmem:[%s487 + $0x1090] sm:$0xff]
        %v1031 = vld [vmem:[%s487 + $0x1098] sm:$0xff]
        %v1032 = vld [vmem:[%s487 + $0x10a0] sm:$0xff]
        %v1033 = vld [vmem:[%s487 + $0x10a8] sm:$0xff]
        %v1034 = vld [vmem:[%s487 + $0x10b0] sm:$0xff]
        %v1035 = vld [vmem:[%s487 + $0x10b8] sm:$0xff]
        %v1036 = vld [vmem:[%s487 + $0x10c0] sm:$0xff]
        %v1037 = vld [vmem:[%s487 + $0x10c8] sm:$0xff]
        %v1038 = vld [vmem:[%s487 + $0x10d0] sm:$0xff]
        %v1039 = vld [vmem:[%s487 + $0x10d8] sm:$0xff]
        %v1040 = vld [vmem:[%s487 + $0x10e0] sm:$0xff]
        %v1041 = vld [vmem:[%s487 + $0x10e8] sm:$0xff]
        %v1042 = vld [vmem:[%s487 + $0x10f0] sm:$0xff]
        %v1043 = vld [vmem:[%s487 + $0x10f8] sm:$0xff]
        %v1044 = vld [vmem:[%s487 + $0x1100] sm:$0xff]
        %v1045 = vld [vmem:[%s487 + $0x1108] sm:$0xff]
        %v1046 = vld [vmem:[%s487 + $0x1110] sm:$0xff]
        %v1047 = vld [vmem:[%s487 + $0x1118] sm:$0xff]
        %v1048 = vld [vmem:[%s487 + $0x1120] sm:$0xff]
        %v1049 = vld [vmem:[%s487 + $0x1128] sm:$0xff]
        %v1050 = vld [vmem:[%s487 + $0x1130] sm:$0xff]
        %v1051 = vld [vmem:[%s487 + $0x1138] sm:$0xff]
        %v1052 = vld [vmem:[%s487 + $0x1140] sm:$0xff]
        %v1053 = vld [vmem:[%s487 + $0x1148] sm:$0xff]
        %v1054 = vld [vmem:[%s487 + $0x1150] sm:$0xff]
        %v1055 = vld [vmem:[%s487 + $0x1158] sm:$0xff]
        %v1056 = vld [vmem:[%s487 + $0x1160] sm:$0xff]
        %v1057 = vld [vmem:[%s487 + $0x1168] sm:$0xff]
        %v1058 = vld [vmem:[%s487 + $0x1170] sm:$0xff]
        %v1059 = vld [vmem:[%s487 + $0x1178] sm:$0xff]
        %v1060 = vld [vmem:[%s487 + $0x1180] sm:$0xff]
        %v1061 = vld [vmem:[%s487 + $0x1188] sm:$0xff]
        %v1062 = vld [vmem:[%s487 + $0x1190] sm:$0xff]
        %v1063 = vld [vmem:[%s487 + $0x1198] sm:$0xff]
        %v1064 = vld [vmem:[%s487 + $0x11a0] sm:$0xff]
        %v1065 = vld [vmem:[%s487 + $0x11a8] sm:$0xff]
        %v1066 = vld [vmem:[%s487 + $0x11b0] sm:$0xff]
        %v1067 = vld [vmem:[%s487 + $0x11b8] sm:$0xff]
        %v1068 = vld [vmem:[%s487 + $0x11c0] sm:$0xff]
        %v1069 = vld [vmem:[%s487 + $0x11c8] sm:$0xff]
        %v1070 = vld [vmem:[%s487 + $0x11d0] sm:$0xff]
        %v1071 = vld [vmem:[%s487 + $0x11d8] sm:$0xff]
        %v1072 = vld [vmem:[%s487 + $0x11e0] sm:$0xff]
        %v1073 = vld [vmem:[%s487 + $0x11e8] sm:$0xff]
        %v1074 = vld [vmem:[%s487 + $0x11f0] sm:$0xff]
        %v1075 = vld [vmem:[%s487 + $0x11f8] sm:$0xff]
        %v1076 = vld [vmem:[%s487 + $0x1200] sm:$0xff]
        %v1077 = vld [vmem:[%s487 + $0x1208] sm:$0xff]
        %v1078 = vld [vmem:[%s487 + $0x1210] sm:$0xff]
        %v1079 = vld [vmem:[%s487 + $0x1218] sm:$0xff]
        %v1080 = vld [vmem:[%s487 + $0x1220] sm:$0xff]
        %v1081 = vld [vmem:[%s487 + $0x1228] sm:$0xff]
        %v1082 = vld [vmem:[%s487 + $0x1230] sm:$0xff]
        %v1083 = vld [vmem:[%s487 + $0x1238] sm:$0xff]
        %v1084 = vld [vmem:[%s487 + $0x1240] sm:$0xff]
        %v1085 = vld [vmem:[%s487 + $0x1248] sm:$0xff]
        %v1086 = vld [vmem:[%s487 + $0x1250] sm:$0xff]
        %v1087 = vld [vmem:[%s487 + $0x1258] sm:$0xff]
        %v1088 = vld [vmem:[%s487 + $0x1260] sm:$0xff]
        %v1089 = vld [vmem:[%s487 + $0x1268] sm:$0xff]
        %v1090 = vld [vmem:[%s487 + $0x1270] sm:$0xff]
        %v1091 = vld [vmem:[%s487 + $0x1278] sm:$0xff]
        %v1092 = vld [vmem:[%s487 + $0x1280] sm:$0xff]
        %v1093 = vld [vmem:[%s487 + $0x1288] sm:$0xff]
        %v1094 = vld [vmem:[%s487 + $0x1290] sm:$0xff]
        %v1095 = vld [vmem:[%s487 + $0x1298] sm:$0xff]
        %v1096 = vld [vmem:[%s487 + $0x12a0] sm:$0xff]
        %v1097 = vld [vmem:[%s487 + $0x12a8] sm:$0xff]
        %v1098 = vld [vmem:[%s487 + $0x12b0] sm:$0xff]
        %v1099 = vld [vmem:[%s487 + $0x12b8] sm:$0xff]
        %v1100 = vld [vmem:[%s487 + $0x12c0] sm:$0xff]
        %v1101 = vld [vmem:[%s487 + $0x12c8] sm:$0xff]
        %v1102 = vld [vmem:[%s487 + $0x12d0] sm:$0xff]
        %v1103 = vld [vmem:[%s487 + $0x12d8] sm:$0xff]
        %v1104 = vld [vmem:[%s487 + $0x12e0] sm:$0xff]
        %v1105 = vld [vmem:[%s487 + $0x12e8] sm:$0xff]
        %v1106 = vld [vmem:[%s487 + $0x12f0] sm:$0xff]
        %v1107 = vld [vmem:[%s487 + $0x12f8] sm:$0xff]
        %v1108 = vpack.c.bf16 %v519, %v500
        %v1109 = vpack.c.bf16 %v520, %v501
        %v1110 = vpack.c.bf16 %v521, %v502
        %v1111 = vpack.c.bf16 %v522, %v503
        %v1112 = vpack.c.bf16 %v523, %v504
        %v1113 = vpack.c.bf16 %v524, %v505
        %v1114 = vpack.c.bf16 %v525, %v506
        %v1115 = vpack.c.bf16 %v526, %v507
        %v1116 = vpack.c.bf16 %v527, %v508
        %v1117 = vpack.c.bf16 %v528, %v509
        %v1118 = vpack.c.bf16 %v529, %v510
        %v1119 = vpack.c.bf16 %v530, %v511
        %v1120 = vpack.c.bf16 %v531, %v512
        %v1121 = vpack.c.bf16 %v532, %v513
        %v1122 = vpack.c.bf16 %v533, %v514
        %v1123 = vpack.c.bf16 %v534, %v515
        %v1124 = vpack.c.bf16 %v535, %v516
        %v1125 = vpack.c.bf16 %v536, %v517
        %v1126 = vpack.c.bf16 %v537, %v518
        %v1127 = vpack.c.bf16 %v557, %v538
        %v1128 = vpack.c.bf16 %v558, %v539
        %v1129 = vpack.c.bf16 %v559, %v540
        %v1130 = vpack.c.bf16 %v560, %v541
        %v1131 = vpack.c.bf16 %v561, %v542
        %v1132 = vpack.c.bf16 %v562, %v543
        %v1133 = vpack.c.bf16 %v563, %v544
        %v1134 = vpack.c.bf16 %v564, %v545
        %v1135 = vpack.c.bf16 %v565, %v546
        %v1136 = vpack.c.bf16 %v566, %v547
        %v1137 = vpack.c.bf16 %v567, %v548
        %v1138 = vpack.c.bf16 %v568, %v549
        %v1139 = vpack.c.bf16 %v569, %v550
        %v1140 = vpack.c.bf16 %v570, %v551
        %v1141 = vpack.c.bf16 %v571, %v552
        %v1142 = vpack.c.bf16 %v572, %v553
        %v1143 = vpack.c.bf16 %v573, %v554
        %v1144 = vpack.c.bf16 %v574, %v555
        %v1145 = vpack.c.bf16 %v575, %v556
        %v1146 = vpack.c.bf16 %v595, %v576
        %v1147 = vpack.c.bf16 %v596, %v577
        %v1148 = vpack.c.bf16 %v597, %v578
        %v1149 = vpack.c.bf16 %v598, %v579
        %v1150 = vpack.c.bf16 %v599, %v580
        %v1151 = vpack.c.bf16 %v600, %v581
        %v1152 = vpack.c.bf16 %v601, %v582
        %v1153 = vpack.c.bf16 %v602, %v583
        %v1154 = vpack.c.bf16 %v603, %v584
        %v1155 = vpack.c.bf16 %v604, %v585
        %v1156 = vpack.c.bf16 %v605, %v586
        %v1157 = vpack.c.bf16 %v606, %v587
        %v1158 = vpack.c.bf16 %v607, %v588
        %v1159 = vpack.c.bf16 %v608, %v589
        %v1160 = vpack.c.bf16 %v609, %v590
        %v1161 = vpack.c.bf16 %v610, %v591
        %v1162 = vpack.c.bf16 %v611, %v592
        %v1163 = vpack.c.bf16 %v612, %v593
        %v1164 = vpack.c.bf16 %v613, %v594
        %v1165 = vpack.c.bf16 %v633, %v614
        %v1166 = vpack.c.bf16 %v634, %v615
        %v1167 = vpack.c.bf16 %v635, %v616
        %v1168 = vpack.c.bf16 %v636, %v617
        %v1169 = vpack.c.bf16 %v637, %v618
        %v1170 = vpack.c.bf16 %v638, %v619
        %v1171 = vpack.c.bf16 %v639, %v620
        %v1172 = vpack.c.bf16 %v640, %v621
        %v1173 = vpack.c.bf16 %v641, %v622
        %v1174 = vpack.c.bf16 %v642, %v623
        %v1175 = vpack.c.bf16 %v643, %v624
        %v1176 = vpack.c.bf16 %v644, %v625
        %v1177 = vpack.c.bf16 %v645, %v626
        %v1178 = vpack.c.bf16 %v646, %v627
        %v1179 = vpack.c.bf16 %v647, %v628
        %v1180 = vpack.c.bf16 %v648, %v629
        %v1181 = vpack.c.bf16 %v649, %v630
        %v1182 = vpack.c.bf16 %v650, %v631
        %v1183 = vpack.c.bf16 %v651, %v632
        %v1184 = vpack.c.bf16 %v671, %v652
        %v1185 = vpack.c.bf16 %v672, %v653
        %v1186 = vpack.c.bf16 %v673, %v654
        %v1187 = vpack.c.bf16 %v674, %v655
        %v1188 = vpack.c.bf16 %v675, %v656
        %v1189 = vpack.c.bf16 %v676, %v657
        %v1190 = vpack.c.bf16 %v677, %v658
        %v1191 = vpack.c.bf16 %v678, %v659
        %v1192 = vpack.c.bf16 %v679, %v660
        %v1193 = vpack.c.bf16 %v680, %v661
        %v1194 = vpack.c.bf16 %v681, %v662
        %v1195 = vpack.c.bf16 %v682, %v663
        %v1196 = vpack.c.bf16 %v683, %v664
        %v1197 = vpack.c.bf16 %v684, %v665
        %v1198 = vpack.c.bf16 %v685, %v666
        %v1199 = vpack.c.bf16 %v686, %v667
        %v1200 = vpack.c.bf16 %v687, %v668
        %v1201 = vpack.c.bf16 %v688, %v669
        %v1202 = vpack.c.bf16 %v689, %v670
        %v1203 = vpack.c.bf16 %v709, %v690
        %v1204 = vpack.c.bf16 %v710, %v691
        %v1205 = vpack.c.bf16 %v711, %v692
        %v1206 = vpack.c.bf16 %v712, %v693
        %v1207 = vpack.c.bf16 %v713, %v694
        %v1208 = vpack.c.bf16 %v714, %v695
        %v1209 = vpack.c.bf16 %v715, %v696
        %v1210 = vpack.c.bf16 %v716, %v697
        %v1211 = vpack.c.bf16 %v717, %v698
        %v1212 = vpack.c.bf16 %v718, %v699
        %v1213 = vpack.c.bf16 %v719, %v700
        %v1214 = vpack.c.bf16 %v720, %v701
        %v1215 = vpack.c.bf16 %v721, %v702
        %v1216 = vpack.c.bf16 %v722, %v703
        %v1217 = vpack.c.bf16 %v723, %v704
        %v1218 = vpack.c.bf16 %v724, %v705
        %v1219 = vpack.c.bf16 %v725, %v706
        %v1220 = vpack.c.bf16 %v726, %v707
        %v1221 = vpack.c.bf16 %v727, %v708
        %v1222 = vpack.c.bf16 %v747, %v728
        %v1223 = vpack.c.bf16 %v748, %v729
        %v1224 = vpack.c.bf16 %v749, %v730
        %v1225 = vpack.c.bf16 %v750, %v731
        %v1226 = vpack.c.bf16 %v751, %v732
        %v1227 = vpack.c.bf16 %v752, %v733
        %v1228 = vpack.c.bf16 %v753, %v734
        %v1229 = vpack.c.bf16 %v754, %v735
        %v1230 = vpack.c.bf16 %v755, %v736
        %v1231 = vpack.c.bf16 %v756, %v737
        %v1232 = vpack.c.bf16 %v757, %v738
        %v1233 = vpack.c.bf16 %v758, %v739
        %v1234 = vpack.c.bf16 %v759, %v740
        %v1235 = vpack.c.bf16 %v760, %v741
        %v1236 = vpack.c.bf16 %v761, %v742
        %v1237 = vpack.c.bf16 %v762, %v743
        %v1238 = vpack.c.bf16 %v763, %v744
        %v1239 = vpack.c.bf16 %v764, %v745
        %v1240 = vpack.c.bf16 %v765, %v746
        %v1241 = vpack.c.bf16 %v785, %v766
        %v1242 = vpack.c.bf16 %v786, %v767
        %v1243 = vpack.c.bf16 %v787, %v768
        %v1244 = vpack.c.bf16 %v788, %v769
        %v1245 = vpack.c.bf16 %v789, %v770
        %v1246 = vpack.c.bf16 %v790, %v771
        %v1247 = vpack.c.bf16 %v791, %v772
        %v1248 = vpack.c.bf16 %v792, %v773
        %v1249 = vpack.c.bf16 %v793, %v774
        %v1250 = vpack.c.bf16 %v794, %v775
        %v1251 = vpack.c.bf16 %v795, %v776
        %v1252 = vpack.c.bf16 %v796, %v777
        %v1253 = vpack.c.bf16 %v797, %v778
        %v1254 = vpack.c.bf16 %v798, %v779
        %v1255 = vpack.c.bf16 %v799, %v780
        %v1256 = vpack.c.bf16 %v800, %v781
        %v1257 = vpack.c.bf16 %v801, %v782
        %v1258 = vpack.c.bf16 %v802, %v783
        %v1259 = vpack.c.bf16 %v803, %v784
        %v1260 = vpack.c.bf16 %v823, %v804
        %v1261 = vpack.c.bf16 %v824, %v805
        %v1262 = vpack.c.bf16 %v825, %v806
        %v1263 = vpack.c.bf16 %v826, %v807
        %v1264 = vpack.c.bf16 %v827, %v808
        %v1265 = vpack.c.bf16 %v828, %v809
        %v1266 = vpack.c.bf16 %v829, %v810
        %v1267 = vpack.c.bf16 %v830, %v811
        %v1268 = vpack.c.bf16 %v831, %v812
        %v1269 = vpack.c.bf16 %v832, %v813
        %v1270 = vpack.c.bf16 %v833, %v814
        %v1271 = vpack.c.bf16 %v834, %v815
        %v1272 = vpack.c.bf16 %v835, %v816
        %v1273 = vpack.c.bf16 %v836, %v817
        %v1274 = vpack.c.bf16 %v837, %v818
        %v1275 = vpack.c.bf16 %v838, %v819
        %v1276 = vpack.c.bf16 %v839, %v820
        %v1277 = vpack.c.bf16 %v840, %v821
        %v1278 = vpack.c.bf16 %v841, %v822
        %v1279 = vpack.c.bf16 %v861, %v842
        %v1280 = vpack.c.bf16 %v862, %v843
        %v1281 = vpack.c.bf16 %v863, %v844
        %v1282 = vpack.c.bf16 %v864, %v845
        %v1283 = vpack.c.bf16 %v865, %v846
        %v1284 = vpack.c.bf16 %v866, %v847
        %v1285 = vpack.c.bf16 %v867, %v848
        %v1286 = vpack.c.bf16 %v868, %v849
        %v1287 = vpack.c.bf16 %v869, %v850
        %v1288 = vpack.c.bf16 %v870, %v851
        %v1289 = vpack.c.bf16 %v871, %v852
        %v1290 = vpack.c.bf16 %v872, %v853
        %v1291 = vpack.c.bf16 %v873, %v854
        %v1292 = vpack.c.bf16 %v874, %v855
        %v1293 = vpack.c.bf16 %v875, %v856
        %v1294 = vpack.c.bf16 %v876, %v857
        %v1295 = vpack.c.bf16 %v877, %v858
        %v1296 = vpack.c.bf16 %v878, %v859
        %v1297 = vpack.c.bf16 %v879, %v860
        %v1298 = vpack.c.bf16 %v899, %v880
        %v1299 = vpack.c.bf16 %v900, %v881
        %v1300 = vpack.c.bf16 %v901, %v882
        %v1301 = vpack.c.bf16 %v902, %v883
        %v1302 = vpack.c.bf16 %v903, %v884
        %v1303 = vpack.c.bf16 %v904, %v885
        %v1304 = vpack.c.bf16 %v905, %v886
        %v1305 = vpack.c.bf16 %v906, %v887
        %v1306 = vpack.c.bf16 %v907, %v888
        %v1307 = vpack.c.bf16 %v908, %v889
        %v1308 = vpack.c.bf16 %v909, %v890
        %v1309 = vpack.c.bf16 %v910, %v891
        %v1310 = vpack.c.bf16 %v911, %v892
        %v1311 = vpack.c.bf16 %v912, %v893
        %v1312 = vpack.c.bf16 %v913, %v894
        %v1313 = vpack.c.bf16 %v914, %v895
        %v1314 = vpack.c.bf16 %v915, %v896
        %v1315 = vpack.c.bf16 %v916, %v897
        %v1316 = vpack.c.bf16 %v917, %v898
        %v1317 = vpack.c.bf16 %v937, %v918
        %v1318 = vpack.c.bf16 %v938, %v919
        %v1319 = vpack.c.bf16 %v939, %v920
        %v1320 = vpack.c.bf16 %v940, %v921
        %v1321 = vpack.c.bf16 %v941, %v922
        %v1322 = vpack.c.bf16 %v942, %v923
        %v1323 = vpack.c.bf16 %v943, %v924
        %v1324 = vpack.c.bf16 %v944, %v925
        %v1325 = vpack.c.bf16 %v945, %v926
        %v1326 = vpack.c.bf16 %v946, %v927
        %v1327 = vpack.c.bf16 %v947, %v928
        %v1328 = vpack.c.bf16 %v948, %v929
        %v1329 = vpack.c.bf16 %v949, %v930
        %v1330 = vpack.c.bf16 %v950, %v931
        %v1331 = vpack.c.bf16 %v951, %v932
        %v1332 = vpack.c.bf16 %v952, %v933
        %v1333 = vpack.c.bf16 %v953, %v934
        %v1334 = vpack.c.bf16 %v954, %v935
        %v1335 = vpack.c.bf16 %v955, %v936
        %v1336 = vpack.c.bf16 %v975, %v956
        %v1337 = vpack.c.bf16 %v976, %v957
        %v1338 = vpack.c.bf16 %v977, %v958
        %v1339 = vpack.c.bf16 %v978, %v959
        %v1340 = vpack.c.bf16 %v979, %v960
        %v1341 = vpack.c.bf16 %v980, %v961
        %v1342 = vpack.c.bf16 %v981, %v962
        %v1343 = vpack.c.bf16 %v982, %v963
        %v1344 = vpack.c.bf16 %v983, %v964
        %v1345 = vpack.c.bf16 %v984, %v965
        %v1346 = vpack.c.bf16 %v985, %v966
        %v1347 = vpack.c.bf16 %v986, %v967
        %v1348 = vpack.c.bf16 %v987, %v968
        %v1349 = vpack.c.bf16 %v988, %v969
        %v1350 = vpack.c.bf16 %v989, %v970
        %v1351 = vpack.c.bf16 %v990, %v971
        %v1352 = vpack.c.bf16 %v991, %v972
        %v1353 = vpack.c.bf16 %v992, %v973
        %v1354 = vpack.c.bf16 %v993, %v974
        %v1355 = vpack.c.bf16 %v1013, %v994
        %v1356 = vpack.c.bf16 %v1014, %v995
        %v1357 = vpack.c.bf16 %v1015, %v996
        %v1358 = vpack.c.bf16 %v1016, %v997
        %v1359 = vpack.c.bf16 %v1017, %v998
        %v1360 = vpack.c.bf16 %v1018, %v999
        %v1361 = vpack.c.bf16 %v1019, %v1000
        %v1362 = vpack.c.bf16 %v1020, %v1001
        %v1363 = vpack.c.bf16 %v1021, %v1002
        %v1364 = vpack.c.bf16 %v1022, %v1003
        %v1365 = vpack.c.bf16 %v1023, %v1004
        %v1366 = vpack.c.bf16 %v1024, %v1005
        %v1367 = vpack.c.bf16 %v1025, %v1006
        %v1368 = vpack.c.bf16 %v1026, %v1007
        %v1369 = vpack.c.bf16 %v1027, %v1008
        %v1370 = vpack.c.bf16 %v1028, %v1009
        %v1371 = vpack.c.bf16 %v1029, %v1010
        %v1372 = vpack.c.bf16 %v1030, %v1011
        %v1373 = vpack.c.bf16 %v1031, %v1012
        %v1374 = vpack.c.bf16 %v1051, %v1032
        %v1375 = vpack.c.bf16 %v1052, %v1033
        %v1376 = vpack.c.bf16 %v1053, %v1034
        %v1377 = vpack.c.bf16 %v1054, %v1035
        %v1378 = vpack.c.bf16 %v1055, %v1036
        %v1379 = vpack.c.bf16 %v1056, %v1037
        %v1380 = vpack.c.bf16 %v1057, %v1038
        %v1381 = vpack.c.bf16 %v1058, %v1039
        %v1382 = vpack.c.bf16 %v1059, %v1040
        %v1383 = vpack.c.bf16 %v1060, %v1041
        %v1384 = vpack.c.bf16 %v1061, %v1042
        %v1385 = vpack.c.bf16 %v1062, %v1043
        %v1386 = vpack.c.bf16 %v1063, %v1044
        %v1387 = vpack.c.bf16 %v1064, %v1045
        %v1388 = vpack.c.bf16 %v1065, %v1046
        %v1389 = vpack.c.bf16 %v1066, %v1047
        %v1390 = vpack.c.bf16 %v1067, %v1048
        %v1391 = vpack.c.bf16 %v1068, %v1049
        %v1392 = vpack.c.bf16 %v1069, %v1050
        %v1393 = vpack.c.bf16 %v1089, %v1070
        %v1394 = vpack.c.bf16 %v1090, %v1071
        %v1395 = vpack.c.bf16 %v1091, %v1072
        %v1396 = vpack.c.bf16 %v1092, %v1073
        %v1397 = vpack.c.bf16 %v1093, %v1074
        %v1398 = vpack.c.bf16 %v1094, %v1075
        %v1399 = vpack.c.bf16 %v1095, %v1076
        %v1400 = vpack.c.bf16 %v1096, %v1077
        %v1401 = vpack.c.bf16 %v1097, %v1078
        %v1402 = vpack.c.bf16 %v1098, %v1079
        %v1403 = vpack.c.bf16 %v1099, %v1080
        %v1404 = vpack.c.bf16 %v1100, %v1081
        %v1405 = vpack.c.bf16 %v1101, %v1082
        %v1406 = vpack.c.bf16 %v1102, %v1083
        %v1407 = vpack.c.bf16 %v1103, %v1084
        %v1408 = vpack.c.bf16 %v1104, %v1085
        %v1409 = vpack.c.bf16 %v1105, %v1086
        %v1410 = vpack.c.bf16 %v1106, %v1087
        %v1411 = vpack.c.bf16 %v1107, %v1088
        %v1412 = vld [vmem:[%s1] sm:$0xf]
        %v1413 = vld [vmem:[%s1 + $0x4] sm:$0xf]
        %v1414 = vld [vmem:[%s1 + $0x8] sm:$0xf]
        %v1415 = vld [vmem:[%s1 + $0xc] sm:$0xf]
        %v1416 = vld [vmem:[%s1 + $0x10] sm:$0xf]
        %v1417 = vld [vmem:[%s1 + $0x14] sm:$0xf]
        %v1418 = vld [vmem:[%s1 + $0x18] sm:$0xf]
        %v1419 = vld [vmem:[%s1 + $0x1c] sm:$0xf]
        %v1420 = vld [vmem:[%s1 + $0x20] sm:$0xf]
        %v1421 = vld [vmem:[%s1 + $0x24] sm:$0xf]
        %v1422 = vld [vmem:[%s1 + $0x28] sm:$0xf]
        %v1423 = vld [vmem:[%s1 + $0x2c] sm:$0xf]
        %v1424 = vld [vmem:[%s1 + $0x30] sm:$0xf]
        %v1425 = vld [vmem:[%s1 + $0x34] sm:$0xf]
        %v1426 = vld [vmem:[%s1 + $0x38] sm:$0xf]
        %v1427 = vld [vmem:[%s1 + $0x3c] sm:$0xf]
        %v1428 = vld [vmem:[%s1 + $0x40] sm:$0xf]
        %v1429 = vld [vmem:[%s1 + $0x44] sm:$0xf]
        %v1430 = vld [vmem:[%s1 + $0x48] sm:$0xf]
        %v1431 = vld [vmem:[%s1 + $0x4c] sm:$0xf]
        %v1432 = vld [vmem:[%s1 + $0x50] sm:$0xf]
        %v1433 = vld [vmem:[%s1 + $0x54] sm:$0xf]
        %v1434 = vld [vmem:[%s1 + $0x58] sm:$0xf]
        %v1435 = vld [vmem:[%s1 + $0x5c] sm:$0xf]
        %v1436 = vld [vmem:[%s1 + $0x60] sm:$0xf]
        %v1437 = vld [vmem:[%s1 + $0x64] sm:$0xf]
        %v1438 = vld [vmem:[%s1 + $0x68] sm:$0xf]
        %v1439 = vld [vmem:[%s1 + $0x6c] sm:$0xf]
        %v1440 = vld [vmem:[%s1 + $0x70] sm:$0xf]
        %v1441 = vld [vmem:[%s1 + $0x74] sm:$0xf]
        %v1442 = vld [vmem:[%s1 + $0x78] sm:$0xf]
        %v1443 = vld [vmem:[%s1 + $0x7c] sm:$0xf]
        %v1444 = vld [vmem:[%s1 + $0x80] sm:$0xf]
        %v1445 = vld [vmem:[%s1 + $0x84] sm:$0xf]
        %v1446 = vld [vmem:[%s1 + $0x88] sm:$0xf]
        %v1447 = vld [vmem:[%s1 + $0x8c] sm:$0xf]
        %v1448 = vld [vmem:[%s1 + $0x90] sm:$0xf]
        %v1449 = vld [vmem:[%s1 + $0x94] sm:$0xf]
        %v1450 = vld [vmem:[%s1 + $0x98] sm:$0xf]
        %v1451 = vld [vmem:[%s1 + $0x9c] sm:$0xf]
        %v1452 = vld [vmem:[%s1 + $0xa0] sm:$0xf]
        %v1453 = vld [vmem:[%s1 + $0xa4] sm:$0xf]
        %v1454 = vld [vmem:[%s1 + $0xa8] sm:$0xf]
        %v1455 = vld [vmem:[%s1 + $0xac] sm:$0xf]
        %v1456 = vld [vmem:[%s1 + $0xb0] sm:$0xf]
        %v1457 = vld [vmem:[%s1 + $0xb4] sm:$0xf]
        %v1458 = vld [vmem:[%s1 + $0xb8] sm:$0xf]
        %v1459 = vld [vmem:[%s1 + $0xbc] sm:$0xf]
        %v1460 = vld [vmem:[%s1 + $0xc0] sm:$0xf]
        %v1461 = vld [vmem:[%s1 + $0xc4] sm:$0xf]
        %v1462 = vld [vmem:[%s1 + $0xc8] sm:$0xf]
        %v1463 = vld [vmem:[%s1 + $0xcc] sm:$0xf]
        %v1464 = vld [vmem:[%s1 + $0xd0] sm:$0xf]
        %v1465 = vld [vmem:[%s1 + $0xd4] sm:$0xf]
        %v1466 = vld [vmem:[%s1 + $0xd8] sm:$0xf]
        %v1467 = vld [vmem:[%s1 + $0xdc] sm:$0xf]
        %v1468 = vld [vmem:[%s1 + $0xe0] sm:$0xf]
        %v1469 = vld [vmem:[%s1 + $0xe4] sm:$0xf]
        %v1470 = vld [vmem:[%s1 + $0xe8] sm:$0xf]
        %v1471 = vld [vmem:[%s1 + $0xec] sm:$0xf]
        %v1472 = vld [vmem:[%s1 + $0xf0] sm:$0xf]
        %v1473 = vld [vmem:[%s1 + $0xf4] sm:$0xf]
        %v1474 = vld [vmem:[%s1 + $0xf8] sm:$0xf]
        %v1475 = vld [vmem:[%s1 + $0xfc] sm:$0xf]
        %v1476 = vld [vmem:[%s1 + $0x100] sm:$0xf]
        %v1477 = vld [vmem:[%s1 + $0x104] sm:$0xf]
        %v1478 = vld [vmem:[%s1 + $0x108] sm:$0xf]
        %v1479 = vld [vmem:[%s1 + $0x10c] sm:$0xf]
        %v1480 = vld [vmem:[%s1 + $0x110] sm:$0xf]
        %v1481 = vld [vmem:[%s1 + $0x114] sm:$0xf]
        %v1482 = vld [vmem:[%s1 + $0x118] sm:$0xf]
        %v1483 = vld [vmem:[%s1 + $0x11c] sm:$0xf]
        %v1484 = vld [vmem:[%s1 + $0x120] sm:$0xf]
        %v1485 = vld [vmem:[%s1 + $0x124] sm:$0xf]
        %v1486 = vld [vmem:[%s1 + $0x128] sm:$0xf]
        %v1487 = vld [vmem:[%s1 + $0x12c] sm:$0xf]
        %v1488 = vld [vmem:[%s1 + $0x130] sm:$0xf]
        %v1489 = vld [vmem:[%s1 + $0x134] sm:$0xf]
        %v1490 = vld [vmem:[%s1 + $0x138] sm:$0xf]
        %v1491 = vld [vmem:[%s1 + $0x13c] sm:$0xf]
        %v1492 = vld [vmem:[%s1 + $0x140] sm:$0xf]
        %v1493 = vld [vmem:[%s1 + $0x144] sm:$0xf]
        %v1494 = vld [vmem:[%s1 + $0x148] sm:$0xf]
        %v1495 = vld [vmem:[%s1 + $0x14c] sm:$0xf]
        %v1496 = vld [vmem:[%s1 + $0x150] sm:$0xf]
        %v1497 = vld [vmem:[%s1 + $0x154] sm:$0xf]
        %v1498 = vld [vmem:[%s1 + $0x158] sm:$0xf]
        %v1499 = vld [vmem:[%s1 + $0x15c] sm:$0xf]
        %v1500 = vld [vmem:[%s1 + $0x160] sm:$0xf]
        %v1501 = vld [vmem:[%s1 + $0x164] sm:$0xf]
        %v1502 = vld [vmem:[%s1 + $0x168] sm:$0xf]
        %v1503 = vld [vmem:[%s1 + $0x16c] sm:$0xf]
        %v1504 = vld [vmem:[%s1 + $0x170] sm:$0xf]
        %v1505 = vld [vmem:[%s1 + $0x174] sm:$0xf]
        %v1506 = vld [vmem:[%s1 + $0x178] sm:$0xf]
        %v1507 = vld [vmem:[%s1 + $0x17c] sm:$0xf]
        %v1508 = vld [vmem:[%s1 + $0x180] sm:$0xf]
        %v1509 = vld [vmem:[%s1 + $0x184] sm:$0xf]
        %v1510 = vld [vmem:[%s1 + $0x188] sm:$0xf]
        %v1511 = vld [vmem:[%s1 + $0x18c] sm:$0xf]
        %v1512 = vld [vmem:[%s1 + $0x190] sm:$0xf]
        %v1513 = vld [vmem:[%s1 + $0x194] sm:$0xf]
        %v1514 = vld [vmem:[%s1 + $0x198] sm:$0xf]
        %v1515 = vld [vmem:[%s1 + $0x19c] sm:$0xf]
        %v1516 = vld [vmem:[%s1 + $0x1a0] sm:$0xf]
        %v1517 = vld [vmem:[%s1 + $0x1a4] sm:$0xf]
        %v1518 = vld [vmem:[%s1 + $0x1a8] sm:$0xf]
        %v1519 = vld [vmem:[%s1 + $0x1ac] sm:$0xf]
        %v1520 = vld [vmem:[%s1 + $0x1b0] sm:$0xf]
        %v1521 = vld [vmem:[%s1 + $0x1b4] sm:$0xf]
        %v1522 = vld [vmem:[%s1 + $0x1b8] sm:$0xf]
        %v1523 = vld [vmem:[%s1 + $0x1bc] sm:$0xf]
        %v1524 = vld [vmem:[%s1 + $0x1c0] sm:$0xf]
        %v1525 = vld [vmem:[%s1 + $0x1c4] sm:$0xf]
        %v1526 = vld [vmem:[%s1 + $0x1c8] sm:$0xf]
        %v1527 = vld [vmem:[%s1 + $0x1cc] sm:$0xf]
        %v1528 = vld [vmem:[%s1 + $0x1d0] sm:$0xf]
        %v1529 = vld [vmem:[%s1 + $0x1d4] sm:$0xf]
        %v1530 = vld [vmem:[%s1 + $0x1d8] sm:$0xf]
        %v1531 = vld [vmem:[%s1 + $0x1dc] sm:$0xf]
        %v1532 = vld [vmem:[%s1 + $0x1e0] sm:$0xf]
        %v1533 = vld [vmem:[%s1 + $0x1e4] sm:$0xf]
        %v1534 = vld [vmem:[%s1 + $0x1e8] sm:$0xf]
        %v1535 = vld [vmem:[%s1 + $0x1ec] sm:$0xf]
        %v1536 = vld [vmem:[%s1 + $0x1f0] sm:$0xf]
        %v1537 = vld [vmem:[%s1 + $0x1f4] sm:$0xf]
        %v1538 = vld [vmem:[%s1 + $0x1f8] sm:$0xf]
        %v1539 = vld [vmem:[%s1 + $0x1fc] sm:$0xf]
        %v1540 = vld [vmem:[%s1 + $0x200] sm:$0xf]
        %v1541 = vld [vmem:[%s1 + $0x204] sm:$0xf]
        %v1542 = vld [vmem:[%s1 + $0x208] sm:$0xf]
        %v1543 = vld [vmem:[%s1 + $0x20c] sm:$0xf]
        %v1544 = vld [vmem:[%s1 + $0x210] sm:$0xf]
        %v1545 = vld [vmem:[%s1 + $0x214] sm:$0xf]
        %v1546 = vld [vmem:[%s1 + $0x218] sm:$0xf]
        %v1547 = vld [vmem:[%s1 + $0x21c] sm:$0xf]
        %v1548 = vld [vmem:[%s1 + $0x220] sm:$0xf]
        %v1549 = vld [vmem:[%s1 + $0x224] sm:$0xf]
        %v1550 = vld [vmem:[%s1 + $0x228] sm:$0xf]
        %v1551 = vld [vmem:[%s1 + $0x22c] sm:$0xf]
        %v1552 = vld [vmem:[%s1 + $0x230] sm:$0xf]
        %v1553 = vld [vmem:[%s1 + $0x234] sm:$0xf]
        %v1554 = vld [vmem:[%s1 + $0x238] sm:$0xf]
        %v1555 = vld [vmem:[%s1 + $0x23c] sm:$0xf]
        %v1556 = vld [vmem:[%s1 + $0x240] sm:$0xf]
        %v1557 = vld [vmem:[%s1 + $0x244] sm:$0xf]
        %v1558 = vld [vmem:[%s1 + $0x248] sm:$0xf]
        %v1559 = vld [vmem:[%s1 + $0x24c] sm:$0xf]
        %v1560 = vld [vmem:[%s1 + $0x250] sm:$0xf]
        %v1561 = vld [vmem:[%s1 + $0x254] sm:$0xf]
        %v1562 = vld [vmem:[%s1 + $0x258] sm:$0xf]
        %v1563 = vld [vmem:[%s1 + $0x25c] sm:$0xf]
        %v1564 = vld [vmem:[%s1 + $0x260] sm:$0xf]
        %v1565 = vld [vmem:[%s1 + $0x264] sm:$0xf]
        %v1566 = vld [vmem:[%s1 + $0x268] sm:$0xf]
        %v1567 = vld [vmem:[%s1 + $0x26c] sm:$0xf]
        %v1568 = vld [vmem:[%s1 + $0x270] sm:$0xf]
        %v1569 = vld [vmem:[%s1 + $0x274] sm:$0xf]
        %v1570 = vld [vmem:[%s1 + $0x278] sm:$0xf]
        %v1571 = vld [vmem:[%s1 + $0x27c] sm:$0xf]
        %v1572 = vld [vmem:[%s1 + $0x280] sm:$0xf]
        %v1573 = vld [vmem:[%s1 + $0x284] sm:$0xf]
        %v1574 = vld [vmem:[%s1 + $0x288] sm:$0xf]
        %v1575 = vld [vmem:[%s1 + $0x28c] sm:$0xf]
        %v1576 = vld [vmem:[%s1 + $0x290] sm:$0xf]
        %v1577 = vld [vmem:[%s1 + $0x294] sm:$0xf]
        %v1578 = vld [vmem:[%s1 + $0x298] sm:$0xf]
        %v1579 = vld [vmem:[%s1 + $0x29c] sm:$0xf]
        %v1580 = vld [vmem:[%s1 + $0x2a0] sm:$0xf]
        %v1581 = vld [vmem:[%s1 + $0x2a4] sm:$0xf]
        %v1582 = vld [vmem:[%s1 + $0x2a8] sm:$0xf]
        %v1583 = vld [vmem:[%s1 + $0x2ac] sm:$0xf]
        %v1584 = vld [vmem:[%s1 + $0x2b0] sm:$0xf]
        %v1585 = vld [vmem:[%s1 + $0x2b4] sm:$0xf]
        %v1586 = vld [vmem:[%s1 + $0x2b8] sm:$0xf]
        %v1587 = vld [vmem:[%s1 + $0x2bc] sm:$0xf]
        %v1588 = vld [vmem:[%s1 + $0x2c0] sm:$0xf]
        %v1589 = vld [vmem:[%s1 + $0x2c4] sm:$0xf]
        %v1590 = vld [vmem:[%s1 + $0x2c8] sm:$0xf]
        %v1591 = vld [vmem:[%s1 + $0x2cc] sm:$0xf]
        %v1592 = vld [vmem:[%s1 + $0x2d0] sm:$0xf]
        %v1593 = vld [vmem:[%s1 + $0x2d4] sm:$0xf]
        %v1594 = vld [vmem:[%s1 + $0x2d8] sm:$0xf]
        %v1595 = vld [vmem:[%s1 + $0x2dc] sm:$0xf]
        %v1596 = vld [vmem:[%s1 + $0x2e0] sm:$0xf]
        %v1597 = vld [vmem:[%s1 + $0x2e4] sm:$0xf]
        %v1598 = vld [vmem:[%s1 + $0x2e8] sm:$0xf]
        %v1599 = vld [vmem:[%s1 + $0x2ec] sm:$0xf]
        %v1600 = vld [vmem:[%s1 + $0x2f0] sm:$0xf]
        %v1601 = vld [vmem:[%s1 + $0x2f4] sm:$0xf]
        %v1602 = vld [vmem:[%s1 + $0x2f8] sm:$0xf]
        %v1603 = vld [vmem:[%s1 + $0x2fc] sm:$0xf]
        %v1604 = vld [vmem:[%s1 + $0x300] sm:$0xf]
        %v1605 = vld [vmem:[%s1 + $0x304] sm:$0xf]
        %v1606 = vld [vmem:[%s1 + $0x308] sm:$0xf]
        %v1607 = vld [vmem:[%s1 + $0x30c] sm:$0xf]
        %v1608 = vld [vmem:[%s1 + $0x310] sm:$0xf]
        %v1609 = vld [vmem:[%s1 + $0x314] sm:$0xf]
        %v1610 = vld [vmem:[%s1 + $0x318] sm:$0xf]
        %v1611 = vld [vmem:[%s1 + $0x31c] sm:$0xf]
        %v1612 = vld [vmem:[%s1 + $0x320] sm:$0xf]
        %v1613 = vld [vmem:[%s1 + $0x324] sm:$0xf]
        %v1614 = vld [vmem:[%s1 + $0x328] sm:$0xf]
        %v1615 = vld [vmem:[%s1 + $0x32c] sm:$0xf]
        %v1616 = vld [vmem:[%s1 + $0x330] sm:$0xf]
        %v1617 = vld [vmem:[%s1 + $0x334] sm:$0xf]
        %v1618 = vld [vmem:[%s1 + $0x338] sm:$0xf]
        %v1619 = vld [vmem:[%s1 + $0x33c] sm:$0xf]
        %v1620 = vld [vmem:[%s1 + $0x340] sm:$0xf]
        %v1621 = vld [vmem:[%s1 + $0x344] sm:$0xf]
        %v1622 = vld [vmem:[%s1 + $0x348] sm:$0xf]
        %v1623 = vld [vmem:[%s1 + $0x34c] sm:$0xf]
        %v1624 = vld [vmem:[%s1 + $0x350] sm:$0xf]
        %v1625 = vld [vmem:[%s1 + $0x354] sm:$0xf]
        %v1626 = vld [vmem:[%s1 + $0x358] sm:$0xf]
        %v1627 = vld [vmem:[%s1 + $0x35c] sm:$0xf]
        %v1628 = vld [vmem:[%s1 + $0x360] sm:$0xf]
        %v1629 = vld [vmem:[%s1 + $0x364] sm:$0xf]
        %v1630 = vld [vmem:[%s1 + $0x368] sm:$0xf]
        %v1631 = vld [vmem:[%s1 + $0x36c] sm:$0xf]
        %v1632 = vld [vmem:[%s1 + $0x370] sm:$0xf]
        %v1633 = vld [vmem:[%s1 + $0x374] sm:$0xf]
        %v1634 = vld [vmem:[%s1 + $0x378] sm:$0xf]
        %v1635 = vld [vmem:[%s1 + $0x37c] sm:$0xf]
        %v1636 = vld [vmem:[%s1 + $0x380] sm:$0xf]
        %v1637 = vld [vmem:[%s1 + $0x384] sm:$0xf]
        %v1638 = vld [vmem:[%s1 + $0x388] sm:$0xf]
        %v1639 = vld [vmem:[%s1 + $0x38c] sm:$0xf]
        %v1640 = vld [vmem:[%s1 + $0x390] sm:$0xf]
        %v1641 = vld [vmem:[%s1 + $0x394] sm:$0xf]
        %v1642 = vld [vmem:[%s1 + $0x398] sm:$0xf]
        %v1643 = vld [vmem:[%s1 + $0x39c] sm:$0xf]
        %v1644 = vld [vmem:[%s1 + $0x3a0] sm:$0xf]
        %v1645 = vld [vmem:[%s1 + $0x3a4] sm:$0xf]
        %v1646 = vld [vmem:[%s1 + $0x3a8] sm:$0xf]
        %v1647 = vld [vmem:[%s1 + $0x3ac] sm:$0xf]
        %v1648 = vld [vmem:[%s1 + $0x3b0] sm:$0xf]
        %v1649 = vld [vmem:[%s1 + $0x3b4] sm:$0xf]
        %v1650 = vld [vmem:[%s1 + $0x3b8] sm:$0xf]
        %v1651 = vld [vmem:[%s1 + $0x3bc] sm:$0xf]
        %v1652 = vld [vmem:[%s1 + $0x3c0] sm:$0xf]
        %v1653 = vld [vmem:[%s1 + $0x3c4] sm:$0xf]
        %v1654 = vld [vmem:[%s1 + $0x3c8] sm:$0xf]
        %v1655 = vld [vmem:[%s1 + $0x3cc] sm:$0xf]
        %v1656 = vld [vmem:[%s1 + $0x3d0] sm:$0xf]
        %v1657 = vld [vmem:[%s1 + $0x3d4] sm:$0xf]
        %v1658 = vld [vmem:[%s1 + $0x3d8] sm:$0xf]
        %v1659 = vld [vmem:[%s1 + $0x3dc] sm:$0xf]
        %v1660 = vld [vmem:[%s1 + $0x3e0] sm:$0xf]
        %v1661 = vld [vmem:[%s1 + $0x3e4] sm:$0xf]
        %v1662 = vld [vmem:[%s1 + $0x3e8] sm:$0xf]
        %v1663 = vld [vmem:[%s1 + $0x3ec] sm:$0xf]
        %v1664 = vld [vmem:[%s1 + $0x3f0] sm:$0xf]
        %v1665 = vld [vmem:[%s1 + $0x3f4] sm:$0xf]
        %v1666 = vld [vmem:[%s1 + $0x3f8] sm:$0xf]
        %v1667 = vld [vmem:[%s1 + $0x3fc] sm:$0xf]
        %v1668 = vld [vmem:[%s1 + $0x400] sm:$0xf]
        %v1669 = vld [vmem:[%s1 + $0x404] sm:$0xf]
        %v1670 = vld [vmem:[%s1 + $0x408] sm:$0xf]
        %v1671 = vld [vmem:[%s1 + $0x40c] sm:$0xf]
        %v1672 = vld [vmem:[%s1 + $0x410] sm:$0xf]
        %v1673 = vld [vmem:[%s1 + $0x414] sm:$0xf]
        %v1674 = vld [vmem:[%s1 + $0x418] sm:$0xf]
        %v1675 = vld [vmem:[%s1 + $0x41c] sm:$0xf]
        %v1676 = vld [vmem:[%s1 + $0x420] sm:$0xf]
        %v1677 = vld [vmem:[%s1 + $0x424] sm:$0xf]
        %v1678 = vld [vmem:[%s1 + $0x428] sm:$0xf]
        %v1679 = vld [vmem:[%s1 + $0x42c] sm:$0xf]
        %v1680 = vld [vmem:[%s1 + $0x430] sm:$0xf]
        %v1681 = vld [vmem:[%s1 + $0x434] sm:$0xf]
        %v1682 = vld [vmem:[%s1 + $0x438] sm:$0xf]
        %v1683 = vld [vmem:[%s1 + $0x43c] sm:$0xf]
        %v1684 = vld [vmem:[%s1 + $0x440] sm:$0xf]
        %v1685 = vld [vmem:[%s1 + $0x444] sm:$0xf]
        %v1686 = vld [vmem:[%s1 + $0x448] sm:$0xf]
        %v1687 = vld [vmem:[%s1 + $0x44c] sm:$0xf]
        %v1688 = vld [vmem:[%s1 + $0x450] sm:$0xf]
        %v1689 = vld [vmem:[%s1 + $0x454] sm:$0xf]
        %v1690 = vld [vmem:[%s1 + $0x458] sm:$0xf]
        %v1691 = vld [vmem:[%s1 + $0x45c] sm:$0xf]
        %v1692 = vld [vmem:[%s1 + $0x460] sm:$0xf]
        %v1693 = vld [vmem:[%s1 + $0x464] sm:$0xf]
        %v1694 = vld [vmem:[%s1 + $0x468] sm:$0xf]
        %v1695 = vld [vmem:[%s1 + $0x46c] sm:$0xf]
        %v1696 = vld [vmem:[%s1 + $0x470] sm:$0xf]
        %v1697 = vld [vmem:[%s1 + $0x474] sm:$0xf]
        %v1698 = vld [vmem:[%s1 + $0x478] sm:$0xf]
        %v1699 = vld [vmem:[%s1 + $0x47c] sm:$0xf]
        %v1700 = vld [vmem:[%s1 + $0x480] sm:$0xf]
        %v1701 = vld [vmem:[%s1 + $0x484] sm:$0xf]
        %v1702 = vld [vmem:[%s1 + $0x488] sm:$0xf]
        %v1703 = vld [vmem:[%s1 + $0x48c] sm:$0xf]
        %v1704 = vld [vmem:[%s1 + $0x490] sm:$0xf]
        %v1705 = vld [vmem:[%s1 + $0x494] sm:$0xf]
        %v1706 = vld [vmem:[%s1 + $0x498] sm:$0xf]
        %v1707 = vld [vmem:[%s1 + $0x49c] sm:$0xf]
        %v1708 = vld [vmem:[%s1 + $0x4a0] sm:$0xf]
        %v1709 = vld [vmem:[%s1 + $0x4a4] sm:$0x7]
        %v1710 = vld [vmem:[%s2] sm:$0x1]
        %v1712 = vperm.slane %v1710, 0
        %v2012 = vunpack.c.l.b16 %v1412
        %v2013 = vunpack.c.l.b16 %v1413
        %v2014 = vunpack.c.l.b16 %v1414
        %v2015 = vunpack.c.l.b16 %v1415
        %v2016 = vunpack.c.l.b16 %v1416
        %v2017 = vunpack.c.l.b16 %v1417
        %v2018 = vunpack.c.l.b16 %v1418
        %v2019 = vunpack.c.l.b16 %v1419
        %v2020 = vunpack.c.l.b16 %v1420
        %v2021 = vunpack.c.l.b16 %v1421
        %v2022 = vunpack.c.l.b16 %v1422
        %v2023 = vunpack.c.l.b16 %v1423
        %v2024 = vunpack.c.l.b16 %v1424
        %v2025 = vunpack.c.l.b16 %v1425
        %v2026 = vunpack.c.l.b16 %v1426
        %v2027 = vunpack.c.l.b16 %v1427
        %v2028 = vunpack.c.l.b16 %v1428
        %v2029 = vunpack.c.l.b16 %v1429
        %v2030 = vunpack.c.l.b16 %v1430
        %v2031 = vunpack.c.l.b16 %v1431
        %v2032 = vunpack.c.l.b16 %v1432
        %v2033 = vunpack.c.l.b16 %v1433
        %v2034 = vunpack.c.l.b16 %v1434
        %v2035 = vunpack.c.l.b16 %v1435
        %v2036 = vunpack.c.l.b16 %v1436
        %v2037 = vunpack.c.l.b16 %v1437
        %v2038 = vunpack.c.l.b16 %v1438
        %v2039 = vunpack.c.l.b16 %v1439
        %v2040 = vunpack.c.l.b16 %v1440
        %v2041 = vunpack.c.l.b16 %v1441
        %v2042 = vunpack.c.l.b16 %v1442
        %v2043 = vunpack.c.l.b16 %v1443
        %v2044 = vunpack.c.l.b16 %v1444
        %v2045 = vunpack.c.l.b16 %v1445
        %v2046 = vunpack.c.l.b16 %v1446
        %v2047 = vunpack.c.l.b16 %v1447
        %v2048 = vunpack.c.l.b16 %v1448
        %v2049 = vunpack.c.l.b16 %v1449
        %v2050 = vunpack.c.l.b16 %v1450
        %v2051 = vunpack.c.l.b16 %v1451
        %v2052 = vunpack.c.l.b16 %v1452
        %v2053 = vunpack.c.l.b16 %v1453
        %v2054 = vunpack.c.l.b16 %v1454
        %v2055 = vunpack.c.l.b16 %v1455
        %v2056 = vunpack.c.l.b16 %v1456
        %v2057 = vunpack.c.l.b16 %v1457
        %v2058 = vunpack.c.l.b16 %v1458
        %v2059 = vunpack.c.l.b16 %v1459
        %v2060 = vunpack.c.l.b16 %v1460
        %v2061 = vunpack.c.l.b16 %v1461
        %v2062 = vunpack.c.l.b16 %v1462
        %v2063 = vunpack.c.l.b16 %v1463
        %v2064 = vunpack.c.l.b16 %v1464
        %v2065 = vunpack.c.l.b16 %v1465
        %v2066 = vunpack.c.l.b16 %v1466
        %v2067 = vunpack.c.l.b16 %v1467
        %v2068 = vunpack.c.l.b16 %v1468
        %v2069 = vunpack.c.l.b16 %v1469
        %v2070 = vunpack.c.l.b16 %v1470
        %v2071 = vunpack.c.l.b16 %v1471
        %v2072 = vunpack.c.l.b16 %v1472
        %v2073 = vunpack.c.l.b16 %v1473
        %v2074 = vunpack.c.l.b16 %v1474
        %v2075 = vunpack.c.l.b16 %v1475
        %v2076 = vunpack.c.l.b16 %v1476
        %v2077 = vunpack.c.l.b16 %v1477
        %v2078 = vunpack.c.l.b16 %v1478
        %v2079 = vunpack.c.l.b16 %v1479
        %v2080 = vunpack.c.l.b16 %v1480
        %v2081 = vunpack.c.l.b16 %v1481
        %v2082 = vunpack.c.l.b16 %v1482
        %v2083 = vunpack.c.l.b16 %v1483
        %v2084 = vunpack.c.l.b16 %v1484
        %v2085 = vunpack.c.l.b16 %v1485
        %v2086 = vunpack.c.l.b16 %v1486
        %v2087 = vunpack.c.l.b16 %v1487
        %v2088 = vunpack.c.l.b16 %v1488
        %v2089 = vunpack.c.l.b16 %v1489
        %v2090 = vunpack.c.l.b16 %v1490
        %v2091 = vunpack.c.l.b16 %v1491
        %v2092 = vunpack.c.l.b16 %v1492
        %v2093 = vunpack.c.l.b16 %v1493
        %v2094 = vunpack.c.l.b16 %v1494
        %v2095 = vunpack.c.l.b16 %v1495
        %v2096 = vunpack.c.l.b16 %v1496
        %v2097 = vunpack.c.l.b16 %v1497
        %v2098 = vunpack.c.l.b16 %v1498
        %v2099 = vunpack.c.l.b16 %v1499
        %v2100 = vunpack.c.l.b16 %v1500
        %v2101 = vunpack.c.l.b16 %v1501
        %v2102 = vunpack.c.l.b16 %v1502
        %v2103 = vunpack.c.l.b16 %v1503
        %v2104 = vunpack.c.l.b16 %v1504
        %v2105 = vunpack.c.l.b16 %v1505
        %v2106 = vunpack.c.l.b16 %v1506
        %v2107 = vunpack.c.l.b16 %v1507
        %v2108 = vunpack.c.l.b16 %v1508
        %v2109 = vunpack.c.l.b16 %v1509
        %v2110 = vunpack.c.l.b16 %v1510
        %v2111 = vunpack.c.l.b16 %v1511
        %v2112 = vunpack.c.l.b16 %v1512
        %v2113 = vunpack.c.l.b16 %v1513
        %v2114 = vunpack.c.l.b16 %v1514
        %v2115 = vunpack.c.l.b16 %v1515
        %v2116 = vunpack.c.l.b16 %v1516
        %v2117 = vunpack.c.l.b16 %v1517
        %v2118 = vunpack.c.l.b16 %v1518
        %v2119 = vunpack.c.l.b16 %v1519
        %v2120 = vunpack.c.l.b16 %v1520
        %v2121 = vunpack.c.l.b16 %v1521
        %v2122 = vunpack.c.l.b16 %v1522
        %v2123 = vunpack.c.l.b16 %v1523
        %v2124 = vunpack.c.l.b16 %v1524
        %v2125 = vunpack.c.l.b16 %v1525
        %v2126 = vunpack.c.l.b16 %v1526
        %v2127 = vunpack.c.l.b16 %v1527
        %v2128 = vunpack.c.l.b16 %v1528
        %v2129 = vunpack.c.l.b16 %v1529
        %v2130 = vunpack.c.l.b16 %v1530
        %v2131 = vunpack.c.l.b16 %v1531
        %v2132 = vunpack.c.l.b16 %v1532
        %v2133 = vunpack.c.l.b16 %v1533
        %v2134 = vunpack.c.l.b16 %v1534
        %v2135 = vunpack.c.l.b16 %v1535
        %v2136 = vunpack.c.l.b16 %v1536
        %v2137 = vunpack.c.l.b16 %v1537
        %v2138 = vunpack.c.l.b16 %v1538
        %v2139 = vunpack.c.l.b16 %v1539
        %v2140 = vunpack.c.l.b16 %v1540
        %v2141 = vunpack.c.l.b16 %v1541
        %v2142 = vunpack.c.l.b16 %v1542
        %v2143 = vunpack.c.l.b16 %v1543
        %v2144 = vunpack.c.l.b16 %v1544
        %v2145 = vunpack.c.l.b16 %v1545
        %v2146 = vunpack.c.l.b16 %v1546
        %v2147 = vunpack.c.l.b16 %v1547
        %v2148 = vunpack.c.l.b16 %v1548
        %v2149 = vunpack.c.l.b16 %v1549
        %v2150 = vunpack.c.l.b16 %v1550
        %v2151 = vunpack.c.l.b16 %v1551
        %v2152 = vunpack.c.l.b16 %v1552
        %v2153 = vunpack.c.l.b16 %v1553
        %v2154 = vunpack.c.l.b16 %v1554
        %v2155 = vunpack.c.l.b16 %v1555
        %v2156 = vunpack.c.l.b16 %v1556
        %v2157 = vunpack.c.l.b16 %v1557
        %v2158 = vunpack.c.l.b16 %v1558
        %v2159 = vunpack.c.l.b16 %v1559
        %v2160 = vunpack.c.l.b16 %v1560
        %v2161 = vunpack.c.l.b16 %v1561
        %v2162 = vunpack.c.l.b16 %v1562
        %v2163 = vunpack.c.l.b16 %v1563
        %v2164 = vunpack.c.l.b16 %v1564
        %v2165 = vunpack.c.l.b16 %v1565
        %v2166 = vunpack.c.l.b16 %v1566
        %v2167 = vunpack.c.l.b16 %v1567
        %v2168 = vunpack.c.l.b16 %v1568
        %v2169 = vunpack.c.l.b16 %v1569
        %v2170 = vunpack.c.l.b16 %v1570
        %v2171 = vunpack.c.l.b16 %v1571
        %v2172 = vunpack.c.l.b16 %v1572
        %v2173 = vunpack.c.l.b16 %v1573
        %v2174 = vunpack.c.l.b16 %v1574
        %v2175 = vunpack.c.l.b16 %v1575
        %v2176 = vunpack.c.l.b16 %v1576
        %v2177 = vunpack.c.l.b16 %v1577
        %v2178 = vunpack.c.l.b16 %v1578
        %v2179 = vunpack.c.l.b16 %v1579
        %v2180 = vunpack.c.l.b16 %v1580
        %v2181 = vunpack.c.l.b16 %v1581
        %v2182 = vunpack.c.l.b16 %v1582
        %v2183 = vunpack.c.l.b16 %v1583
        %v2184 = vunpack.c.l.b16 %v1584
        %v2185 = vunpack.c.l.b16 %v1585
        %v2186 = vunpack.c.l.b16 %v1586
        %v2187 = vunpack.c.l.b16 %v1587
        %v2188 = vunpack.c.l.b16 %v1588
        %v2189 = vunpack.c.l.b16 %v1589
        %v2190 = vunpack.c.l.b16 %v1590
        %v2191 = vunpack.c.l.b16 %v1591
        %v2192 = vunpack.c.l.b16 %v1592
        %v2193 = vunpack.c.l.b16 %v1593
        %v2194 = vunpack.c.l.b16 %v1594
        %v2195 = vunpack.c.l.b16 %v1595
        %v2196 = vunpack.c.l.b16 %v1596
        %v2197 = vunpack.c.l.b16 %v1597
        %v2198 = vunpack.c.l.b16 %v1598
        %v2199 = vunpack.c.l.b16 %v1599
        %v2200 = vunpack.c.l.b16 %v1600
        %v2201 = vunpack.c.l.b16 %v1601
        %v2202 = vunpack.c.l.b16 %v1602
        %v2203 = vunpack.c.l.b16 %v1603
        %v2204 = vunpack.c.l.b16 %v1604
        %v2205 = vunpack.c.l.b16 %v1605
        %v2206 = vunpack.c.l.b16 %v1606
        %v2207 = vunpack.c.l.b16 %v1607
        %v2208 = vunpack.c.l.b16 %v1608
        %v2209 = vunpack.c.l.b16 %v1609
        %v2210 = vunpack.c.l.b16 %v1610
        %v2211 = vunpack.c.l.b16 %v1611
        %v2212 = vunpack.c.l.b16 %v1612
        %v2213 = vunpack.c.l.b16 %v1613
        %v2214 = vunpack.c.l.b16 %v1614
        %v2215 = vunpack.c.l.b16 %v1615
        %v2216 = vunpack.c.l.b16 %v1616
        %v2217 = vunpack.c.l.b16 %v1617
        %v2218 = vunpack.c.l.b16 %v1618
        %v2219 = vunpack.c.l.b16 %v1619
        %v2220 = vunpack.c.l.b16 %v1620
        %v2221 = vunpack.c.l.b16 %v1621
        %v2222 = vunpack.c.l.b16 %v1622
        %v2223 = vunpack.c.l.b16 %v1623
        %v2224 = vunpack.c.l.b16 %v1624
        %v2225 = vunpack.c.l.b16 %v1625
        %v2226 = vunpack.c.l.b16 %v1626
        %v2227 = vunpack.c.l.b16 %v1627
        %v2228 = vunpack.c.l.b16 %v1628
        %v2229 = vunpack.c.l.b16 %v1629
        %v2230 = vunpack.c.l.b16 %v1630
        %v2231 = vunpack.c.l.b16 %v1631
        %v2232 = vunpack.c.l.b16 %v1632
        %v2233 = vunpack.c.l.b16 %v1633
        %v2234 = vunpack.c.l.b16 %v1634
        %v2235 = vunpack.c.l.b16 %v1635
        %v2236 = vunpack.c.l.b16 %v1636
        %v2237 = vunpack.c.l.b16 %v1637
        %v2238 = vunpack.c.l.b16 %v1638
        %v2239 = vunpack.c.l.b16 %v1639
        %v2240 = vunpack.c.l.b16 %v1640
        %v2241 = vunpack.c.l.b16 %v1641
        %v2242 = vunpack.c.l.b16 %v1642
        %v2243 = vunpack.c.l.b16 %v1643
        %v2244 = vunpack.c.l.b16 %v1644
        %v2245 = vunpack.c.l.b16 %v1645
        %v2246 = vunpack.c.l.b16 %v1646
        %v2247 = vunpack.c.l.b16 %v1647
        %v2248 = vunpack.c.l.b16 %v1648
        %v2249 = vunpack.c.l.b16 %v1649
        %v2250 = vunpack.c.l.b16 %v1650
        %v2251 = vunpack.c.l.b16 %v1651
        %v2252 = vunpack.c.l.b16 %v1652
        %v2253 = vunpack.c.l.b16 %v1653
        %v2254 = vunpack.c.l.b16 %v1654
        %v2255 = vunpack.c.l.b16 %v1655
        %v2256 = vunpack.c.l.b16 %v1656
        %v2257 = vunpack.c.l.b16 %v1657
        %v2258 = vunpack.c.l.b16 %v1658
        %v2259 = vunpack.c.l.b16 %v1659
        %v2260 = vunpack.c.l.b16 %v1660
        %v2261 = vunpack.c.l.b16 %v1661
        %v2262 = vunpack.c.l.b16 %v1662
        %v2263 = vunpack.c.l.b16 %v1663
        %v2264 = vunpack.c.l.b16 %v1664
        %v2265 = vunpack.c.l.b16 %v1665
        %v2266 = vunpack.c.l.b16 %v1666
        %v2267 = vunpack.c.l.b16 %v1667
        %v2268 = vunpack.c.l.b16 %v1668
        %v2269 = vunpack.c.l.b16 %v1669
        %v2270 = vunpack.c.l.b16 %v1670
        %v2271 = vunpack.c.l.b16 %v1671
        %v2272 = vunpack.c.l.b16 %v1672
        %v2273 = vunpack.c.l.b16 %v1673
        %v2274 = vunpack.c.l.b16 %v1674
        %v2275 = vunpack.c.l.b16 %v1675
        %v2276 = vunpack.c.l.b16 %v1676
        %v2277 = vunpack.c.l.b16 %v1677
        %v2278 = vunpack.c.l.b16 %v1678
        %v2279 = vunpack.c.l.b16 %v1679
        %v2280 = vunpack.c.l.b16 %v1680
        %v2281 = vunpack.c.l.b16 %v1681
        %v2282 = vunpack.c.l.b16 %v1682
        %v2283 = vunpack.c.l.b16 %v1683
        %v2284 = vunpack.c.l.b16 %v1684
        %v2285 = vunpack.c.l.b16 %v1685
        %v2286 = vunpack.c.l.b16 %v1686
        %v2287 = vunpack.c.l.b16 %v1687
        %v2288 = vunpack.c.l.b16 %v1688
        %v2289 = vunpack.c.l.b16 %v1689
        %v2290 = vunpack.c.l.b16 %v1690
        %v2291 = vunpack.c.l.b16 %v1691
        %v2292 = vunpack.c.l.b16 %v1692
        %v2293 = vunpack.c.l.b16 %v1693
        %v2294 = vunpack.c.l.b16 %v1694
        %v2295 = vunpack.c.l.b16 %v1695
        %v2296 = vunpack.c.l.b16 %v1696
        %v2297 = vunpack.c.l.b16 %v1697
        %v2298 = vunpack.c.l.b16 %v1698
        %v2299 = vunpack.c.l.b16 %v1699
        %v2300 = vunpack.c.l.b16 %v1700
        %v2301 = vunpack.c.l.b16 %v1701
        %v2302 = vunpack.c.l.b16 %v1702
        %v2303 = vunpack.c.l.b16 %v1703
        %v2304 = vunpack.c.l.b16 %v1704
        %v2305 = vunpack.c.l.b16 %v1705
        %v2306 = vunpack.c.l.b16 %v1706
        %v2307 = vunpack.c.l.b16 %v1707
        %v2308 = vunpack.c.l.b16 %v1708
        %v2309 = vunpack.c.l.b16 %v1709
        %v2310 = vpack.c.b16 %v2013, %v2012
        %v2311 = vpack.c.b16 %v2015, %v2014
        %v2312 = vpack.c.b16 %v2017, %v2016
        %v2313 = vpack.c.b16 %v2019, %v2018
        %v2314 = vpack.c.b16 %v2021, %v2020
        %v2315 = vpack.c.b16 %v2023, %v2022
        %v2316 = vpack.c.b16 %v2025, %v2024
        %v2317 = vpack.c.b16 %v2027, %v2026
        %v2318 = vpack.c.b16 %v2029, %v2028
        %v2319 = vpack.c.b16 %v2031, %v2030
        %v2320 = vpack.c.b16 %v2033, %v2032
        %v2321 = vpack.c.b16 %v2035, %v2034
        %v2322 = vpack.c.b16 %v2037, %v2036
        %v2323 = vpack.c.b16 %v2039, %v2038
        %v2324 = vpack.c.b16 %v2041, %v2040
        %v2325 = vpack.c.b16 %v2043, %v2042
        %v2326 = vpack.c.b16 %v2045, %v2044
        %v2327 = vpack.c.b16 %v2047, %v2046
        %v2328 = vpack.c.b16 %v2049, %v2048
        %v2329 = vpack.c.b16 %v2051, %v2050
        %v2330 = vpack.c.b16 %v2053, %v2052
        %v2331 = vpack.c.b16 %v2055, %v2054
        %v2332 = vpack.c.b16 %v2057, %v2056
        %v2333 = vpack.c.b16 %v2059, %v2058
        %v2334 = vpack.c.b16 %v2061, %v2060
        %v2335 = vpack.c.b16 %v2063, %v2062
        %v2336 = vpack.c.b16 %v2065, %v2064
        %v2337 = vpack.c.b16 %v2067, %v2066
        %v2338 = vpack.c.b16 %v2069, %v2068
        %v2339 = vpack.c.b16 %v2071, %v2070
        %v2340 = vpack.c.b16 %v2073, %v2072
        %v2341 = vpack.c.b16 %v2075, %v2074
        %v2342 = vpack.c.b16 %v2077, %v2076
        %v2343 = vpack.c.b16 %v2079, %v2078
        %v2344 = vpack.c.b16 %v2081, %v2080
        %v2345 = vpack.c.b16 %v2083, %v2082
        %v2346 = vpack.c.b16 %v2085, %v2084
        %v2347 = vpack.c.b16 %v2087, %v2086
        %v2348 = vpack.c.b16 %v2089, %v2088
        %v2349 = vpack.c.b16 %v2091, %v2090
        %v2350 = vpack.c.b16 %v2093, %v2092
        %v2351 = vpack.c.b16 %v2095, %v2094
        %v2352 = vpack.c.b16 %v2097, %v2096
        %v2353 = vpack.c.b16 %v2099, %v2098
        %v2354 = vpack.c.b16 %v2101, %v2100
        %v2355 = vpack.c.b16 %v2103, %v2102
        %v2356 = vpack.c.b16 %v2105, %v2104
        %v2357 = vpack.c.b16 %v2107, %v2106
        %v2358 = vpack.c.b16 %v2109, %v2108
        %v2359 = vpack.c.b16 %v2111, %v2110
        %v2360 = vpack.c.b16 %v2113, %v2112
        %v2361 = vpack.c.b16 %v2115, %v2114
        %v2362 = vpack.c.b16 %v2117, %v2116
        %v2363 = vpack.c.b16 %v2119, %v2118
        %v2364 = vpack.c.b16 %v2121, %v2120
        %v2365 = vpack.c.b16 %v2123, %v2122
        %v2366 = vpack.c.b16 %v2125, %v2124
        %v2367 = vpack.c.b16 %v2127, %v2126
        %v2368 = vpack.c.b16 %v2129, %v2128
        %v2369 = vpack.c.b16 %v2131, %v2130
        %v2370 = vpack.c.b16 %v2133, %v2132
        %v2371 = vpack.c.b16 %v2135, %v2134
        %v2372 = vpack.c.b16 %v2137, %v2136
        %v2373 = vpack.c.b16 %v2139, %v2138
        %v2374 = vpack.c.b16 %v2141, %v2140
        %v2375 = vpack.c.b16 %v2143, %v2142
        %v2376 = vpack.c.b16 %v2145, %v2144
        %v2377 = vpack.c.b16 %v2147, %v2146
        %v2378 = vpack.c.b16 %v2149, %v2148
        %v2379 = vpack.c.b16 %v2151, %v2150
        %v2380 = vpack.c.b16 %v2153, %v2152
        %v2381 = vpack.c.b16 %v2155, %v2154
        %v2382 = vpack.c.b16 %v2157, %v2156
        %v2383 = vpack.c.b16 %v2159, %v2158
        %v2384 = vpack.c.b16 %v2161, %v2160
        %v2385 = vpack.c.b16 %v2163, %v2162
        %v2386 = vpack.c.b16 %v2165, %v2164
        %v2387 = vpack.c.b16 %v2167, %v2166
        %v2388 = vpack.c.b16 %v2169, %v2168
        %v2389 = vpack.c.b16 %v2171, %v2170
        %v2390 = vpack.c.b16 %v2173, %v2172
        %v2391 = vpack.c.b16 %v2175, %v2174
        %v2392 = vpack.c.b16 %v2177, %v2176
        %v2393 = vpack.c.b16 %v2179, %v2178
        %v2394 = vpack.c.b16 %v2181, %v2180
        %v2395 = vpack.c.b16 %v2183, %v2182
        %v2396 = vpack.c.b16 %v2185, %v2184
        %v2397 = vpack.c.b16 %v2187, %v2186
        %v2398 = vpack.c.b16 %v2189, %v2188
        %v2399 = vpack.c.b16 %v2191, %v2190
        %v2400 = vpack.c.b16 %v2193, %v2192
        %v2401 = vpack.c.b16 %v2195, %v2194
        %v2402 = vpack.c.b16 %v2197, %v2196
        %v2403 = vpack.c.b16 %v2199, %v2198
        %v2404 = vpack.c.b16 %v2201, %v2200
        %v2405 = vpack.c.b16 %v2203, %v2202
        %v2406 = vpack.c.b16 %v2205, %v2204
        %v2407 = vpack.c.b16 %v2207, %v2206
        %v2408 = vpack.c.b16 %v2209, %v2208
        %v2409 = vpack.c.b16 %v2211, %v2210
        %v2410 = vpack.c.b16 %v2213, %v2212
        %v2411 = vpack.c.b16 %v2215, %v2214
        %v2412 = vpack.c.b16 %v2217, %v2216
        %v2413 = vpack.c.b16 %v2219, %v2218
        %v2414 = vpack.c.b16 %v2221, %v2220
        %v2415 = vpack.c.b16 %v2223, %v2222
        %v2416 = vpack.c.b16 %v2225, %v2224
        %v2417 = vpack.c.b16 %v2227, %v2226
        %v2418 = vpack.c.b16 %v2229, %v2228
        %v2419 = vpack.c.b16 %v2231, %v2230
        %v2420 = vpack.c.b16 %v2233, %v2232
        %v2421 = vpack.c.b16 %v2235, %v2234
        %v2422 = vpack.c.b16 %v2237, %v2236
        %v2423 = vpack.c.b16 %v2239, %v2238
        %v2424 = vpack.c.b16 %v2241, %v2240
        %v2425 = vpack.c.b16 %v2243, %v2242
        %v2426 = vpack.c.b16 %v2245, %v2244
        %v2427 = vpack.c.b16 %v2247, %v2246
        %v2428 = vpack.c.b16 %v2249, %v2248
        %v2429 = vpack.c.b16 %v2251, %v2250
        %v2430 = vpack.c.b16 %v2253, %v2252
        %v2431 = vpack.c.b16 %v2255, %v2254
        %v2432 = vpack.c.b16 %v2257, %v2256
        %v2433 = vpack.c.b16 %v2259, %v2258
        %v2434 = vpack.c.b16 %v2261, %v2260
        %v2435 = vpack.c.b16 %v2263, %v2262
        %v2436 = vpack.c.b16 %v2265, %v2264
        %v2437 = vpack.c.b16 %v2267, %v2266
        %v2438 = vpack.c.b16 %v2269, %v2268
        %v2439 = vpack.c.b16 %v2271, %v2270
        %v2440 = vpack.c.b16 %v2273, %v2272
        %v2441 = vpack.c.b16 %v2275, %v2274
        %v2442 = vpack.c.b16 %v2277, %v2276
        %v2443 = vpack.c.b16 %v2279, %v2278
        %v2444 = vpack.c.b16 %v2281, %v2280
        %v2445 = vpack.c.b16 %v2283, %v2282
        %v2446 = vpack.c.b16 %v2285, %v2284
        %v2447 = vpack.c.b16 %v2287, %v2286
        %v2448 = vpack.c.b16 %v2289, %v2288
        %v2449 = vpack.c.b16 %v2291, %v2290
        %v2450 = vpack.c.b16 %v2293, %v2292
        %v2451 = vpack.c.b16 %v2295, %v2294
        %v2452 = vpack.c.b16 %v2297, %v2296
        %v2453 = vpack.c.b16 %v2299, %v2298
        %v2454 = vpack.c.b16 %v2301, %v2300
        %v2455 = vpack.c.b16 %v2303, %v2302
        %v2456 = vpack.c.b16 %v2305, %v2304
        %v2457 = vpack.c.b16 %v2307, %v2306
        %v2458 = vpack.c.b16 %v2309, %v2308
        %vm2607 = vcmask 629760
        %v2609 = vsel %vm2607, %v1126, 0
        %v2612 = vsel %vm2607, %v1145, 0
        %v2615 = vsel %vm2607, %v1164, 0
        %v2618 = vsel %vm2607, %v1183, 0
        %v2621 = vsel %vm2607, %v1202, 0
        %v2624 = vsel %vm2607, %v1221, 0
        %v2627 = vsel %vm2607, %v1240, 0
        %v2630 = vsel %vm2607, %v1259, 0
        %v2633 = vsel %vm2607, %v1278, 0
        %v2636 = vsel %vm2607, %v1297, 0
        %v2639 = vsel %vm2607, %v1316, 0
        %v2642 = vsel %vm2607, %v1335, 0
        %v2645 = vsel %vm2607, %v1354, 0
        %v2648 = vsel %vm2607, %v1373, 0
        %v2651 = vsel %vm2607, %v1392, 0
        %v2654 = vsel %vm2607, %v1411, 0
        %vm2656 = vcmask 1045504
        %vm2657 = vcmask 1046528
        %v2658 = vsel %vm2656, 4294967295, 65535
        %v2659 = vsel %vm2657, %v2658, 0
        %v2661 = vand.u32 %v2458, %v2659
        %2663 = vmatpush.bf16.msra.mxu0 %v2317
        %2664 = vmatpush.bf16.msra.mxu0 %v2316
        %2665 = vmatpush.bf16.msra.mxu0 %v2315
        %2666 = vmatpush.bf16.msra.mxu0 %v2314
        %2667 = vmatpush.bf16.msra.mxu0 %v2313
        %2668 = vmatpush.bf16.msra.mxu0 %v2312
        %2669 = vmatpush.bf16.msra.mxu0 %v2311
        %2670 = vmatpush.bf16.msra.mxu0 %v2310
        %2671 = vmatmul.bf16.gmra.mxu0 %v1108
        %v2672 = vpop.f32.mrf.mxu0
        %v2673 = vadd.f32 %v1712, %v2672
        %v2674 = vpop.f32.mrf.mxu0
        %v2675 = vadd.f32 %v1712, %v2674
        %2676 = vmatmul.bf16.gmra.mxu0 %v1127
        %v2677 = vpop.f32.mrf.mxu0
        %v2678 = vadd.f32 %v1712, %v2677
        %v2679 = vpop.f32.mrf.mxu0
        %v2680 = vadd.f32 %v1712, %v2679
        %2681 = vmatmul.bf16.gmra.mxu0 %v1146
        %v2682 = vpop.f32.mrf.mxu0
        %v2683 = vadd.f32 %v1712, %v2682
        %v2684 = vpop.f32.mrf.mxu0
        %v2685 = vadd.f32 %v1712, %v2684
        %2686 = vmatmul.bf16.gmra.mxu0 %v1165
        %v2687 = vpop.f32.mrf.mxu0
        %v2688 = vadd.f32 %v1712, %v2687
        %v2689 = vpop.f32.mrf.mxu0
        %v2690 = vadd.f32 %v1712, %v2689
        %2691 = vmatmul.bf16.gmra.mxu0 %v1184
        %v2692 = vpop.f32.mrf.mxu0
        %v2693 = vadd.f32 %v1712, %v2692
        %v2694 = vpop.f32.mrf.mxu0
        %v2695 = vadd.f32 %v1712, %v2694
        %2696 = vmatmul.bf16.gmra.mxu0 %v1203
        %v2697 = vpop.f32.mrf.mxu0
        %v2698 = vadd.f32 %v1712, %v2697
        %v2699 = vpop.f32.mrf.mxu0
        %v2700 = vadd.f32 %v1712, %v2699
        %2701 = vmatmul.bf16.gmra.mxu0 %v1222
        %v2702 = vpop.f32.mrf.mxu0
        %v2703 = vadd.f32 %v1712, %v2702
        %v2704 = vpop.f32.mrf.mxu0
        %v2705 = vadd.f32 %v1712, %v2704
        %2706 = vmatmul.bf16.gmra.mxu0 %v1241
        %v2707 = vpop.f32.mrf.mxu0
        %v2708 = vadd.f32 %v1712, %v2707
        %v2709 = vpop.f32.mrf.mxu0
        %v2710 = vadd.f32 %v1712, %v2709
        %2711 = vmatmul.bf16.gmra.mxu0 %v1260
        %v2712 = vpop.f32.mrf.mxu0
        %v2713 = vadd.f32 %v1712, %v2712
        %v2714 = vpop.f32.mrf.mxu0
        %v2715 = vadd.f32 %v1712, %v2714
        %2716 = vmatmul.bf16.gmra.mxu0 %v1279
        %v2717 = vpop.f32.mrf.mxu0
        %v2718 = vadd.f32 %v1712, %v2717
        %v2719 = vpop.f32.mrf.mxu0
        %v2720 = vadd.f32 %v1712, %v2719
        %2721 = vmatmul.bf16.gmra.mxu0 %v1298
        %v2722 = vpop.f32.mrf.mxu0
        %v2723 = vadd.f32 %v1712, %v2722
        %v2724 = vpop.f32.mrf.mxu0
        %v2725 = vadd.f32 %v1712, %v2724
        %2726 = vmatmul.bf16.gmra.mxu0 %v1317
        %v2727 = vpop.f32.mrf.mxu0
        %v2728 = vadd.f32 %v1712, %v2727
        %v2729 = vpop.f32.mrf.mxu0
        %v2730 = vadd.f32 %v1712, %v2729
        %2731 = vmatmul.bf16.gmra.mxu0 %v1336
        %v2732 = vpop.f32.mrf.mxu0
        %v2733 = vadd.f32 %v1712, %v2732
        %v2734 = vpop.f32.mrf.mxu0
        %v2735 = vadd.f32 %v1712, %v2734
        %2736 = vmatmul.bf16.gmra.mxu0 %v1355
        %v2737 = vpop.f32.mrf.mxu0
        %v2738 = vadd.f32 %v1712, %v2737
        %v2739 = vpop.f32.mrf.mxu0
        %v2740 = vadd.f32 %v1712, %v2739
        %2741 = vmatmul.bf16.gmra.mxu0 %v1374
        %v2742 = vpop.f32.mrf.mxu0
        %v2743 = vadd.f32 %v1712, %v2742
        %v2744 = vpop.f32.mrf.mxu0
        %v2745 = vadd.f32 %v1712, %v2744
        %2746 = vmatmul.bf16.gmra.mxu0 %v1393
        %v2747 = vpop.f32.mrf.mxu0
        %v2748 = vadd.f32 %v1712, %v2747
        %v2749 = vpop.f32.mrf.mxu0
        %v2750 = vadd.f32 %v1712, %v2749
        %2751 = vdwg.mxu0
        %2752 = vmatpush.bf16.msra.mxu0 %v2325
        %2753 = vmatpush.bf16.msra.mxu0 %v2324
        %2754 = vmatpush.bf16.msra.mxu0 %v2323
        %2755 = vmatpush.bf16.msra.mxu0 %v2322
        %2756 = vmatpush.bf16.msra.mxu0 %v2321
        %2757 = vmatpush.bf16.msra.mxu0 %v2320
        %2758 = vmatpush.bf16.msra.mxu0 %v2319
        %2759 = vmatpush.bf16.msra.mxu0 %v2318
        %2760 = vmatmul.bf16.gmra.mxu0 %v1109
        %v2761 = vpop.f32.mrf.mxu0
        %v2762 = vadd.f32 %v2673, %v2761
        %v2763 = vpop.f32.mrf.mxu0
        %v2764 = vadd.f32 %v2675, %v2763
        %2765 = vmatmul.bf16.gmra.mxu0 %v1128
        %v2766 = vpop.f32.mrf.mxu0
        %v2767 = vadd.f32 %v2678, %v2766
        %v2768 = vpop.f32.mrf.mxu0
        %v2769 = vadd.f32 %v2680, %v2768
        %2770 = vmatmul.bf16.gmra.mxu0 %v1147
        %v2771 = vpop.f32.mrf.mxu0
        %v2772 = vadd.f32 %v2683, %v2771
        %v2773 = vpop.f32.mrf.mxu0
        %v2774 = vadd.f32 %v2685, %v2773
        %2775 = vmatmul.bf16.gmra.mxu0 %v1166
        %v2776 = vpop.f32.mrf.mxu0
        %v2777 = vadd.f32 %v2688, %v2776
        %v2778 = vpop.f32.mrf.mxu0
        %v2779 = vadd.f32 %v2690, %v2778
        %2780 = vmatmul.bf16.gmra.mxu0 %v1185
        %v2781 = vpop.f32.mrf.mxu0
        %v2782 = vadd.f32 %v2693, %v2781
        %v2783 = vpop.f32.mrf.mxu0
        %v2784 = vadd.f32 %v2695, %v2783
        %2785 = vmatmul.bf16.gmra.mxu0 %v1204
        %v2786 = vpop.f32.mrf.mxu0
        %v2787 = vadd.f32 %v2698, %v2786
        %v2788 = vpop.f32.mrf.mxu0
        %v2789 = vadd.f32 %v2700, %v2788
        %2790 = vmatmul.bf16.gmra.mxu0 %v1223
        %v2791 = vpop.f32.mrf.mxu0
        %v2792 = vadd.f32 %v2703, %v2791
        %v2793 = vpop.f32.mrf.mxu0
        %v2794 = vadd.f32 %v2705, %v2793
        %2795 = vmatmul.bf16.gmra.mxu0 %v1242
        %v2796 = vpop.f32.mrf.mxu0
        %v2797 = vadd.f32 %v2708, %v2796
        %v2798 = vpop.f32.mrf.mxu0
        %v2799 = vadd.f32 %v2710, %v2798
        %2800 = vmatmul.bf16.gmra.mxu0 %v1261
        %v2801 = vpop.f32.mrf.mxu0
        %v2802 = vadd.f32 %v2713, %v2801
        %v2803 = vpop.f32.mrf.mxu0
        %v2804 = vadd.f32 %v2715, %v2803
        %2805 = vmatmul.bf16.gmra.mxu0 %v1280
        %v2806 = vpop.f32.mrf.mxu0
        %v2807 = vadd.f32 %v2718, %v2806
        %v2808 = vpop.f32.mrf.mxu0
        %v2809 = vadd.f32 %v2720, %v2808
        %2810 = vmatmul.bf16.gmra.mxu0 %v1299
        %v2811 = vpop.f32.mrf.mxu0
        %v2812 = vadd.f32 %v2723, %v2811
        %v2813 = vpop.f32.mrf.mxu0
        %v2814 = vadd.f32 %v2725, %v2813
        %2815 = vmatmul.bf16.gmra.mxu0 %v1318
        %v2816 = vpop.f32.mrf.mxu0
        %v2817 = vadd.f32 %v2728, %v2816
        %v2818 = vpop.f32.mrf.mxu0
        %v2819 = vadd.f32 %v2730, %v2818
        %2820 = vmatmul.bf16.gmra.mxu0 %v1337
        %v2821 = vpop.f32.mrf.mxu0
        %v2822 = vadd.f32 %v2733, %v2821
        %v2823 = vpop.f32.mrf.mxu0
        %v2824 = vadd.f32 %v2735, %v2823
        %2825 = vmatmul.bf16.gmra.mxu0 %v1356
        %v2826 = vpop.f32.mrf.mxu0
        %v2827 = vadd.f32 %v2738, %v2826
        %v2828 = vpop.f32.mrf.mxu0
        %v2829 = vadd.f32 %v2740, %v2828
        %2830 = vmatmul.bf16.gmra.mxu0 %v1375
        %v2831 = vpop.f32.mrf.mxu0
        %v2832 = vadd.f32 %v2743, %v2831
        %v2833 = vpop.f32.mrf.mxu0
        %v2834 = vadd.f32 %v2745, %v2833
        %2835 = vmatmul.bf16.gmra.mxu0 %v1394
        %v2836 = vpop.f32.mrf.mxu0
        %v2837 = vadd.f32 %v2748, %v2836
        %v2838 = vpop.f32.mrf.mxu0
        %v2839 = vadd.f32 %v2750, %v2838
        %2840 = vdwg.mxu0
        %2841 = vmatpush.bf16.msra.mxu0 %v2333
        %2842 = vmatpush.bf16.msra.mxu0 %v2332
        %2843 = vmatpush.bf16.msra.mxu0 %v2331
        %2844 = vmatpush.bf16.msra.mxu0 %v2330
        %2845 = vmatpush.bf16.msra.mxu0 %v2329
        %2846 = vmatpush.bf16.msra.mxu0 %v2328
        %2847 = vmatpush.bf16.msra.mxu0 %v2327
        %2848 = vmatpush.bf16.msra.mxu0 %v2326
        %2849 = vmatmul.bf16.gmra.mxu0 %v1110
        %v2850 = vpop.f32.mrf.mxu0
        %v2851 = vadd.f32 %v2762, %v2850
        %v2852 = vpop.f32.mrf.mxu0
        %v2853 = vadd.f32 %v2764, %v2852
        %2854 = vmatmul.bf16.gmra.mxu0 %v1129
        %v2855 = vpop.f32.mrf.mxu0
        %v2856 = vadd.f32 %v2767, %v2855
        %v2857 = vpop.f32.mrf.mxu0
        %v2858 = vadd.f32 %v2769, %v2857
        %2859 = vmatmul.bf16.gmra.mxu0 %v1148
        %v2860 = vpop.f32.mrf.mxu0
        %v2861 = vadd.f32 %v2772, %v2860
        %v2862 = vpop.f32.mrf.mxu0
        %v2863 = vadd.f32 %v2774, %v2862
        %2864 = vmatmul.bf16.gmra.mxu0 %v1167
        %v2865 = vpop.f32.mrf.mxu0
        %v2866 = vadd.f32 %v2777, %v2865
        %v2867 = vpop.f32.mrf.mxu0
        %v2868 = vadd.f32 %v2779, %v2867
        %2869 = vmatmul.bf16.gmra.mxu0 %v1186
        %v2870 = vpop.f32.mrf.mxu0
        %v2871 = vadd.f32 %v2782, %v2870
        %v2872 = vpop.f32.mrf.mxu0
        %v2873 = vadd.f32 %v2784, %v2872
        %2874 = vmatmul.bf16.gmra.mxu0 %v1205
        %v2875 = vpop.f32.mrf.mxu0
        %v2876 = vadd.f32 %v2787, %v2875
        %v2877 = vpop.f32.mrf.mxu0
        %v2878 = vadd.f32 %v2789, %v2877
        %2879 = vmatmul.bf16.gmra.mxu0 %v1224
        %v2880 = vpop.f32.mrf.mxu0
        %v2881 = vadd.f32 %v2792, %v2880
        %v2882 = vpop.f32.mrf.mxu0
        %v2883 = vadd.f32 %v2794, %v2882
        %2884 = vmatmul.bf16.gmra.mxu0 %v1243
        %v2885 = vpop.f32.mrf.mxu0
        %v2886 = vadd.f32 %v2797, %v2885
        %v2887 = vpop.f32.mrf.mxu0
        %v2888 = vadd.f32 %v2799, %v2887
        %2889 = vmatmul.bf16.gmra.mxu0 %v1262
        %v2890 = vpop.f32.mrf.mxu0
        %v2891 = vadd.f32 %v2802, %v2890
        %v2892 = vpop.f32.mrf.mxu0
        %v2893 = vadd.f32 %v2804, %v2892
        %2894 = vmatmul.bf16.gmra.mxu0 %v1281
        %v2895 = vpop.f32.mrf.mxu0
        %v2896 = vadd.f32 %v2807, %v2895
        %v2897 = vpop.f32.mrf.mxu0
        %v2898 = vadd.f32 %v2809, %v2897
        %2899 = vmatmul.bf16.gmra.mxu0 %v1300
        %v2900 = vpop.f32.mrf.mxu0
        %v2901 = vadd.f32 %v2812, %v2900
        %v2902 = vpop.f32.mrf.mxu0
        %v2903 = vadd.f32 %v2814, %v2902
        %2904 = vmatmul.bf16.gmra.mxu0 %v1319
        %v2905 = vpop.f32.mrf.mxu0
        %v2906 = vadd.f32 %v2817, %v2905
        %v2907 = vpop.f32.mrf.mxu0
        %v2908 = vadd.f32 %v2819, %v2907
        %2909 = vmatmul.bf16.gmra.mxu0 %v1338
        %v2910 = vpop.f32.mrf.mxu0
        %v2911 = vadd.f32 %v2822, %v2910
        %v2912 = vpop.f32.mrf.mxu0
        %v2913 = vadd.f32 %v2824, %v2912
        %2914 = vmatmul.bf16.gmra.mxu0 %v1357
        %v2915 = vpop.f32.mrf.mxu0
        %v2916 = vadd.f32 %v2827, %v2915
        %v2917 = vpop.f32.mrf.mxu0
        %v2918 = vadd.f32 %v2829, %v2917
        %2919 = vmatmul.bf16.gmra.mxu0 %v1376
        %v2920 = vpop.f32.mrf.mxu0
        %v2921 = vadd.f32 %v2832, %v2920
        %v2922 = vpop.f32.mrf.mxu0
        %v2923 = vadd.f32 %v2834, %v2922
        %2924 = vmatmul.bf16.gmra.mxu0 %v1395
        %v2925 = vpop.f32.mrf.mxu0
        %v2926 = vadd.f32 %v2837, %v2925
        %v2927 = vpop.f32.mrf.mxu0
        %v2928 = vadd.f32 %v2839, %v2927
        %2929 = vdwg.mxu0
        %2930 = vmatpush.bf16.msra.mxu0 %v2341
        %2931 = vmatpush.bf16.msra.mxu0 %v2340
        %2932 = vmatpush.bf16.msra.mxu0 %v2339
        %2933 = vmatpush.bf16.msra.mxu0 %v2338
        %2934 = vmatpush.bf16.msra.mxu0 %v2337
        %2935 = vmatpush.bf16.msra.mxu0 %v2336
        %2936 = vmatpush.bf16.msra.mxu0 %v2335
        %2937 = vmatpush.bf16.msra.mxu0 %v2334
        %2938 = vmatmul.bf16.gmra.mxu0 %v1111
        %v2939 = vpop.f32.mrf.mxu0
        %v2940 = vadd.f32 %v2851, %v2939
        %v2941 = vpop.f32.mrf.mxu0
        %v2942 = vadd.f32 %v2853, %v2941
        %2943 = vmatmul.bf16.gmra.mxu0 %v1130
        %v2944 = vpop.f32.mrf.mxu0
        %v2945 = vadd.f32 %v2856, %v2944
        %v2946 = vpop.f32.mrf.mxu0
        %v2947 = vadd.f32 %v2858, %v2946
        %2948 = vmatmul.bf16.gmra.mxu0 %v1149
        %v2949 = vpop.f32.mrf.mxu0
        %v2950 = vadd.f32 %v2861, %v2949
        %v2951 = vpop.f32.mrf.mxu0
        %v2952 = vadd.f32 %v2863, %v2951
        %2953 = vmatmul.bf16.gmra.mxu0 %v1168
        %v2954 = vpop.f32.mrf.mxu0
        %v2955 = vadd.f32 %v2866, %v2954
        %v2956 = vpop.f32.mrf.mxu0
        %v2957 = vadd.f32 %v2868, %v2956
        %2958 = vmatmul.bf16.gmra.mxu0 %v1187
        %v2959 = vpop.f32.mrf.mxu0
        %v2960 = vadd.f32 %v2871, %v2959
        %v2961 = vpop.f32.mrf.mxu0
        %v2962 = vadd.f32 %v2873, %v2961
        %2963 = vmatmul.bf16.gmra.mxu0 %v1206
        %v2964 = vpop.f32.mrf.mxu0
        %v2965 = vadd.f32 %v2876, %v2964
        %v2966 = vpop.f32.mrf.mxu0
        %v2967 = vadd.f32 %v2878, %v2966
        %2968 = vmatmul.bf16.gmra.mxu0 %v1225
        %v2969 = vpop.f32.mrf.mxu0
        %v2970 = vadd.f32 %v2881, %v2969
        %v2971 = vpop.f32.mrf.mxu0
        %v2972 = vadd.f32 %v2883, %v2971
        %2973 = vmatmul.bf16.gmra.mxu0 %v1244
        %v2974 = vpop.f32.mrf.mxu0
        %v2975 = vadd.f32 %v2886, %v2974
        %v2976 = vpop.f32.mrf.mxu0
        %v2977 = vadd.f32 %v2888, %v2976
        %2978 = vmatmul.bf16.gmra.mxu0 %v1263
        %v2979 = vpop.f32.mrf.mxu0
        %v2980 = vadd.f32 %v2891, %v2979
        %v2981 = vpop.f32.mrf.mxu0
        %v2982 = vadd.f32 %v2893, %v2981
        %2983 = vmatmul.bf16.gmra.mxu0 %v1282
        %v2984 = vpop.f32.mrf.mxu0
        %v2985 = vadd.f32 %v2896, %v2984
        %v2986 = vpop.f32.mrf.mxu0
        %v2987 = vadd.f32 %v2898, %v2986
        %2988 = vmatmul.bf16.gmra.mxu0 %v1301
        %v2989 = vpop.f32.mrf.mxu0
        %v2990 = vadd.f32 %v2901, %v2989
        %v2991 = vpop.f32.mrf.mxu0
        %v2992 = vadd.f32 %v2903, %v2991
        %2993 = vmatmul.bf16.gmra.mxu0 %v1320
        %v2994 = vpop.f32.mrf.mxu0
        %v2995 = vadd.f32 %v2906, %v2994
        %v2996 = vpop.f32.mrf.mxu0
        %v2997 = vadd.f32 %v2908, %v2996
        %2998 = vmatmul.bf16.gmra.mxu0 %v1339
        %v2999 = vpop.f32.mrf.mxu0
        %v3000 = vadd.f32 %v2911, %v2999
        %v3001 = vpop.f32.mrf.mxu0
        %v3002 = vadd.f32 %v2913, %v3001
        %3003 = vmatmul.bf16.gmra.mxu0 %v1358
        %v3004 = vpop.f32.mrf.mxu0
        %v3005 = vadd.f32 %v2916, %v3004
        %v3006 = vpop.f32.mrf.mxu0
        %v3007 = vadd.f32 %v2918, %v3006
        %3008 = vmatmul.bf16.gmra.mxu0 %v1377
        %v3009 = vpop.f32.mrf.mxu0
        %v3010 = vadd.f32 %v2921, %v3009
        %v3011 = vpop.f32.mrf.mxu0
        %v3012 = vadd.f32 %v2923, %v3011
        %3013 = vmatmul.bf16.gmra.mxu0 %v1396
        %v3014 = vpop.f32.mrf.mxu0
        %v3015 = vadd.f32 %v2926, %v3014
        %v3016 = vpop.f32.mrf.mxu0
        %v3017 = vadd.f32 %v2928, %v3016
        %3018 = vdwg.mxu0
        %3019 = vmatpush.bf16.msra.mxu0 %v2349
        %3020 = vmatpush.bf16.msra.mxu0 %v2348
        %3021 = vmatpush.bf16.msra.mxu0 %v2347
        %3022 = vmatpush.bf16.msra.mxu0 %v2346
        %3023 = vmatpush.bf16.msra.mxu0 %v2345
        %3024 = vmatpush.bf16.msra.mxu0 %v2344
        %3025 = vmatpush.bf16.msra.mxu0 %v2343
        %3026 = vmatpush.bf16.msra.mxu0 %v2342
        %3027 = vmatmul.bf16.gmra.mxu0 %v1112
        %v3028 = vpop.f32.mrf.mxu0
        %v3029 = vadd.f32 %v2940, %v3028
        %v3030 = vpop.f32.mrf.mxu0
        %v3031 = vadd.f32 %v2942, %v3030
        %3032 = vmatmul.bf16.gmra.mxu0 %v1131
        %v3033 = vpop.f32.mrf.mxu0
        %v3034 = vadd.f32 %v2945, %v3033
        %v3035 = vpop.f32.mrf.mxu0
        %v3036 = vadd.f32 %v2947, %v3035
        %3037 = vmatmul.bf16.gmra.mxu0 %v1150
        %v3038 = vpop.f32.mrf.mxu0
        %v3039 = vadd.f32 %v2950, %v3038
        %v3040 = vpop.f32.mrf.mxu0
        %v3041 = vadd.f32 %v2952, %v3040
        %3042 = vmatmul.bf16.gmra.mxu0 %v1169
        %v3043 = vpop.f32.mrf.mxu0
        %v3044 = vadd.f32 %v2955, %v3043
        %v3045 = vpop.f32.mrf.mxu0
        %v3046 = vadd.f32 %v2957, %v3045
        %3047 = vmatmul.bf16.gmra.mxu0 %v1188
        %v3048 = vpop.f32.mrf.mxu0
        %v3049 = vadd.f32 %v2960, %v3048
        %v3050 = vpop.f32.mrf.mxu0
        %v3051 = vadd.f32 %v2962, %v3050
        %3052 = vmatmul.bf16.gmra.mxu0 %v1207
        %v3053 = vpop.f32.mrf.mxu0
        %v3054 = vadd.f32 %v2965, %v3053
        %v3055 = vpop.f32.mrf.mxu0
        %v3056 = vadd.f32 %v2967, %v3055
        %3057 = vmatmul.bf16.gmra.mxu0 %v1226
        %v3058 = vpop.f32.mrf.mxu0
        %v3059 = vadd.f32 %v2970, %v3058
        %v3060 = vpop.f32.mrf.mxu0
        %v3061 = vadd.f32 %v2972, %v3060
        %3062 = vmatmul.bf16.gmra.mxu0 %v1245
        %v3063 = vpop.f32.mrf.mxu0
        %v3064 = vadd.f32 %v2975, %v3063
        %v3065 = vpop.f32.mrf.mxu0
        %v3066 = vadd.f32 %v2977, %v3065
        %3067 = vmatmul.bf16.gmra.mxu0 %v1264
        %v3068 = vpop.f32.mrf.mxu0
        %v3069 = vadd.f32 %v2980, %v3068
        %v3070 = vpop.f32.mrf.mxu0
        %v3071 = vadd.f32 %v2982, %v3070
        %3072 = vmatmul.bf16.gmra.mxu0 %v1283
        %v3073 = vpop.f32.mrf.mxu0
        %v3074 = vadd.f32 %v2985, %v3073
        %v3075 = vpop.f32.mrf.mxu0
        %v3076 = vadd.f32 %v2987, %v3075
        %3077 = vmatmul.bf16.gmra.mxu0 %v1302
        %v3078 = vpop.f32.mrf.mxu0
        %v3079 = vadd.f32 %v2990, %v3078
        %v3080 = vpop.f32.mrf.mxu0
        %v3081 = vadd.f32 %v2992, %v3080
        %3082 = vmatmul.bf16.gmra.mxu0 %v1321
        %v3083 = vpop.f32.mrf.mxu0
        %v3084 = vadd.f32 %v2995, %v3083
        %v3085 = vpop.f32.mrf.mxu0
        %v3086 = vadd.f32 %v2997, %v3085
        %3087 = vmatmul.bf16.gmra.mxu0 %v1340
        %v3088 = vpop.f32.mrf.mxu0
        %v3089 = vadd.f32 %v3000, %v3088
        %v3090 = vpop.f32.mrf.mxu0
        %v3091 = vadd.f32 %v3002, %v3090
        %3092 = vmatmul.bf16.gmra.mxu0 %v1359
        %v3093 = vpop.f32.mrf.mxu0
        %v3094 = vadd.f32 %v3005, %v3093
        %v3095 = vpop.f32.mrf.mxu0
        %v3096 = vadd.f32 %v3007, %v3095
        %3097 = vmatmul.bf16.gmra.mxu0 %v1378
        %v3098 = vpop.f32.mrf.mxu0
        %v3099 = vadd.f32 %v3010, %v3098
        %v3100 = vpop.f32.mrf.mxu0
        %v3101 = vadd.f32 %v3012, %v3100
        %3102 = vmatmul.bf16.gmra.mxu0 %v1397
        %v3103 = vpop.f32.mrf.mxu0
        %v3104 = vadd.f32 %v3015, %v3103
        %v3105 = vpop.f32.mrf.mxu0
        %v3106 = vadd.f32 %v3017, %v3105
        %3107 = vdwg.mxu0
        %3108 = vmatpush.bf16.msra.mxu0 %v2357
        %3109 = vmatpush.bf16.msra.mxu0 %v2356
        %3110 = vmatpush.bf16.msra.mxu0 %v2355
        %3111 = vmatpush.bf16.msra.mxu0 %v2354
        %3112 = vmatpush.bf16.msra.mxu0 %v2353
        %3113 = vmatpush.bf16.msra.mxu0 %v2352
        %3114 = vmatpush.bf16.msra.mxu0 %v2351
        %3115 = vmatpush.bf16.msra.mxu0 %v2350
        %3116 = vmatmul.bf16.gmra.mxu0 %v1113
        %v3117 = vpop.f32.mrf.mxu0
        %v3118 = vadd.f32 %v3029, %v3117
        %v3119 = vpop.f32.mrf.mxu0
        %v3120 = vadd.f32 %v3031, %v3119
        %3121 = vmatmul.bf16.gmra.mxu0 %v1132
        %v3122 = vpop.f32.mrf.mxu0
        %v3123 = vadd.f32 %v3034, %v3122
        %v3124 = vpop.f32.mrf.mxu0
        %v3125 = vadd.f32 %v3036, %v3124
        %3126 = vmatmul.bf16.gmra.mxu0 %v1151
        %v3127 = vpop.f32.mrf.mxu0
        %v3128 = vadd.f32 %v3039, %v3127
        %v3129 = vpop.f32.mrf.mxu0
        %v3130 = vadd.f32 %v3041, %v3129
        %3131 = vmatmul.bf16.gmra.mxu0 %v1170
        %v3132 = vpop.f32.mrf.mxu0
        %v3133 = vadd.f32 %v3044, %v3132
        %v3134 = vpop.f32.mrf.mxu0
        %v3135 = vadd.f32 %v3046, %v3134
        %3136 = vmatmul.bf16.gmra.mxu0 %v1189
        %v3137 = vpop.f32.mrf.mxu0
        %v3138 = vadd.f32 %v3049, %v3137
        %v3139 = vpop.f32.mrf.mxu0
        %v3140 = vadd.f32 %v3051, %v3139
        %3141 = vmatmul.bf16.gmra.mxu0 %v1208
        %v3142 = vpop.f32.mrf.mxu0
        %v3143 = vadd.f32 %v3054, %v3142
        %v3144 = vpop.f32.mrf.mxu0
        %v3145 = vadd.f32 %v3056, %v3144
        %3146 = vmatmul.bf16.gmra.mxu0 %v1227
        %v3147 = vpop.f32.mrf.mxu0
        %v3148 = vadd.f32 %v3059, %v3147
        %v3149 = vpop.f32.mrf.mxu0
        %v3150 = vadd.f32 %v3061, %v3149
        %3151 = vmatmul.bf16.gmra.mxu0 %v1246
        %v3152 = vpop.f32.mrf.mxu0
        %v3153 = vadd.f32 %v3064, %v3152
        %v3154 = vpop.f32.mrf.mxu0
        %v3155 = vadd.f32 %v3066, %v3154
        %3156 = vmatmul.bf16.gmra.mxu0 %v1265
        %v3157 = vpop.f32.mrf.mxu0
        %v3158 = vadd.f32 %v3069, %v3157
        %v3159 = vpop.f32.mrf.mxu0
        %v3160 = vadd.f32 %v3071, %v3159
        %3161 = vmatmul.bf16.gmra.mxu0 %v1284
        %v3162 = vpop.f32.mrf.mxu0
        %v3163 = vadd.f32 %v3074, %v3162
        %v3164 = vpop.f32.mrf.mxu0
        %v3165 = vadd.f32 %v3076, %v3164
        %3166 = vmatmul.bf16.gmra.mxu0 %v1303
        %v3167 = vpop.f32.mrf.mxu0
        %v3168 = vadd.f32 %v3079, %v3167
        %v3169 = vpop.f32.mrf.mxu0
        %v3170 = vadd.f32 %v3081, %v3169
        %3171 = vmatmul.bf16.gmra.mxu0 %v1322
        %v3172 = vpop.f32.mrf.mxu0
        %v3173 = vadd.f32 %v3084, %v3172
        %v3174 = vpop.f32.mrf.mxu0
        %v3175 = vadd.f32 %v3086, %v3174
        %3176 = vmatmul.bf16.gmra.mxu0 %v1341
        %v3177 = vpop.f32.mrf.mxu0
        %v3178 = vadd.f32 %v3089, %v3177
        %v3179 = vpop.f32.mrf.mxu0
        %v3180 = vadd.f32 %v3091, %v3179
        %3181 = vmatmul.bf16.gmra.mxu0 %v1360
        %v3182 = vpop.f32.mrf.mxu0
        %v3183 = vadd.f32 %v3094, %v3182
        %v3184 = vpop.f32.mrf.mxu0
        %v3185 = vadd.f32 %v3096, %v3184
        %3186 = vmatmul.bf16.gmra.mxu0 %v1379
        %v3187 = vpop.f32.mrf.mxu0
        %v3188 = vadd.f32 %v3099, %v3187
        %v3189 = vpop.f32.mrf.mxu0
        %v3190 = vadd.f32 %v3101, %v3189
        %3191 = vmatmul.bf16.gmra.mxu0 %v1398
        %v3192 = vpop.f32.mrf.mxu0
        %v3193 = vadd.f32 %v3104, %v3192
        %v3194 = vpop.f32.mrf.mxu0
        %v3195 = vadd.f32 %v3106, %v3194
        %3196 = vdwg.mxu0
        %3197 = vmatpush.bf16.msra.mxu0 %v2365
        %3198 = vmatpush.bf16.msra.mxu0 %v2364
        %3199 = vmatpush.bf16.msra.mxu0 %v2363
        %3200 = vmatpush.bf16.msra.mxu0 %v2362
        %3201 = vmatpush.bf16.msra.mxu0 %v2361
        %3202 = vmatpush.bf16.msra.mxu0 %v2360
        %3203 = vmatpush.bf16.msra.mxu0 %v2359
        %3204 = vmatpush.bf16.msra.mxu0 %v2358
        %3205 = vmatmul.bf16.gmra.mxu0 %v1114
        %v3206 = vpop.f32.mrf.mxu0
        %v3207 = vadd.f32 %v3118, %v3206
        %v3208 = vpop.f32.mrf.mxu0
        %v3209 = vadd.f32 %v3120, %v3208
        %3210 = vmatmul.bf16.gmra.mxu0 %v1133
        %v3211 = vpop.f32.mrf.mxu0
        %v3212 = vadd.f32 %v3123, %v3211
        %v3213 = vpop.f32.mrf.mxu0
        %v3214 = vadd.f32 %v3125, %v3213
        %3215 = vmatmul.bf16.gmra.mxu0 %v1152
        %v3216 = vpop.f32.mrf.mxu0
        %v3217 = vadd.f32 %v3128, %v3216
        %v3218 = vpop.f32.mrf.mxu0
        %v3219 = vadd.f32 %v3130, %v3218
        %3220 = vmatmul.bf16.gmra.mxu0 %v1171
        %v3221 = vpop.f32.mrf.mxu0
        %v3222 = vadd.f32 %v3133, %v3221
        %v3223 = vpop.f32.mrf.mxu0
        %v3224 = vadd.f32 %v3135, %v3223
        %3225 = vmatmul.bf16.gmra.mxu0 %v1190
        %v3226 = vpop.f32.mrf.mxu0
        %v3227 = vadd.f32 %v3138, %v3226
        %v3228 = vpop.f32.mrf.mxu0
        %v3229 = vadd.f32 %v3140, %v3228
        %3230 = vmatmul.bf16.gmra.mxu0 %v1209
        %v3231 = vpop.f32.mrf.mxu0
        %v3232 = vadd.f32 %v3143, %v3231
        %v3233 = vpop.f32.mrf.mxu0
        %v3234 = vadd.f32 %v3145, %v3233
        %3235 = vmatmul.bf16.gmra.mxu0 %v1228
        %v3236 = vpop.f32.mrf.mxu0
        %v3237 = vadd.f32 %v3148, %v3236
        %v3238 = vpop.f32.mrf.mxu0
        %v3239 = vadd.f32 %v3150, %v3238
        %3240 = vmatmul.bf16.gmra.mxu0 %v1247
        %v3241 = vpop.f32.mrf.mxu0
        %v3242 = vadd.f32 %v3153, %v3241
        %v3243 = vpop.f32.mrf.mxu0
        %v3244 = vadd.f32 %v3155, %v3243
        %3245 = vmatmul.bf16.gmra.mxu0 %v1266
        %v3246 = vpop.f32.mrf.mxu0
        %v3247 = vadd.f32 %v3158, %v3246
        %v3248 = vpop.f32.mrf.mxu0
        %v3249 = vadd.f32 %v3160, %v3248
        %3250 = vmatmul.bf16.gmra.mxu0 %v1285
        %v3251 = vpop.f32.mrf.mxu0
        %v3252 = vadd.f32 %v3163, %v3251
        %v3253 = vpop.f32.mrf.mxu0
        %v3254 = vadd.f32 %v3165, %v3253
        %3255 = vmatmul.bf16.gmra.mxu0 %v1304
        %v3256 = vpop.f32.mrf.mxu0
        %v3257 = vadd.f32 %v3168, %v3256
        %v3258 = vpop.f32.mrf.mxu0
        %v3259 = vadd.f32 %v3170, %v3258
        %3260 = vmatmul.bf16.gmra.mxu0 %v1323
        %v3261 = vpop.f32.mrf.mxu0
        %v3262 = vadd.f32 %v3173, %v3261
        %v3263 = vpop.f32.mrf.mxu0
        %v3264 = vadd.f32 %v3175, %v3263
        %3265 = vmatmul.bf16.gmra.mxu0 %v1342
        %v3266 = vpop.f32.mrf.mxu0
        %v3267 = vadd.f32 %v3178, %v3266
        %v3268 = vpop.f32.mrf.mxu0
        %v3269 = vadd.f32 %v3180, %v3268
        %3270 = vmatmul.bf16.gmra.mxu0 %v1361
        %v3271 = vpop.f32.mrf.mxu0
        %v3272 = vadd.f32 %v3183, %v3271
        %v3273 = vpop.f32.mrf.mxu0
        %v3274 = vadd.f32 %v3185, %v3273
        %3275 = vmatmul.bf16.gmra.mxu0 %v1380
        %v3276 = vpop.f32.mrf.mxu0
        %v3277 = vadd.f32 %v3188, %v3276
        %v3278 = vpop.f32.mrf.mxu0
        %v3279 = vadd.f32 %v3190, %v3278
        %3280 = vmatmul.bf16.gmra.mxu0 %v1399
        %v3281 = vpop.f32.mrf.mxu0
        %v3282 = vadd.f32 %v3193, %v3281
        %v3283 = vpop.f32.mrf.mxu0
        %v3284 = vadd.f32 %v3195, %v3283
        %3285 = vdwg.mxu0
        %3286 = vmatpush.bf16.msra.mxu0 %v2373
        %3287 = vmatpush.bf16.msra.mxu0 %v2372
        %3288 = vmatpush.bf16.msra.mxu0 %v2371
        %3289 = vmatpush.bf16.msra.mxu0 %v2370
        %3290 = vmatpush.bf16.msra.mxu0 %v2369
        %3291 = vmatpush.bf16.msra.mxu0 %v2368
        %3292 = vmatpush.bf16.msra.mxu0 %v2367
        %3293 = vmatpush.bf16.msra.mxu0 %v2366
        %3294 = vmatmul.bf16.gmra.mxu0 %v1115
        %v3295 = vpop.f32.mrf.mxu0
        %v3296 = vadd.f32 %v3207, %v3295
        %v3297 = vpop.f32.mrf.mxu0
        %v3298 = vadd.f32 %v3209, %v3297
        %3299 = vmatmul.bf16.gmra.mxu0 %v1134
        %v3300 = vpop.f32.mrf.mxu0
        %v3301 = vadd.f32 %v3212, %v3300
        %v3302 = vpop.f32.mrf.mxu0
        %v3303 = vadd.f32 %v3214, %v3302
        %3304 = vmatmul.bf16.gmra.mxu0 %v1153
        %v3305 = vpop.f32.mrf.mxu0
        %v3306 = vadd.f32 %v3217, %v3305
        %v3307 = vpop.f32.mrf.mxu0
        %v3308 = vadd.f32 %v3219, %v3307
        %3309 = vmatmul.bf16.gmra.mxu0 %v1172
        %v3310 = vpop.f32.mrf.mxu0
        %v3311 = vadd.f32 %v3222, %v3310
        %v3312 = vpop.f32.mrf.mxu0
        %v3313 = vadd.f32 %v3224, %v3312
        %3314 = vmatmul.bf16.gmra.mxu0 %v1191
        %v3315 = vpop.f32.mrf.mxu0
        %v3316 = vadd.f32 %v3227, %v3315
        %v3317 = vpop.f32.mrf.mxu0
        %v3318 = vadd.f32 %v3229, %v3317
        %3319 = vmatmul.bf16.gmra.mxu0 %v1210
        %v3320 = vpop.f32.mrf.mxu0
        %v3321 = vadd.f32 %v3232, %v3320
        %v3322 = vpop.f32.mrf.mxu0
        %v3323 = vadd.f32 %v3234, %v3322
        %3324 = vmatmul.bf16.gmra.mxu0 %v1229
        %v3325 = vpop.f32.mrf.mxu0
        %v3326 = vadd.f32 %v3237, %v3325
        %v3327 = vpop.f32.mrf.mxu0
        %v3328 = vadd.f32 %v3239, %v3327
        %3329 = vmatmul.bf16.gmra.mxu0 %v1248
        %v3330 = vpop.f32.mrf.mxu0
        %v3331 = vadd.f32 %v3242, %v3330
        %v3332 = vpop.f32.mrf.mxu0
        %v3333 = vadd.f32 %v3244, %v3332
        %3334 = vmatmul.bf16.gmra.mxu0 %v1267
        %v3335 = vpop.f32.mrf.mxu0
        %v3336 = vadd.f32 %v3247, %v3335
        %v3337 = vpop.f32.mrf.mxu0
        %v3338 = vadd.f32 %v3249, %v3337
        %3339 = vmatmul.bf16.gmra.mxu0 %v1286
        %v3340 = vpop.f32.mrf.mxu0
        %v3341 = vadd.f32 %v3252, %v3340
        %v3342 = vpop.f32.mrf.mxu0
        %v3343 = vadd.f32 %v3254, %v3342
        %3344 = vmatmul.bf16.gmra.mxu0 %v1305
        %v3345 = vpop.f32.mrf.mxu0
        %v3346 = vadd.f32 %v3257, %v3345
        %v3347 = vpop.f32.mrf.mxu0
        %v3348 = vadd.f32 %v3259, %v3347
        %3349 = vmatmul.bf16.gmra.mxu0 %v1324
        %v3350 = vpop.f32.mrf.mxu0
        %v3351 = vadd.f32 %v3262, %v3350
        %v3352 = vpop.f32.mrf.mxu0
        %v3353 = vadd.f32 %v3264, %v3352
        %3354 = vmatmul.bf16.gmra.mxu0 %v1343
        %v3355 = vpop.f32.mrf.mxu0
        %v3356 = vadd.f32 %v3267, %v3355
        %v3357 = vpop.f32.mrf.mxu0
        %v3358 = vadd.f32 %v3269, %v3357
        %3359 = vmatmul.bf16.gmra.mxu0 %v1362
        %v3360 = vpop.f32.mrf.mxu0
        %v3361 = vadd.f32 %v3272, %v3360
        %v3362 = vpop.f32.mrf.mxu0
        %v3363 = vadd.f32 %v3274, %v3362
        %3364 = vmatmul.bf16.gmra.mxu0 %v1381
        %v3365 = vpop.f32.mrf.mxu0
        %v3366 = vadd.f32 %v3277, %v3365
        %v3367 = vpop.f32.mrf.mxu0
        %v3368 = vadd.f32 %v3279, %v3367
        %3369 = vmatmul.bf16.gmra.mxu0 %v1400
        %v3370 = vpop.f32.mrf.mxu0
        %v3371 = vadd.f32 %v3282, %v3370
        %v3372 = vpop.f32.mrf.mxu0
        %v3373 = vadd.f32 %v3284, %v3372
        %3374 = vdwg.mxu0
        %3375 = vmatpush.bf16.msra.mxu0 %v2381
        %3376 = vmatpush.bf16.msra.mxu0 %v2380
        %3377 = vmatpush.bf16.msra.mxu0 %v2379
        %3378 = vmatpush.bf16.msra.mxu0 %v2378
        %3379 = vmatpush.bf16.msra.mxu0 %v2377
        %3380 = vmatpush.bf16.msra.mxu0 %v2376
        %3381 = vmatpush.bf16.msra.mxu0 %v2375
        %3382 = vmatpush.bf16.msra.mxu0 %v2374
        %3383 = vmatmul.bf16.gmra.mxu0 %v1116
        %v3384 = vpop.f32.mrf.mxu0
        %v3385 = vadd.f32 %v3296, %v3384
        %v3386 = vpop.f32.mrf.mxu0
        %v3387 = vadd.f32 %v3298, %v3386
        %3388 = vmatmul.bf16.gmra.mxu0 %v1135
        %v3389 = vpop.f32.mrf.mxu0
        %v3390 = vadd.f32 %v3301, %v3389
        %v3391 = vpop.f32.mrf.mxu0
        %v3392 = vadd.f32 %v3303, %v3391
        %3393 = vmatmul.bf16.gmra.mxu0 %v1154
        %v3394 = vpop.f32.mrf.mxu0
        %v3395 = vadd.f32 %v3306, %v3394
        %v3396 = vpop.f32.mrf.mxu0
        %v3397 = vadd.f32 %v3308, %v3396
        %3398 = vmatmul.bf16.gmra.mxu0 %v1173
        %v3399 = vpop.f32.mrf.mxu0
        %v3400 = vadd.f32 %v3311, %v3399
        %v3401 = vpop.f32.mrf.mxu0
        %v3402 = vadd.f32 %v3313, %v3401
        %3403 = vmatmul.bf16.gmra.mxu0 %v1192
        %v3404 = vpop.f32.mrf.mxu0
        %v3405 = vadd.f32 %v3316, %v3404
        %v3406 = vpop.f32.mrf.mxu0
        %v3407 = vadd.f32 %v3318, %v3406
        %3408 = vmatmul.bf16.gmra.mxu0 %v1211
        %v3409 = vpop.f32.mrf.mxu0
        %v3410 = vadd.f32 %v3321, %v3409
        %v3411 = vpop.f32.mrf.mxu0
        %v3412 = vadd.f32 %v3323, %v3411
        %3413 = vmatmul.bf16.gmra.mxu0 %v1230
        %v3414 = vpop.f32.mrf.mxu0
        %v3415 = vadd.f32 %v3326, %v3414
        %v3416 = vpop.f32.mrf.mxu0
        %v3417 = vadd.f32 %v3328, %v3416
        %3418 = vmatmul.bf16.gmra.mxu0 %v1249
        %v3419 = vpop.f32.mrf.mxu0
        %v3420 = vadd.f32 %v3331, %v3419
        %v3421 = vpop.f32.mrf.mxu0
        %v3422 = vadd.f32 %v3333, %v3421
        %3423 = vmatmul.bf16.gmra.mxu0 %v1268
        %v3424 = vpop.f32.mrf.mxu0
        %v3425 = vadd.f32 %v3336, %v3424
        %v3426 = vpop.f32.mrf.mxu0
        %v3427 = vadd.f32 %v3338, %v3426
        %3428 = vmatmul.bf16.gmra.mxu0 %v1287
        %v3429 = vpop.f32.mrf.mxu0
        %v3430 = vadd.f32 %v3341, %v3429
        %v3431 = vpop.f32.mrf.mxu0
        %v3432 = vadd.f32 %v3343, %v3431
        %3433 = vmatmul.bf16.gmra.mxu0 %v1306
        %v3434 = vpop.f32.mrf.mxu0
        %v3435 = vadd.f32 %v3346, %v3434
        %v3436 = vpop.f32.mrf.mxu0
        %v3437 = vadd.f32 %v3348, %v3436
        %3438 = vmatmul.bf16.gmra.mxu0 %v1325
        %v3439 = vpop.f32.mrf.mxu0
        %v3440 = vadd.f32 %v3351, %v3439
        %v3441 = vpop.f32.mrf.mxu0
        %v3442 = vadd.f32 %v3353, %v3441
        %3443 = vmatmul.bf16.gmra.mxu0 %v1344
        %v3444 = vpop.f32.mrf.mxu0
        %v3445 = vadd.f32 %v3356, %v3444
        %v3446 = vpop.f32.mrf.mxu0
        %v3447 = vadd.f32 %v3358, %v3446
        %3448 = vmatmul.bf16.gmra.mxu0 %v1363
        %v3449 = vpop.f32.mrf.mxu0
        %v3450 = vadd.f32 %v3361, %v3449
        %v3451 = vpop.f32.mrf.mxu0
        %v3452 = vadd.f32 %v3363, %v3451
        %3453 = vmatmul.bf16.gmra.mxu0 %v1382
        %v3454 = vpop.f32.mrf.mxu0
        %v3455 = vadd.f32 %v3366, %v3454
        %v3456 = vpop.f32.mrf.mxu0
        %v3457 = vadd.f32 %v3368, %v3456
        %3458 = vmatmul.bf16.gmra.mxu0 %v1401
        %v3459 = vpop.f32.mrf.mxu0
        %v3460 = vadd.f32 %v3371, %v3459
        %v3461 = vpop.f32.mrf.mxu0
        %v3462 = vadd.f32 %v3373, %v3461
        %3463 = vdwg.mxu0
        %3464 = vmatpush.bf16.msra.mxu0 %v2389
        %3465 = vmatpush.bf16.msra.mxu0 %v2388
        %3466 = vmatpush.bf16.msra.mxu0 %v2387
        %3467 = vmatpush.bf16.msra.mxu0 %v2386
        %3468 = vmatpush.bf16.msra.mxu0 %v2385
        %3469 = vmatpush.bf16.msra.mxu0 %v2384
        %3470 = vmatpush.bf16.msra.mxu0 %v2383
        %3471 = vmatpush.bf16.msra.mxu0 %v2382
        %3472 = vmatmul.bf16.gmra.mxu0 %v1117
        %v3473 = vpop.f32.mrf.mxu0
        %v3474 = vadd.f32 %v3385, %v3473
        %v3475 = vpop.f32.mrf.mxu0
        %v3476 = vadd.f32 %v3387, %v3475
        %3477 = vmatmul.bf16.gmra.mxu0 %v1136
        %v3478 = vpop.f32.mrf.mxu0
        %v3479 = vadd.f32 %v3390, %v3478
        %v3480 = vpop.f32.mrf.mxu0
        %v3481 = vadd.f32 %v3392, %v3480
        %3482 = vmatmul.bf16.gmra.mxu0 %v1155
        %v3483 = vpop.f32.mrf.mxu0
        %v3484 = vadd.f32 %v3395, %v3483
        %v3485 = vpop.f32.mrf.mxu0
        %v3486 = vadd.f32 %v3397, %v3485
        %3487 = vmatmul.bf16.gmra.mxu0 %v1174
        %v3488 = vpop.f32.mrf.mxu0
        %v3489 = vadd.f32 %v3400, %v3488
        %v3490 = vpop.f32.mrf.mxu0
        %v3491 = vadd.f32 %v3402, %v3490
        %3492 = vmatmul.bf16.gmra.mxu0 %v1193
        %v3493 = vpop.f32.mrf.mxu0
        %v3494 = vadd.f32 %v3405, %v3493
        %v3495 = vpop.f32.mrf.mxu0
        %v3496 = vadd.f32 %v3407, %v3495
        %3497 = vmatmul.bf16.gmra.mxu0 %v1212
        %v3498 = vpop.f32.mrf.mxu0
        %v3499 = vadd.f32 %v3410, %v3498
        %v3500 = vpop.f32.mrf.mxu0
        %v3501 = vadd.f32 %v3412, %v3500
        %3502 = vmatmul.bf16.gmra.mxu0 %v1231
        %v3503 = vpop.f32.mrf.mxu0
        %v3504 = vadd.f32 %v3415, %v3503
        %v3505 = vpop.f32.mrf.mxu0
        %v3506 = vadd.f32 %v3417, %v3505
        %3507 = vmatmul.bf16.gmra.mxu0 %v1250
        %v3508 = vpop.f32.mrf.mxu0
        %v3509 = vadd.f32 %v3420, %v3508
        %v3510 = vpop.f32.mrf.mxu0
        %v3511 = vadd.f32 %v3422, %v3510
        %3512 = vmatmul.bf16.gmra.mxu0 %v1269
        %v3513 = vpop.f32.mrf.mxu0
        %v3514 = vadd.f32 %v3425, %v3513
        %v3515 = vpop.f32.mrf.mxu0
        %v3516 = vadd.f32 %v3427, %v3515
        %3517 = vmatmul.bf16.gmra.mxu0 %v1288
        %v3518 = vpop.f32.mrf.mxu0
        %v3519 = vadd.f32 %v3430, %v3518
        %v3520 = vpop.f32.mrf.mxu0
        %v3521 = vadd.f32 %v3432, %v3520
        %3522 = vmatmul.bf16.gmra.mxu0 %v1307
        %v3523 = vpop.f32.mrf.mxu0
        %v3524 = vadd.f32 %v3435, %v3523
        %v3525 = vpop.f32.mrf.mxu0
        %v3526 = vadd.f32 %v3437, %v3525
        %3527 = vmatmul.bf16.gmra.mxu0 %v1326
        %v3528 = vpop.f32.mrf.mxu0
        %v3529 = vadd.f32 %v3440, %v3528
        %v3530 = vpop.f32.mrf.mxu0
        %v3531 = vadd.f32 %v3442, %v3530
        %3532 = vmatmul.bf16.gmra.mxu0 %v1345
        %v3533 = vpop.f32.mrf.mxu0
        %v3534 = vadd.f32 %v3445, %v3533
        %v3535 = vpop.f32.mrf.mxu0
        %v3536 = vadd.f32 %v3447, %v3535
        %3537 = vmatmul.bf16.gmra.mxu0 %v1364
        %v3538 = vpop.f32.mrf.mxu0
        %v3539 = vadd.f32 %v3450, %v3538
        %v3540 = vpop.f32.mrf.mxu0
        %v3541 = vadd.f32 %v3452, %v3540
        %3542 = vmatmul.bf16.gmra.mxu0 %v1383
        %v3543 = vpop.f32.mrf.mxu0
        %v3544 = vadd.f32 %v3455, %v3543
        %v3545 = vpop.f32.mrf.mxu0
        %v3546 = vadd.f32 %v3457, %v3545
        %3547 = vmatmul.bf16.gmra.mxu0 %v1402
        %v3548 = vpop.f32.mrf.mxu0
        %v3549 = vadd.f32 %v3460, %v3548
        %v3550 = vpop.f32.mrf.mxu0
        %v3551 = vadd.f32 %v3462, %v3550
        %3552 = vdwg.mxu0
        %3553 = vmatpush.bf16.msra.mxu0 %v2397
        %3554 = vmatpush.bf16.msra.mxu0 %v2396
        %3555 = vmatpush.bf16.msra.mxu0 %v2395
        %3556 = vmatpush.bf16.msra.mxu0 %v2394
        %3557 = vmatpush.bf16.msra.mxu0 %v2393
        %3558 = vmatpush.bf16.msra.mxu0 %v2392
        %3559 = vmatpush.bf16.msra.mxu0 %v2391
        %3560 = vmatpush.bf16.msra.mxu0 %v2390
        %3561 = vmatmul.bf16.gmra.mxu0 %v1118
        %v3562 = vpop.f32.mrf.mxu0
        %v3563 = vadd.f32 %v3474, %v3562
        %v3564 = vpop.f32.mrf.mxu0
        %v3565 = vadd.f32 %v3476, %v3564
        %3566 = vmatmul.bf16.gmra.mxu0 %v1137
        %v3567 = vpop.f32.mrf.mxu0
        %v3568 = vadd.f32 %v3479, %v3567
        %v3569 = vpop.f32.mrf.mxu0
        %v3570 = vadd.f32 %v3481, %v3569
        %3571 = vmatmul.bf16.gmra.mxu0 %v1156
        %v3572 = vpop.f32.mrf.mxu0
        %v3573 = vadd.f32 %v3484, %v3572
        %v3574 = vpop.f32.mrf.mxu0
        %v3575 = vadd.f32 %v3486, %v3574
        %3576 = vmatmul.bf16.gmra.mxu0 %v1175
        %v3577 = vpop.f32.mrf.mxu0
        %v3578 = vadd.f32 %v3489, %v3577
        %v3579 = vpop.f32.mrf.mxu0
        %v3580 = vadd.f32 %v3491, %v3579
        %3581 = vmatmul.bf16.gmra.mxu0 %v1194
        %v3582 = vpop.f32.mrf.mxu0
        %v3583 = vadd.f32 %v3494, %v3582
        %v3584 = vpop.f32.mrf.mxu0
        %v3585 = vadd.f32 %v3496, %v3584
        %3586 = vmatmul.bf16.gmra.mxu0 %v1213
        %v3587 = vpop.f32.mrf.mxu0
        %v3588 = vadd.f32 %v3499, %v3587
        %v3589 = vpop.f32.mrf.mxu0
        %v3590 = vadd.f32 %v3501, %v3589
        %3591 = vmatmul.bf16.gmra.mxu0 %v1232
        %v3592 = vpop.f32.mrf.mxu0
        %v3593 = vadd.f32 %v3504, %v3592
        %v3594 = vpop.f32.mrf.mxu0
        %v3595 = vadd.f32 %v3506, %v3594
        %3596 = vmatmul.bf16.gmra.mxu0 %v1251
        %v3597 = vpop.f32.mrf.mxu0
        %v3598 = vadd.f32 %v3509, %v3597
        %v3599 = vpop.f32.mrf.mxu0
        %v3600 = vadd.f32 %v3511, %v3599
        %3601 = vmatmul.bf16.gmra.mxu0 %v1270
        %v3602 = vpop.f32.mrf.mxu0
        %v3603 = vadd.f32 %v3514, %v3602
        %v3604 = vpop.f32.mrf.mxu0
        %v3605 = vadd.f32 %v3516, %v3604
        %3606 = vmatmul.bf16.gmra.mxu0 %v1289
        %v3607 = vpop.f32.mrf.mxu0
        %v3608 = vadd.f32 %v3519, %v3607
        %v3609 = vpop.f32.mrf.mxu0
        %v3610 = vadd.f32 %v3521, %v3609
        %3611 = vmatmul.bf16.gmra.mxu0 %v1308
        %v3612 = vpop.f32.mrf.mxu0
        %v3613 = vadd.f32 %v3524, %v3612
        %v3614 = vpop.f32.mrf.mxu0
        %v3615 = vadd.f32 %v3526, %v3614
        %3616 = vmatmul.bf16.gmra.mxu0 %v1327
        %v3617 = vpop.f32.mrf.mxu0
        %v3618 = vadd.f32 %v3529, %v3617
        %v3619 = vpop.f32.mrf.mxu0
        %v3620 = vadd.f32 %v3531, %v3619
        %3621 = vmatmul.bf16.gmra.mxu0 %v1346
        %v3622 = vpop.f32.mrf.mxu0
        %v3623 = vadd.f32 %v3534, %v3622
        %v3624 = vpop.f32.mrf.mxu0
        %v3625 = vadd.f32 %v3536, %v3624
        %3626 = vmatmul.bf16.gmra.mxu0 %v1365
        %v3627 = vpop.f32.mrf.mxu0
        %v3628 = vadd.f32 %v3539, %v3627
        %v3629 = vpop.f32.mrf.mxu0
        %v3630 = vadd.f32 %v3541, %v3629
        %3631 = vmatmul.bf16.gmra.mxu0 %v1384
        %v3632 = vpop.f32.mrf.mxu0
        %v3633 = vadd.f32 %v3544, %v3632
        %v3634 = vpop.f32.mrf.mxu0
        %v3635 = vadd.f32 %v3546, %v3634
        %3636 = vmatmul.bf16.gmra.mxu0 %v1403
        %v3637 = vpop.f32.mrf.mxu0
        %v3638 = vadd.f32 %v3549, %v3637
        %v3639 = vpop.f32.mrf.mxu0
        %v3640 = vadd.f32 %v3551, %v3639
        %3641 = vdwg.mxu0
        %3642 = vmatpush.bf16.msra.mxu0 %v2405
        %3643 = vmatpush.bf16.msra.mxu0 %v2404
        %3644 = vmatpush.bf16.msra.mxu0 %v2403
        %3645 = vmatpush.bf16.msra.mxu0 %v2402
        %3646 = vmatpush.bf16.msra.mxu0 %v2401
        %3647 = vmatpush.bf16.msra.mxu0 %v2400
        %3648 = vmatpush.bf16.msra.mxu0 %v2399
        %3649 = vmatpush.bf16.msra.mxu0 %v2398
        %3650 = vmatmul.bf16.gmra.mxu0 %v1119
        %v3651 = vpop.f32.mrf.mxu0
        %v3652 = vadd.f32 %v3563, %v3651
        %v3653 = vpop.f32.mrf.mxu0
        %v3654 = vadd.f32 %v3565, %v3653
        %3655 = vmatmul.bf16.gmra.mxu0 %v1138
        %v3656 = vpop.f32.mrf.mxu0
        %v3657 = vadd.f32 %v3568, %v3656
        %v3658 = vpop.f32.mrf.mxu0
        %v3659 = vadd.f32 %v3570, %v3658
        %3660 = vmatmul.bf16.gmra.mxu0 %v1157
        %v3661 = vpop.f32.mrf.mxu0
        %v3662 = vadd.f32 %v3573, %v3661
        %v3663 = vpop.f32.mrf.mxu0
        %v3664 = vadd.f32 %v3575, %v3663
        %3665 = vmatmul.bf16.gmra.mxu0 %v1176
        %v3666 = vpop.f32.mrf.mxu0
        %v3667 = vadd.f32 %v3578, %v3666
        %v3668 = vpop.f32.mrf.mxu0
        %v3669 = vadd.f32 %v3580, %v3668
        %3670 = vmatmul.bf16.gmra.mxu0 %v1195
        %v3671 = vpop.f32.mrf.mxu0
        %v3672 = vadd.f32 %v3583, %v3671
        %v3673 = vpop.f32.mrf.mxu0
        %v3674 = vadd.f32 %v3585, %v3673
        %3675 = vmatmul.bf16.gmra.mxu0 %v1214
        %v3676 = vpop.f32.mrf.mxu0
        %v3677 = vadd.f32 %v3588, %v3676
        %v3678 = vpop.f32.mrf.mxu0
        %v3679 = vadd.f32 %v3590, %v3678
        %3680 = vmatmul.bf16.gmra.mxu0 %v1233
        %v3681 = vpop.f32.mrf.mxu0
        %v3682 = vadd.f32 %v3593, %v3681
        %v3683 = vpop.f32.mrf.mxu0
        %v3684 = vadd.f32 %v3595, %v3683
        %3685 = vmatmul.bf16.gmra.mxu0 %v1252
        %v3686 = vpop.f32.mrf.mxu0
        %v3687 = vadd.f32 %v3598, %v3686
        %v3688 = vpop.f32.mrf.mxu0
        %v3689 = vadd.f32 %v3600, %v3688
        %3690 = vmatmul.bf16.gmra.mxu0 %v1271
        %v3691 = vpop.f32.mrf.mxu0
        %v3692 = vadd.f32 %v3603, %v3691
        %v3693 = vpop.f32.mrf.mxu0
        %v3694 = vadd.f32 %v3605, %v3693
        %3695 = vmatmul.bf16.gmra.mxu0 %v1290
        %v3696 = vpop.f32.mrf.mxu0
        %v3697 = vadd.f32 %v3608, %v3696
        %v3698 = vpop.f32.mrf.mxu0
        %v3699 = vadd.f32 %v3610, %v3698
        %3700 = vmatmul.bf16.gmra.mxu0 %v1309
        %v3701 = vpop.f32.mrf.mxu0
        %v3702 = vadd.f32 %v3613, %v3701
        %v3703 = vpop.f32.mrf.mxu0
        %v3704 = vadd.f32 %v3615, %v3703
        %3705 = vmatmul.bf16.gmra.mxu0 %v1328
        %v3706 = vpop.f32.mrf.mxu0
        %v3707 = vadd.f32 %v3618, %v3706
        %v3708 = vpop.f32.mrf.mxu0
        %v3709 = vadd.f32 %v3620, %v3708
        %3710 = vmatmul.bf16.gmra.mxu0 %v1347
        %v3711 = vpop.f32.mrf.mxu0
        %v3712 = vadd.f32 %v3623, %v3711
        %v3713 = vpop.f32.mrf.mxu0
        %v3714 = vadd.f32 %v3625, %v3713
        %3715 = vmatmul.bf16.gmra.mxu0 %v1366
        %v3716 = vpop.f32.mrf.mxu0
        %v3717 = vadd.f32 %v3628, %v3716
        %v3718 = vpop.f32.mrf.mxu0
        %v3719 = vadd.f32 %v3630, %v3718
        %3720 = vmatmul.bf16.gmra.mxu0 %v1385
        %v3721 = vpop.f32.mrf.mxu0
        %v3722 = vadd.f32 %v3633, %v3721
        %v3723 = vpop.f32.mrf.mxu0
        %v3724 = vadd.f32 %v3635, %v3723
        %3725 = vmatmul.bf16.gmra.mxu0 %v1404
        %v3726 = vpop.f32.mrf.mxu0
        %v3727 = vadd.f32 %v3638, %v3726
        %v3728 = vpop.f32.mrf.mxu0
        %v3729 = vadd.f32 %v3640, %v3728
        %3730 = vdwg.mxu0
        %3731 = vmatpush.bf16.msra.mxu0 %v2413
        %3732 = vmatpush.bf16.msra.mxu0 %v2412
        %3733 = vmatpush.bf16.msra.mxu0 %v2411
        %3734 = vmatpush.bf16.msra.mxu0 %v2410
        %3735 = vmatpush.bf16.msra.mxu0 %v2409
        %3736 = vmatpush.bf16.msra.mxu0 %v2408
        %3737 = vmatpush.bf16.msra.mxu0 %v2407
        %3738 = vmatpush.bf16.msra.mxu0 %v2406
        %3739 = vmatmul.bf16.gmra.mxu0 %v1120
        %v3740 = vpop.f32.mrf.mxu0
        %v3741 = vadd.f32 %v3652, %v3740
        %v3742 = vpop.f32.mrf.mxu0
        %v3743 = vadd.f32 %v3654, %v3742
        %3744 = vmatmul.bf16.gmra.mxu0 %v1139
        %v3745 = vpop.f32.mrf.mxu0
        %v3746 = vadd.f32 %v3657, %v3745
        %v3747 = vpop.f32.mrf.mxu0
        %v3748 = vadd.f32 %v3659, %v3747
        %3749 = vmatmul.bf16.gmra.mxu0 %v1158
        %v3750 = vpop.f32.mrf.mxu0
        %v3751 = vadd.f32 %v3662, %v3750
        %v3752 = vpop.f32.mrf.mxu0
        %v3753 = vadd.f32 %v3664, %v3752
        %3754 = vmatmul.bf16.gmra.mxu0 %v1177
        %v3755 = vpop.f32.mrf.mxu0
        %v3756 = vadd.f32 %v3667, %v3755
        %v3757 = vpop.f32.mrf.mxu0
        %v3758 = vadd.f32 %v3669, %v3757
        %3759 = vmatmul.bf16.gmra.mxu0 %v1196
        %v3760 = vpop.f32.mrf.mxu0
        %v3761 = vadd.f32 %v3672, %v3760
        %v3762 = vpop.f32.mrf.mxu0
        %v3763 = vadd.f32 %v3674, %v3762
        %3764 = vmatmul.bf16.gmra.mxu0 %v1215
        %v3765 = vpop.f32.mrf.mxu0
        %v3766 = vadd.f32 %v3677, %v3765
        %v3767 = vpop.f32.mrf.mxu0
        %v3768 = vadd.f32 %v3679, %v3767
        %3769 = vmatmul.bf16.gmra.mxu0 %v1234
        %v3770 = vpop.f32.mrf.mxu0
        %v3771 = vadd.f32 %v3682, %v3770
        %v3772 = vpop.f32.mrf.mxu0
        %v3773 = vadd.f32 %v3684, %v3772
        %3774 = vmatmul.bf16.gmra.mxu0 %v1253
        %v3775 = vpop.f32.mrf.mxu0
        %v3776 = vadd.f32 %v3687, %v3775
        %v3777 = vpop.f32.mrf.mxu0
        %v3778 = vadd.f32 %v3689, %v3777
        %3779 = vmatmul.bf16.gmra.mxu0 %v1272
        %v3780 = vpop.f32.mrf.mxu0
        %v3781 = vadd.f32 %v3692, %v3780
        %v3782 = vpop.f32.mrf.mxu0
        %v3783 = vadd.f32 %v3694, %v3782
        %3784 = vmatmul.bf16.gmra.mxu0 %v1291
        %v3785 = vpop.f32.mrf.mxu0
        %v3786 = vadd.f32 %v3697, %v3785
        %v3787 = vpop.f32.mrf.mxu0
        %v3788 = vadd.f32 %v3699, %v3787
        %3789 = vmatmul.bf16.gmra.mxu0 %v1310
        %v3790 = vpop.f32.mrf.mxu0
        %v3791 = vadd.f32 %v3702, %v3790
        %v3792 = vpop.f32.mrf.mxu0
        %v3793 = vadd.f32 %v3704, %v3792
        %3794 = vmatmul.bf16.gmra.mxu0 %v1329
        %v3795 = vpop.f32.mrf.mxu0
        %v3796 = vadd.f32 %v3707, %v3795
        %v3797 = vpop.f32.mrf.mxu0
        %v3798 = vadd.f32 %v3709, %v3797
        %3799 = vmatmul.bf16.gmra.mxu0 %v1348
        %v3800 = vpop.f32.mrf.mxu0
        %v3801 = vadd.f32 %v3712, %v3800
        %v3802 = vpop.f32.mrf.mxu0
        %v3803 = vadd.f32 %v3714, %v3802
        %3804 = vmatmul.bf16.gmra.mxu0 %v1367
        %v3805 = vpop.f32.mrf.mxu0
        %v3806 = vadd.f32 %v3717, %v3805
        %v3807 = vpop.f32.mrf.mxu0
        %v3808 = vadd.f32 %v3719, %v3807
        %3809 = vmatmul.bf16.gmra.mxu0 %v1386
        %v3810 = vpop.f32.mrf.mxu0
        %v3811 = vadd.f32 %v3722, %v3810
        %v3812 = vpop.f32.mrf.mxu0
        %v3813 = vadd.f32 %v3724, %v3812
        %3814 = vmatmul.bf16.gmra.mxu0 %v1405
        %v3815 = vpop.f32.mrf.mxu0
        %v3816 = vadd.f32 %v3727, %v3815
        %v3817 = vpop.f32.mrf.mxu0
        %v3818 = vadd.f32 %v3729, %v3817
        %3819 = vdwg.mxu0
        %3820 = vmatpush.bf16.msra.mxu0 %v2421
        %3821 = vmatpush.bf16.msra.mxu0 %v2420
        %3822 = vmatpush.bf16.msra.mxu0 %v2419
        %3823 = vmatpush.bf16.msra.mxu0 %v2418
        %3824 = vmatpush.bf16.msra.mxu0 %v2417
        %3825 = vmatpush.bf16.msra.mxu0 %v2416
        %3826 = vmatpush.bf16.msra.mxu0 %v2415
        %3827 = vmatpush.bf16.msra.mxu0 %v2414
        %3828 = vmatmul.bf16.gmra.mxu0 %v1121
        %v3829 = vpop.f32.mrf.mxu0
        %v3830 = vadd.f32 %v3741, %v3829
        %v3831 = vpop.f32.mrf.mxu0
        %v3832 = vadd.f32 %v3743, %v3831
        %3833 = vmatmul.bf16.gmra.mxu0 %v1140
        %v3834 = vpop.f32.mrf.mxu0
        %v3835 = vadd.f32 %v3746, %v3834
        %v3836 = vpop.f32.mrf.mxu0
        %v3837 = vadd.f32 %v3748, %v3836
        %3838 = vmatmul.bf16.gmra.mxu0 %v1159
        %v3839 = vpop.f32.mrf.mxu0
        %v3840 = vadd.f32 %v3751, %v3839
        %v3841 = vpop.f32.mrf.mxu0
        %v3842 = vadd.f32 %v3753, %v3841
        %3843 = vmatmul.bf16.gmra.mxu0 %v1178
        %v3844 = vpop.f32.mrf.mxu0
        %v3845 = vadd.f32 %v3756, %v3844
        %v3846 = vpop.f32.mrf.mxu0
        %v3847 = vadd.f32 %v3758, %v3846
        %3848 = vmatmul.bf16.gmra.mxu0 %v1197
        %v3849 = vpop.f32.mrf.mxu0
        %v3850 = vadd.f32 %v3761, %v3849
        %v3851 = vpop.f32.mrf.mxu0
        %v3852 = vadd.f32 %v3763, %v3851
        %3853 = vmatmul.bf16.gmra.mxu0 %v1216
        %v3854 = vpop.f32.mrf.mxu0
        %v3855 = vadd.f32 %v3766, %v3854
        %v3856 = vpop.f32.mrf.mxu0
        %v3857 = vadd.f32 %v3768, %v3856
        %3858 = vmatmul.bf16.gmra.mxu0 %v1235
        %v3859 = vpop.f32.mrf.mxu0
        %v3860 = vadd.f32 %v3771, %v3859
        %v3861 = vpop.f32.mrf.mxu0
        %v3862 = vadd.f32 %v3773, %v3861
        %3863 = vmatmul.bf16.gmra.mxu0 %v1254
        %v3864 = vpop.f32.mrf.mxu0
        %v3865 = vadd.f32 %v3776, %v3864
        %v3866 = vpop.f32.mrf.mxu0
        %v3867 = vadd.f32 %v3778, %v3866
        %3868 = vmatmul.bf16.gmra.mxu0 %v1273
        %v3869 = vpop.f32.mrf.mxu0
        %v3870 = vadd.f32 %v3781, %v3869
        %v3871 = vpop.f32.mrf.mxu0
        %v3872 = vadd.f32 %v3783, %v3871
        %3873 = vmatmul.bf16.gmra.mxu0 %v1292
        %v3874 = vpop.f32.mrf.mxu0
        %v3875 = vadd.f32 %v3786, %v3874
        %v3876 = vpop.f32.mrf.mxu0
        %v3877 = vadd.f32 %v3788, %v3876
        %3878 = vmatmul.bf16.gmra.mxu0 %v1311
        %v3879 = vpop.f32.mrf.mxu0
        %v3880 = vadd.f32 %v3791, %v3879
        %v3881 = vpop.f32.mrf.mxu0
        %v3882 = vadd.f32 %v3793, %v3881
        %3883 = vmatmul.bf16.gmra.mxu0 %v1330
        %v3884 = vpop.f32.mrf.mxu0
        %v3885 = vadd.f32 %v3796, %v3884
        %v3886 = vpop.f32.mrf.mxu0
        %v3887 = vadd.f32 %v3798, %v3886
        %3888 = vmatmul.bf16.gmra.mxu0 %v1349
        %v3889 = vpop.f32.mrf.mxu0
        %v3890 = vadd.f32 %v3801, %v3889
        %v3891 = vpop.f32.mrf.mxu0
        %v3892 = vadd.f32 %v3803, %v3891
        %3893 = vmatmul.bf16.gmra.mxu0 %v1368
        %v3894 = vpop.f32.mrf.mxu0
        %v3895 = vadd.f32 %v3806, %v3894
        %v3896 = vpop.f32.mrf.mxu0
        %v3897 = vadd.f32 %v3808, %v3896
        %3898 = vmatmul.bf16.gmra.mxu0 %v1387
        %v3899 = vpop.f32.mrf.mxu0
        %v3900 = vadd.f32 %v3811, %v3899
        %v3901 = vpop.f32.mrf.mxu0
        %v3902 = vadd.f32 %v3813, %v3901
        %3903 = vmatmul.bf16.gmra.mxu0 %v1406
        %v3904 = vpop.f32.mrf.mxu0
        %v3905 = vadd.f32 %v3816, %v3904
        %v3906 = vpop.f32.mrf.mxu0
        %v3907 = vadd.f32 %v3818, %v3906
        %3908 = vdwg.mxu0
        %3909 = vmatpush.bf16.msra.mxu0 %v2429
        %3910 = vmatpush.bf16.msra.mxu0 %v2428
        %3911 = vmatpush.bf16.msra.mxu0 %v2427
        %3912 = vmatpush.bf16.msra.mxu0 %v2426
        %3913 = vmatpush.bf16.msra.mxu0 %v2425
        %3914 = vmatpush.bf16.msra.mxu0 %v2424
        %3915 = vmatpush.bf16.msra.mxu0 %v2423
        %3916 = vmatpush.bf16.msra.mxu0 %v2422
        %3917 = vmatmul.bf16.gmra.mxu0 %v1122
        %v3918 = vpop.f32.mrf.mxu0
        %v3919 = vadd.f32 %v3830, %v3918
        %v3920 = vpop.f32.mrf.mxu0
        %v3921 = vadd.f32 %v3832, %v3920
        %3922 = vmatmul.bf16.gmra.mxu0 %v1141
        %v3923 = vpop.f32.mrf.mxu0
        %v3924 = vadd.f32 %v3835, %v3923
        %v3925 = vpop.f32.mrf.mxu0
        %v3926 = vadd.f32 %v3837, %v3925
        %3927 = vmatmul.bf16.gmra.mxu0 %v1160
        %v3928 = vpop.f32.mrf.mxu0
        %v3929 = vadd.f32 %v3840, %v3928
        %v3930 = vpop.f32.mrf.mxu0
        %v3931 = vadd.f32 %v3842, %v3930
        %3932 = vmatmul.bf16.gmra.mxu0 %v1179
        %v3933 = vpop.f32.mrf.mxu0
        %v3934 = vadd.f32 %v3845, %v3933
        %v3935 = vpop.f32.mrf.mxu0
        %v3936 = vadd.f32 %v3847, %v3935
        %3937 = vmatmul.bf16.gmra.mxu0 %v1198
        %v3938 = vpop.f32.mrf.mxu0
        %v3939 = vadd.f32 %v3850, %v3938
        %v3940 = vpop.f32.mrf.mxu0
        %v3941 = vadd.f32 %v3852, %v3940
        %3942 = vmatmul.bf16.gmra.mxu0 %v1217
        %v3943 = vpop.f32.mrf.mxu0
        %v3944 = vadd.f32 %v3855, %v3943
        %v3945 = vpop.f32.mrf.mxu0
        %v3946 = vadd.f32 %v3857, %v3945
        %3947 = vmatmul.bf16.gmra.mxu0 %v1236
        %v3948 = vpop.f32.mrf.mxu0
        %v3949 = vadd.f32 %v3860, %v3948
        %v3950 = vpop.f32.mrf.mxu0
        %v3951 = vadd.f32 %v3862, %v3950
        %3952 = vmatmul.bf16.gmra.mxu0 %v1255
        %v3953 = vpop.f32.mrf.mxu0
        %v3954 = vadd.f32 %v3865, %v3953
        %v3955 = vpop.f32.mrf.mxu0
        %v3956 = vadd.f32 %v3867, %v3955
        %3957 = vmatmul.bf16.gmra.mxu0 %v1274
        %v3958 = vpop.f32.mrf.mxu0
        %v3959 = vadd.f32 %v3870, %v3958
        %v3960 = vpop.f32.mrf.mxu0
        %v3961 = vadd.f32 %v3872, %v3960
        %3962 = vmatmul.bf16.gmra.mxu0 %v1293
        %v3963 = vpop.f32.mrf.mxu0
        %v3964 = vadd.f32 %v3875, %v3963
        %v3965 = vpop.f32.mrf.mxu0
        %v3966 = vadd.f32 %v3877, %v3965
        %3967 = vmatmul.bf16.gmra.mxu0 %v1312
        %v3968 = vpop.f32.mrf.mxu0
        %v3969 = vadd.f32 %v3880, %v3968
        %v3970 = vpop.f32.mrf.mxu0
        %v3971 = vadd.f32 %v3882, %v3970
        %3972 = vmatmul.bf16.gmra.mxu0 %v1331
        %v3973 = vpop.f32.mrf.mxu0
        %v3974 = vadd.f32 %v3885, %v3973
        %v3975 = vpop.f32.mrf.mxu0
        %v3976 = vadd.f32 %v3887, %v3975
        %3977 = vmatmul.bf16.gmra.mxu0 %v1350
        %v3978 = vpop.f32.mrf.mxu0
        %v3979 = vadd.f32 %v3890, %v3978
        %v3980 = vpop.f32.mrf.mxu0
        %v3981 = vadd.f32 %v3892, %v3980
        %3982 = vmatmul.bf16.gmra.mxu0 %v1369
        %v3983 = vpop.f32.mrf.mxu0
        %v3984 = vadd.f32 %v3895, %v3983
        %v3985 = vpop.f32.mrf.mxu0
        %v3986 = vadd.f32 %v3897, %v3985
        %3987 = vmatmul.bf16.gmra.mxu0 %v1388
        %v3988 = vpop.f32.mrf.mxu0
        %v3989 = vadd.f32 %v3900, %v3988
        %v3990 = vpop.f32.mrf.mxu0
        %v3991 = vadd.f32 %v3902, %v3990
        %3992 = vmatmul.bf16.gmra.mxu0 %v1407
        %v3993 = vpop.f32.mrf.mxu0
        %v3994 = vadd.f32 %v3905, %v3993
        %v3995 = vpop.f32.mrf.mxu0
        %v3996 = vadd.f32 %v3907, %v3995
        %3997 = vdwg.mxu0
        %3998 = vmatpush.bf16.msra.mxu0 %v2437
        %3999 = vmatpush.bf16.msra.mxu0 %v2436
        %4000 = vmatpush.bf16.msra.mxu0 %v2435
        %4001 = vmatpush.bf16.msra.mxu0 %v2434
        %4002 = vmatpush.bf16.msra.mxu0 %v2433
        %4003 = vmatpush.bf16.msra.mxu0 %v2432
        %4004 = vmatpush.bf16.msra.mxu0 %v2431
        %4005 = vmatpush.bf16.msra.mxu0 %v2430
        %4006 = vmatmul.bf16.gmra.mxu0 %v1123
        %v4007 = vpop.f32.mrf.mxu0
        %v4008 = vadd.f32 %v3919, %v4007
        %v4009 = vpop.f32.mrf.mxu0
        %v4010 = vadd.f32 %v3921, %v4009
        %4011 = vmatmul.bf16.gmra.mxu0 %v1142
        %v4012 = vpop.f32.mrf.mxu0
        %v4013 = vadd.f32 %v3924, %v4012
        %v4014 = vpop.f32.mrf.mxu0
        %v4015 = vadd.f32 %v3926, %v4014
        %4016 = vmatmul.bf16.gmra.mxu0 %v1161
        %v4017 = vpop.f32.mrf.mxu0
        %v4018 = vadd.f32 %v3929, %v4017
        %v4019 = vpop.f32.mrf.mxu0
        %v4020 = vadd.f32 %v3931, %v4019
        %4021 = vmatmul.bf16.gmra.mxu0 %v1180
        %v4022 = vpop.f32.mrf.mxu0
        %v4023 = vadd.f32 %v3934, %v4022
        %v4024 = vpop.f32.mrf.mxu0
        %v4025 = vadd.f32 %v3936, %v4024
        %4026 = vmatmul.bf16.gmra.mxu0 %v1199
        %v4027 = vpop.f32.mrf.mxu0
        %v4028 = vadd.f32 %v3939, %v4027
        %v4029 = vpop.f32.mrf.mxu0
        %v4030 = vadd.f32 %v3941, %v4029
        %4031 = vmatmul.bf16.gmra.mxu0 %v1218
        %v4032 = vpop.f32.mrf.mxu0
        %v4033 = vadd.f32 %v3944, %v4032
        %v4034 = vpop.f32.mrf.mxu0
        %v4035 = vadd.f32 %v3946, %v4034
        %4036 = vmatmul.bf16.gmra.mxu0 %v1237
        %v4037 = vpop.f32.mrf.mxu0
        %v4038 = vadd.f32 %v3949, %v4037
        %v4039 = vpop.f32.mrf.mxu0
        %v4040 = vadd.f32 %v3951, %v4039
        %4041 = vmatmul.bf16.gmra.mxu0 %v1256
        %v4042 = vpop.f32.mrf.mxu0
        %v4043 = vadd.f32 %v3954, %v4042
        %v4044 = vpop.f32.mrf.mxu0
        %v4045 = vadd.f32 %v3956, %v4044
        %4046 = vmatmul.bf16.gmra.mxu0 %v1275
        %v4047 = vpop.f32.mrf.mxu0
        %v4048 = vadd.f32 %v3959, %v4047
        %v4049 = vpop.f32.mrf.mxu0
        %v4050 = vadd.f32 %v3961, %v4049
        %4051 = vmatmul.bf16.gmra.mxu0 %v1294
        %v4052 = vpop.f32.mrf.mxu0
        %v4053 = vadd.f32 %v3964, %v4052
        %v4054 = vpop.f32.mrf.mxu0
        %v4055 = vadd.f32 %v3966, %v4054
        %4056 = vmatmul.bf16.gmra.mxu0 %v1313
        %v4057 = vpop.f32.mrf.mxu0
        %v4058 = vadd.f32 %v3969, %v4057
        %v4059 = vpop.f32.mrf.mxu0
        %v4060 = vadd.f32 %v3971, %v4059
        %4061 = vmatmul.bf16.gmra.mxu0 %v1332
        %v4062 = vpop.f32.mrf.mxu0
        %v4063 = vadd.f32 %v3974, %v4062
        %v4064 = vpop.f32.mrf.mxu0
        %v4065 = vadd.f32 %v3976, %v4064
        %4066 = vmatmul.bf16.gmra.mxu0 %v1351
        %v4067 = vpop.f32.mrf.mxu0
        %v4068 = vadd.f32 %v3979, %v4067
        %v4069 = vpop.f32.mrf.mxu0
        %v4070 = vadd.f32 %v3981, %v4069
        %4071 = vmatmul.bf16.gmra.mxu0 %v1370
        %v4072 = vpop.f32.mrf.mxu0
        %v4073 = vadd.f32 %v3984, %v4072
        %v4074 = vpop.f32.mrf.mxu0
        %v4075 = vadd.f32 %v3986, %v4074
        %4076 = vmatmul.bf16.gmra.mxu0 %v1389
        %v4077 = vpop.f32.mrf.mxu0
        %v4078 = vadd.f32 %v3989, %v4077
        %v4079 = vpop.f32.mrf.mxu0
        %v4080 = vadd.f32 %v3991, %v4079
        %4081 = vmatmul.bf16.gmra.mxu0 %v1408
        %v4082 = vpop.f32.mrf.mxu0
        %v4083 = vadd.f32 %v3994, %v4082
        %v4084 = vpop.f32.mrf.mxu0
        %v4085 = vadd.f32 %v3996, %v4084
        %4086 = vdwg.mxu0
        %4087 = vmatpush.bf16.msra.mxu0 %v2445
        %4088 = vmatpush.bf16.msra.mxu0 %v2444
        %4089 = vmatpush.bf16.msra.mxu0 %v2443
        %4090 = vmatpush.bf16.msra.mxu0 %v2442
        %4091 = vmatpush.bf16.msra.mxu0 %v2441
        %4092 = vmatpush.bf16.msra.mxu0 %v2440
        %4093 = vmatpush.bf16.msra.mxu0 %v2439
        %4094 = vmatpush.bf16.msra.mxu0 %v2438
        %4095 = vmatmul.bf16.gmra.mxu0 %v1124
        %v4096 = vpop.f32.mrf.mxu0
        %v4097 = vadd.f32 %v4008, %v4096
        %v4098 = vpop.f32.mrf.mxu0
        %v4099 = vadd.f32 %v4010, %v4098
        %4100 = vmatmul.bf16.gmra.mxu0 %v1143
        %v4101 = vpop.f32.mrf.mxu0
        %v4102 = vadd.f32 %v4013, %v4101
        %v4103 = vpop.f32.mrf.mxu0
        %v4104 = vadd.f32 %v4015, %v4103
        %4105 = vmatmul.bf16.gmra.mxu0 %v1162
        %v4106 = vpop.f32.mrf.mxu0
        %v4107 = vadd.f32 %v4018, %v4106
        %v4108 = vpop.f32.mrf.mxu0
        %v4109 = vadd.f32 %v4020, %v4108
        %4110 = vmatmul.bf16.gmra.mxu0 %v1181
        %v4111 = vpop.f32.mrf.mxu0
        %v4112 = vadd.f32 %v4023, %v4111
        %v4113 = vpop.f32.mrf.mxu0
        %v4114 = vadd.f32 %v4025, %v4113
        %4115 = vmatmul.bf16.gmra.mxu0 %v1200
        %v4116 = vpop.f32.mrf.mxu0
        %v4117 = vadd.f32 %v4028, %v4116
        %v4118 = vpop.f32.mrf.mxu0
        %v4119 = vadd.f32 %v4030, %v4118
        %4120 = vmatmul.bf16.gmra.mxu0 %v1219
        %v4121 = vpop.f32.mrf.mxu0
        %v4122 = vadd.f32 %v4033, %v4121
        %v4123 = vpop.f32.mrf.mxu0
        %v4124 = vadd.f32 %v4035, %v4123
        %4125 = vmatmul.bf16.gmra.mxu0 %v1238
        %v4126 = vpop.f32.mrf.mxu0
        %v4127 = vadd.f32 %v4038, %v4126
        %v4128 = vpop.f32.mrf.mxu0
        %v4129 = vadd.f32 %v4040, %v4128
        %4130 = vmatmul.bf16.gmra.mxu0 %v1257
        %v4131 = vpop.f32.mrf.mxu0
        %v4132 = vadd.f32 %v4043, %v4131
        %v4133 = vpop.f32.mrf.mxu0
        %v4134 = vadd.f32 %v4045, %v4133
        %4135 = vmatmul.bf16.gmra.mxu0 %v1276
        %v4136 = vpop.f32.mrf.mxu0
        %v4137 = vadd.f32 %v4048, %v4136
        %v4138 = vpop.f32.mrf.mxu0
        %v4139 = vadd.f32 %v4050, %v4138
        %4140 = vmatmul.bf16.gmra.mxu0 %v1295
        %v4141 = vpop.f32.mrf.mxu0
        %v4142 = vadd.f32 %v4053, %v4141
        %v4143 = vpop.f32.mrf.mxu0
        %v4144 = vadd.f32 %v4055, %v4143
        %4145 = vmatmul.bf16.gmra.mxu0 %v1314
        %v4146 = vpop.f32.mrf.mxu0
        %v4147 = vadd.f32 %v4058, %v4146
        %v4148 = vpop.f32.mrf.mxu0
        %v4149 = vadd.f32 %v4060, %v4148
        %4150 = vmatmul.bf16.gmra.mxu0 %v1333
        %v4151 = vpop.f32.mrf.mxu0
        %v4152 = vadd.f32 %v4063, %v4151
        %v4153 = vpop.f32.mrf.mxu0
        %v4154 = vadd.f32 %v4065, %v4153
        %4155 = vmatmul.bf16.gmra.mxu0 %v1352
        %v4156 = vpop.f32.mrf.mxu0
        %v4157 = vadd.f32 %v4068, %v4156
        %v4158 = vpop.f32.mrf.mxu0
        %v4159 = vadd.f32 %v4070, %v4158
        %4160 = vmatmul.bf16.gmra.mxu0 %v1371
        %v4161 = vpop.f32.mrf.mxu0
        %v4162 = vadd.f32 %v4073, %v4161
        %v4163 = vpop.f32.mrf.mxu0
        %v4164 = vadd.f32 %v4075, %v4163
        %4165 = vmatmul.bf16.gmra.mxu0 %v1390
        %v4166 = vpop.f32.mrf.mxu0
        %v4167 = vadd.f32 %v4078, %v4166
        %v4168 = vpop.f32.mrf.mxu0
        %v4169 = vadd.f32 %v4080, %v4168
        %4170 = vmatmul.bf16.gmra.mxu0 %v1409
        %v4171 = vpop.f32.mrf.mxu0
        %v4172 = vadd.f32 %v4083, %v4171
        %v4173 = vpop.f32.mrf.mxu0
        %v4174 = vadd.f32 %v4085, %v4173
        %4175 = vdwg.mxu0
        %4176 = vmatpush.bf16.msra.mxu0 %v2453
        %4177 = vmatpush.bf16.msra.mxu0 %v2452
        %4178 = vmatpush.bf16.msra.mxu0 %v2451
        %4179 = vmatpush.bf16.msra.mxu0 %v2450
        %4180 = vmatpush.bf16.msra.mxu0 %v2449
        %4181 = vmatpush.bf16.msra.mxu0 %v2448
        %4182 = vmatpush.bf16.msra.mxu0 %v2447
        %4183 = vmatpush.bf16.msra.mxu0 %v2446
        %4184 = vmatmul.bf16.gmra.mxu0 %v1125
        %v4185 = vpop.f32.mrf.mxu0
        %v4186 = vadd.f32 %v4097, %v4185
        %v4187 = vpop.f32.mrf.mxu0
        %v4188 = vadd.f32 %v4099, %v4187
        %4189 = vmatmul.bf16.gmra.mxu0 %v1144
        %v4190 = vpop.f32.mrf.mxu0
        %v4191 = vadd.f32 %v4102, %v4190
        %v4192 = vpop.f32.mrf.mxu0
        %v4193 = vadd.f32 %v4104, %v4192
        %4194 = vmatmul.bf16.gmra.mxu0 %v1163
        %v4195 = vpop.f32.mrf.mxu0
        %v4196 = vadd.f32 %v4107, %v4195
        %v4197 = vpop.f32.mrf.mxu0
        %v4198 = vadd.f32 %v4109, %v4197
        %4199 = vmatmul.bf16.gmra.mxu0 %v1182
        %v4200 = vpop.f32.mrf.mxu0
        %v4201 = vadd.f32 %v4112, %v4200
        %v4202 = vpop.f32.mrf.mxu0
        %v4203 = vadd.f32 %v4114, %v4202
        %4204 = vmatmul.bf16.gmra.mxu0 %v1201
        %v4205 = vpop.f32.mrf.mxu0
        %v4206 = vadd.f32 %v4117, %v4205
        %v4207 = vpop.f32.mrf.mxu0
        %v4208 = vadd.f32 %v4119, %v4207
        %4209 = vmatmul.bf16.gmra.mxu0 %v1220
        %v4210 = vpop.f32.mrf.mxu0
        %v4211 = vadd.f32 %v4122, %v4210
        %v4212 = vpop.f32.mrf.mxu0
        %v4213 = vadd.f32 %v4124, %v4212
        %4214 = vmatmul.bf16.gmra.mxu0 %v1239
        %v4215 = vpop.f32.mrf.mxu0
        %v4216 = vadd.f32 %v4127, %v4215
        %v4217 = vpop.f32.mrf.mxu0
        %v4218 = vadd.f32 %v4129, %v4217
        %4219 = vmatmul.bf16.gmra.mxu0 %v1258
        %v4220 = vpop.f32.mrf.mxu0
        %v4221 = vadd.f32 %v4132, %v4220
        %v4222 = vpop.f32.mrf.mxu0
        %v4223 = vadd.f32 %v4134, %v4222
        %4224 = vmatmul.bf16.gmra.mxu0 %v1277
        %v4225 = vpop.f32.mrf.mxu0
        %v4226 = vadd.f32 %v4137, %v4225
        %v4227 = vpop.f32.mrf.mxu0
        %v4228 = vadd.f32 %v4139, %v4227
        %4229 = vmatmul.bf16.gmra.mxu0 %v1296
        %v4230 = vpop.f32.mrf.mxu0
        %v4231 = vadd.f32 %v4142, %v4230
        %v4232 = vpop.f32.mrf.mxu0
        %v4233 = vadd.f32 %v4144, %v4232
        %4234 = vmatmul.bf16.gmra.mxu0 %v1315
        %v4235 = vpop.f32.mrf.mxu0
        %v4236 = vadd.f32 %v4147, %v4235
        %v4237 = vpop.f32.mrf.mxu0
        %v4238 = vadd.f32 %v4149, %v4237
        %4239 = vmatmul.bf16.gmra.mxu0 %v1334
        %v4240 = vpop.f32.mrf.mxu0
        %v4241 = vadd.f32 %v4152, %v4240
        %v4242 = vpop.f32.mrf.mxu0
        %v4243 = vadd.f32 %v4154, %v4242
        %4244 = vmatmul.bf16.gmra.mxu0 %v1353
        %v4245 = vpop.f32.mrf.mxu0
        %v4246 = vadd.f32 %v4157, %v4245
        %v4247 = vpop.f32.mrf.mxu0
        %v4248 = vadd.f32 %v4159, %v4247
        %4249 = vmatmul.bf16.gmra.mxu0 %v1372
        %v4250 = vpop.f32.mrf.mxu0
        %v4251 = vadd.f32 %v4162, %v4250
        %v4252 = vpop.f32.mrf.mxu0
        %v4253 = vadd.f32 %v4164, %v4252
        %4254 = vmatmul.bf16.gmra.mxu0 %v1391
        %v4255 = vpop.f32.mrf.mxu0
        %v4256 = vadd.f32 %v4167, %v4255
        %v4257 = vpop.f32.mrf.mxu0
        %v4258 = vadd.f32 %v4169, %v4257
        %4259 = vmatmul.bf16.gmra.mxu0 %v1410
        %v4260 = vpop.f32.mrf.mxu0
        %v4261 = vadd.f32 %v4172, %v4260
        %v4262 = vpop.f32.mrf.mxu0
        %v4263 = vadd.f32 %v4174, %v4262
        %4264 = vdwg.mxu0
        %4265 = vmatpush.bf16.msra.mxu0 0
        %4266 = vmatpush.bf16.msra.mxu0 0
        %4267 = vmatpush.bf16.msra.mxu0 0
        %4268 = vmatpush.bf16.msra.mxu0 %v2661
        %4269 = vmatpush.bf16.msra.mxu0 %v2457
        %4270 = vmatpush.bf16.msra.mxu0 %v2456
        %4271 = vmatpush.bf16.msra.mxu0 %v2455
        %4272 = vmatpush.bf16.msra.mxu0 %v2454
        %4273 = vmatmul.bf16.gmra.mxu0 %v2609
        %v4274 = vpop.f32.mrf.mxu0
        %v4275 = vadd.f32 %v4186, %v4274
        %v4276 = vpop.f32.mrf.mxu0
        %v4277 = vadd.f32 %v4188, %v4276
        %4278 = vmatmul.bf16.gmra.mxu0 %v2612
        %v4279 = vpop.f32.mrf.mxu0
        %v4280 = vadd.f32 %v4191, %v4279
        %v4281 = vpop.f32.mrf.mxu0
        %v4282 = vadd.f32 %v4193, %v4281
        %4283 = vmatmul.bf16.gmra.mxu0 %v2615
        %v4284 = vpop.f32.mrf.mxu0
        %v4285 = vadd.f32 %v4196, %v4284
        %v4286 = vpop.f32.mrf.mxu0
        %v4287 = vadd.f32 %v4198, %v4286
        %4288 = vmatmul.bf16.gmra.mxu0 %v2618
        %v4289 = vpop.f32.mrf.mxu0
        %v4290 = vadd.f32 %v4201, %v4289
        %v4291 = vpop.f32.mrf.mxu0
        %v4292 = vadd.f32 %v4203, %v4291
        %4293 = vmatmul.bf16.gmra.mxu0 %v2621
        %v4294 = vpop.f32.mrf.mxu0
        %v4295 = vadd.f32 %v4206, %v4294
        %v4296 = vpop.f32.mrf.mxu0
        %v4297 = vadd.f32 %v4208, %v4296
        %4298 = vmatmul.bf16.gmra.mxu0 %v2624
        %v4299 = vpop.f32.mrf.mxu0
        %v4300 = vadd.f32 %v4211, %v4299
        %v4301 = vpop.f32.mrf.mxu0
        %v4302 = vadd.f32 %v4213, %v4301
        %4303 = vmatmul.bf16.gmra.mxu0 %v2627
        %v4304 = vpop.f32.mrf.mxu0
        %v4305 = vadd.f32 %v4216, %v4304
        %v4306 = vpop.f32.mrf.mxu0
        %v4307 = vadd.f32 %v4218, %v4306
        %4308 = vmatmul.bf16.gmra.mxu0 %v2630
        %v4309 = vpop.f32.mrf.mxu0
        %v4310 = vadd.f32 %v4221, %v4309
        %v4311 = vpop.f32.mrf.mxu0
        %v4312 = vadd.f32 %v4223, %v4311
        %4313 = vmatmul.bf16.gmra.mxu0 %v2633
        %v4314 = vpop.f32.mrf.mxu0
        %v4315 = vadd.f32 %v4226, %v4314
        %v4316 = vpop.f32.mrf.mxu0
        %v4317 = vadd.f32 %v4228, %v4316
        %4318 = vmatmul.bf16.gmra.mxu0 %v2636
        %v4319 = vpop.f32.mrf.mxu0
        %v4320 = vadd.f32 %v4231, %v4319
        %v4321 = vpop.f32.mrf.mxu0
        %v4322 = vadd.f32 %v4233, %v4321
        %4323 = vmatmul.bf16.gmra.mxu0 %v2639
        %v4324 = vpop.f32.mrf.mxu0
        %v4325 = vadd.f32 %v4236, %v4324
        %v4326 = vpop.f32.mrf.mxu0
        %v4327 = vadd.f32 %v4238, %v4326
        %4328 = vmatmul.bf16.gmra.mxu0 %v2642
        %v4329 = vpop.f32.mrf.mxu0
        %v4330 = vadd.f32 %v4241, %v4329
        %v4331 = vpop.f32.mrf.mxu0
        %v4332 = vadd.f32 %v4243, %v4331
        %4333 = vmatmul.bf16.gmra.mxu0 %v2645
        %v4334 = vpop.f32.mrf.mxu0
        %v4335 = vadd.f32 %v4246, %v4334
        %v4336 = vpop.f32.mrf.mxu0
        %v4337 = vadd.f32 %v4248, %v4336
        %4338 = vmatmul.bf16.gmra.mxu0 %v2648
        %v4339 = vpop.f32.mrf.mxu0
        %v4340 = vadd.f32 %v4251, %v4339
        %v4341 = vpop.f32.mrf.mxu0
        %v4342 = vadd.f32 %v4253, %v4341
        %4343 = vmatmul.bf16.gmra.mxu0 %v2651
        %v4344 = vpop.f32.mrf.mxu0
        %v4345 = vadd.f32 %v4256, %v4344
        %v4346 = vpop.f32.mrf.mxu0
        %v4347 = vadd.f32 %v4258, %v4346
        %4348 = vmatmul.bf16.gmra.mxu0 %v2654
        %v4349 = vpop.f32.mrf.mxu0
        %v4350 = vadd.f32 %v4261, %v4349
        %v4351 = vpop.f32.mrf.mxu0
        %v4352 = vadd.f32 %v4263, %v4351
        %4353 = vdwg.mxu0
        %v4354 = vmax.f32 %v4275, 0.0
        %v4355 = vmax.f32 %v4277, 0.0
        %v4356 = vmax.f32 %v4280, 0.0
        %v4357 = vmax.f32 %v4282, 0.0
        %v4358 = vmax.f32 %v4285, 0.0
        %v4359 = vmax.f32 %v4287, 0.0
        %v4360 = vmax.f32 %v4290, 0.0
        %v4361 = vmax.f32 %v4292, 0.0
        %v4362 = vmax.f32 %v4295, 0.0
        %v4363 = vmax.f32 %v4297, 0.0
        %v4364 = vmax.f32 %v4300, 0.0
        %v4365 = vmax.f32 %v4302, 0.0
        %v4366 = vmax.f32 %v4305, 0.0
        %v4367 = vmax.f32 %v4307, 0.0
        %v4368 = vmax.f32 %v4310, 0.0
        %v4369 = vmax.f32 %v4312, 0.0
        %v4370 = vmax.f32 %v4315, 0.0
        %v4371 = vmax.f32 %v4317, 0.0
        %v4372 = vmax.f32 %v4320, 0.0
        %v4373 = vmax.f32 %v4322, 0.0
        %v4374 = vmax.f32 %v4325, 0.0
        %v4375 = vmax.f32 %v4327, 0.0
        %v4376 = vmax.f32 %v4330, 0.0
        %v4377 = vmax.f32 %v4332, 0.0
        %v4378 = vmax.f32 %v4335, 0.0
        %v4379 = vmax.f32 %v4337, 0.0
        %v4380 = vmax.f32 %v4340, 0.0
        %v4381 = vmax.f32 %v4342, 0.0
        %v4382 = vmax.f32 %v4345, 0.0
        %v4383 = vmax.f32 %v4347, 0.0
        %v4384 = vmax.f32 %v4350, 0.0
        %v4385 = vmax.f32 %v4352, 0.0
        %v4386 = vpack.c.bf16 %v4355, %v4354
        %v4387 = vpack.c.bf16 %v4357, %v4356
        %v4388 = vpack.c.bf16 %v4359, %v4358
        %v4389 = vpack.c.bf16 %v4361, %v4360
        %v4390 = vpack.c.bf16 %v4363, %v4362
        %v4391 = vpack.c.bf16 %v4365, %v4364
        %v4392 = vpack.c.bf16 %v4367, %v4366
        %v4393 = vpack.c.bf16 %v4369, %v4368
        %v4394 = vpack.c.bf16 %v4371, %v4370
        %v4395 = vpack.c.bf16 %v4373, %v4372
        %v4396 = vpack.c.bf16 %v4375, %v4374
        %v4397 = vpack.c.bf16 %v4377, %v4376
        %v4398 = vpack.c.bf16 %v4379, %v4378
        %v4399 = vpack.c.bf16 %v4381, %v4380
        %v4400 = vpack.c.bf16 %v4383, %v4382
        %v4401 = vpack.c.bf16 %v4385, %v4384
        %v4402 = vld [vmem:[%s3] sm:$0xf]
        %v4403 = vld [vmem:[%s3 + $0x4] sm:$0xf]
        %v4404 = vld [vmem:[%s3 + $0x8] sm:$0xf]
        %v4405 = vld [vmem:[%s3 + $0xc] sm:$0xf]
        %v4406 = vld [vmem:[%s3 + $0x10] sm:$0xf]
        %v4407 = vld [vmem:[%s3 + $0x14] sm:$0xf]
        %v4408 = vld [vmem:[%s3 + $0x18] sm:$0xf]
        %v4409 = vld [vmem:[%s3 + $0x1c] sm:$0xf]
        %v4410 = vld [vmem:[%s3 + $0x20] sm:$0xf]
        %v4411 = vld [vmem:[%s3 + $0x24] sm:$0xf]
        %v4412 = vld [vmem:[%s3 + $0x28] sm:$0xf]
        %v4413 = vld [vmem:[%s3 + $0x2c] sm:$0xf]
        %v4414 = vld [vmem:[%s3 + $0x30] sm:$0xf]
        %v4415 = vld [vmem:[%s3 + $0x34] sm:$0xf]
        %v4416 = vld [vmem:[%s3 + $0x38] sm:$0xf]
        %v4417 = vld [vmem:[%s3 + $0x3c] sm:$0xf]
        %v4434 = vunpack.c.l.b16 %v4402
        %v4435 = vunpack.c.l.b16 %v4403
        %v4436 = vunpack.c.l.b16 %v4404
        %v4437 = vunpack.c.l.b16 %v4405
        %v4438 = vunpack.c.l.b16 %v4406
        %v4439 = vunpack.c.l.b16 %v4407
        %v4440 = vunpack.c.l.b16 %v4408
        %v4441 = vunpack.c.l.b16 %v4409
        %v4442 = vunpack.c.l.b16 %v4410
        %v4443 = vunpack.c.l.b16 %v4411
        %v4444 = vunpack.c.l.b16 %v4412
        %v4445 = vunpack.c.l.b16 %v4413
        %v4446 = vunpack.c.l.b16 %v4414
        %v4447 = vunpack.c.l.b16 %v4415
        %v4448 = vunpack.c.l.b16 %v4416
        %v4449 = vunpack.c.l.b16 %v4417
        %v4450 = vpack.c.b16 %v4435, %v4434
        %v4451 = vpack.c.b16 %v4437, %v4436
        %v4452 = vpack.c.b16 %v4439, %v4438
        %v4453 = vpack.c.b16 %v4441, %v4440
        %v4454 = vpack.c.b16 %v4443, %v4442
        %v4455 = vpack.c.b16 %v4445, %v4444
        %v4456 = vpack.c.b16 %v4447, %v4446
        %v4457 = vpack.c.b16 %v4449, %v4448
        %4466 = vmatpush.bf16.msra.mxu0 %v4457
        %4467 = vmatpush.bf16.msra.mxu0 %v4456
        %4468 = vmatpush.bf16.msra.mxu0 %v4455
        %4469 = vmatpush.bf16.msra.mxu0 %v4454
        %4470 = vmatpush.bf16.msra.mxu0 %v4453
        %4471 = vmatpush.bf16.msra.mxu0 %v4452
        %4472 = vmatpush.bf16.msra.mxu0 %v4451
        %4473 = vmatpush.bf16.msra.mxu0 %v4450
        %4474 = vmatmul.bf16.gmra.mxu0 %v4386
        %v4475 = vpop.f32.mrf.mxu0
        %v4476 = vadd.f32 0.0, %v4475
        %v4477 = vpop.f32.mrf.mxu0
        %v4478 = vadd.f32 0.0, %v4477
        %4479 = vmatmul.bf16.gmra.mxu0 %v4387
        %v4480 = vpop.f32.mrf.mxu0
        %v4481 = vadd.f32 0.0, %v4480
        %v4482 = vpop.f32.mrf.mxu0
        %v4483 = vadd.f32 0.0, %v4482
        %4484 = vmatmul.bf16.gmra.mxu0 %v4388
        %v4485 = vpop.f32.mrf.mxu0
        %v4486 = vadd.f32 0.0, %v4485
        %v4487 = vpop.f32.mrf.mxu0
        %v4488 = vadd.f32 0.0, %v4487
        %4489 = vmatmul.bf16.gmra.mxu0 %v4389
        %v4490 = vpop.f32.mrf.mxu0
        %v4491 = vadd.f32 0.0, %v4490
        %v4492 = vpop.f32.mrf.mxu0
        %v4493 = vadd.f32 0.0, %v4492
        %4494 = vmatmul.bf16.gmra.mxu0 %v4390
        %v4495 = vpop.f32.mrf.mxu0
        %v4496 = vadd.f32 0.0, %v4495
        %v4497 = vpop.f32.mrf.mxu0
        %v4498 = vadd.f32 0.0, %v4497
        %4499 = vmatmul.bf16.gmra.mxu0 %v4391
        %v4500 = vpop.f32.mrf.mxu0
        %v4501 = vadd.f32 0.0, %v4500
        %v4502 = vpop.f32.mrf.mxu0
        %v4503 = vadd.f32 0.0, %v4502
        %4504 = vmatmul.bf16.gmra.mxu0 %v4392
        %v4505 = vpop.f32.mrf.mxu0
        %v4506 = vadd.f32 0.0, %v4505
        %v4507 = vpop.f32.mrf.mxu0
        %v4508 = vadd.f32 0.0, %v4507
        %4509 = vmatmul.bf16.gmra.mxu0 %v4393
        %v4510 = vpop.f32.mrf.mxu0
        %v4511 = vadd.f32 0.0, %v4510
        %v4512 = vpop.f32.mrf.mxu0
        %v4513 = vadd.f32 0.0, %v4512
        %4514 = vmatmul.bf16.gmra.mxu0 %v4394
        %v4515 = vpop.f32.mrf.mxu0
        %v4516 = vadd.f32 0.0, %v4515
        %v4517 = vpop.f32.mrf.mxu0
        %v4518 = vadd.f32 0.0, %v4517
        %4519 = vmatmul.bf16.gmra.mxu0 %v4395
        %v4520 = vpop.f32.mrf.mxu0
        %v4521 = vadd.f32 0.0, %v4520
        %v4522 = vpop.f32.mrf.mxu0
        %v4523 = vadd.f32 0.0, %v4522
        %4524 = vmatmul.bf16.gmra.mxu0 %v4396
        %v4525 = vpop.f32.mrf.mxu0
        %v4526 = vadd.f32 0.0, %v4525
        %v4527 = vpop.f32.mrf.mxu0
        %v4528 = vadd.f32 0.0, %v4527
        %4529 = vmatmul.bf16.gmra.mxu0 %v4397
        %v4530 = vpop.f32.mrf.mxu0
        %v4531 = vadd.f32 0.0, %v4530
        %v4532 = vpop.f32.mrf.mxu0
        %v4533 = vadd.f32 0.0, %v4532
        %4534 = vmatmul.bf16.gmra.mxu0 %v4398
        %v4535 = vpop.f32.mrf.mxu0
        %v4536 = vadd.f32 0.0, %v4535
        %v4537 = vpop.f32.mrf.mxu0
        %v4538 = vadd.f32 0.0, %v4537
        %4539 = vmatmul.bf16.gmra.mxu0 %v4399
        %v4540 = vpop.f32.mrf.mxu0
        %v4541 = vadd.f32 0.0, %v4540
        %v4542 = vpop.f32.mrf.mxu0
        %v4543 = vadd.f32 0.0, %v4542
        %4544 = vmatmul.bf16.gmra.mxu0 %v4400
        %v4545 = vpop.f32.mrf.mxu0
        %v4546 = vadd.f32 0.0, %v4545
        %v4547 = vpop.f32.mrf.mxu0
        %v4548 = vadd.f32 0.0, %v4547
        %4549 = vmatmul.bf16.gmra.mxu0 %v4401
        %v4550 = vpop.f32.mrf.mxu0
        %v4551 = vadd.f32 0.0, %v4550
        %v4552 = vpop.f32.mrf.mxu0
        %v4553 = vadd.f32 0.0, %v4552
        %4554 = vdwg.mxu0
        %v4555 = vld [vmem:[%s4] sm:$0x1]
        %v4557 = vperm.slane %v4555, 0
        %v4559 = vmul.f32 %v4476, %v4557
        %v4560 = vmul.f32 %v4478, %v4557
        %v4561 = vmul.f32 %v4481, %v4557
        %v4562 = vmul.f32 %v4483, %v4557
        %v4563 = vmul.f32 %v4486, %v4557
        %v4564 = vmul.f32 %v4488, %v4557
        %v4565 = vmul.f32 %v4491, %v4557
        %v4566 = vmul.f32 %v4493, %v4557
        %v4567 = vmul.f32 %v4496, %v4557
        %v4568 = vmul.f32 %v4498, %v4557
        %v4569 = vmul.f32 %v4501, %v4557
        %v4570 = vmul.f32 %v4503, %v4557
        %v4571 = vmul.f32 %v4506, %v4557
        %v4572 = vmul.f32 %v4508, %v4557
        %v4573 = vmul.f32 %v4511, %v4557
        %v4574 = vmul.f32 %v4513, %v4557
        %v4575 = vmul.f32 %v4516, %v4557
        %v4576 = vmul.f32 %v4518, %v4557
        %v4577 = vmul.f32 %v4521, %v4557
        %v4578 = vmul.f32 %v4523, %v4557
        %v4579 = vmul.f32 %v4526, %v4557
        %v4580 = vmul.f32 %v4528, %v4557
        %v4581 = vmul.f32 %v4531, %v4557
        %v4582 = vmul.f32 %v4533, %v4557
        %v4583 = vmul.f32 %v4536, %v4557
        %v4584 = vmul.f32 %v4538, %v4557
        %v4585 = vmul.f32 %v4541, %v4557
        %v4586 = vmul.f32 %v4543, %v4557
        %v4587 = vmul.f32 %v4546, %v4557
        %v4588 = vmul.f32 %v4548, %v4557
        %v4589 = vmul.f32 %v4551, %v4557
        %v4590 = vmul.f32 %v4553, %v4557
        %v4591 = vld [vmem:[%s5] sm:$0x1]
        %v4593 = vperm.slane %v4591, 0
        %v4595 = vadd.f32 %v4559, %v4593
        %v4596 = vadd.f32 %v4560, %v4593
        %v4597 = vadd.f32 %v4561, %v4593
        %v4598 = vadd.f32 %v4562, %v4593
        %v4599 = vadd.f32 %v4563, %v4593
        %v4600 = vadd.f32 %v4564, %v4593
        %v4601 = vadd.f32 %v4565, %v4593
        %v4602 = vadd.f32 %v4566, %v4593
        %v4603 = vadd.f32 %v4567, %v4593
        %v4604 = vadd.f32 %v4568, %v4593
        %v4605 = vadd.f32 %v4569, %v4593
        %v4606 = vadd.f32 %v4570, %v4593
        %v4607 = vadd.f32 %v4571, %v4593
        %v4608 = vadd.f32 %v4572, %v4593
        %v4609 = vadd.f32 %v4573, %v4593
        %v4610 = vadd.f32 %v4574, %v4593
        %v4611 = vadd.f32 %v4575, %v4593
        %v4612 = vadd.f32 %v4576, %v4593
        %v4613 = vadd.f32 %v4577, %v4593
        %v4614 = vadd.f32 %v4578, %v4593
        %v4615 = vadd.f32 %v4579, %v4593
        %v4616 = vadd.f32 %v4580, %v4593
        %v4617 = vadd.f32 %v4581, %v4593
        %v4618 = vadd.f32 %v4582, %v4593
        %v4619 = vadd.f32 %v4583, %v4593
        %v4620 = vadd.f32 %v4584, %v4593
        %v4621 = vadd.f32 %v4585, %v4593
        %v4622 = vadd.f32 %v4586, %v4593
        %v4623 = vadd.f32 %v4587, %v4593
        %v4624 = vadd.f32 %v4588, %v4593
        %v4625 = vadd.f32 %v4589, %v4593
        %v4626 = vadd.f32 %v4590, %v4593
        %v4627 = vmax.f32 %v4595, 0.0
        %v4628 = vmax.f32 %v4596, 0.0
        %v4629 = vmax.f32 %v4597, 0.0
        %v4630 = vmax.f32 %v4598, 0.0
        %v4631 = vmax.f32 %v4599, 0.0
        %v4632 = vmax.f32 %v4600, 0.0
        %v4633 = vmax.f32 %v4601, 0.0
        %v4634 = vmax.f32 %v4602, 0.0
        %v4635 = vmax.f32 %v4603, 0.0
        %v4636 = vmax.f32 %v4604, 0.0
        %v4637 = vmax.f32 %v4605, 0.0
        %v4638 = vmax.f32 %v4606, 0.0
        %v4639 = vmax.f32 %v4607, 0.0
        %v4640 = vmax.f32 %v4608, 0.0
        %v4641 = vmax.f32 %v4609, 0.0
        %v4642 = vmax.f32 %v4610, 0.0
        %v4643 = vmax.f32 %v4611, 0.0
        %v4644 = vmax.f32 %v4612, 0.0
        %v4645 = vmax.f32 %v4613, 0.0
        %v4646 = vmax.f32 %v4614, 0.0
        %v4647 = vmax.f32 %v4615, 0.0
        %v4648 = vmax.f32 %v4616, 0.0
        %v4649 = vmax.f32 %v4617, 0.0
        %v4650 = vmax.f32 %v4618, 0.0
        %v4651 = vmax.f32 %v4619, 0.0
        %v4652 = vmax.f32 %v4620, 0.0
        %v4653 = vmax.f32 %v4621, 0.0
        %v4654 = vmax.f32 %v4622, 0.0
        %v4655 = vmax.f32 %v4623, 0.0
        %v4656 = vmax.f32 %v4624, 0.0
        %v4657 = vmax.f32 %v4625, 0.0
        %v4658 = vmax.f32 %v4626, 0.0
        %v4659 = vpack.c.bf16 %v4628, %v4627
        %v4660 = vpack.c.bf16 %v4630, %v4629
        %v4661 = vpack.c.bf16 %v4632, %v4631
        %v4662 = vpack.c.bf16 %v4634, %v4633
        %v4663 = vpack.c.bf16 %v4636, %v4635
        %v4664 = vpack.c.bf16 %v4638, %v4637
        %v4665 = vpack.c.bf16 %v4640, %v4639
        %v4666 = vpack.c.bf16 %v4642, %v4641
        %v4667 = vpack.c.bf16 %v4644, %v4643
        %v4668 = vpack.c.bf16 %v4646, %v4645
        %v4669 = vpack.c.bf16 %v4648, %v4647
        %v4670 = vpack.c.bf16 %v4650, %v4649
        %v4671 = vpack.c.bf16 %v4652, %v4651
        %v4672 = vpack.c.bf16 %v4654, %v4653
        %v4673 = vpack.c.bf16 %v4656, %v4655
        %v4674 = vpack.c.bf16 %v4658, %v4657
        %v4675 = vld [vmem:[%s6] sm:$0xf]
        %v4676 = vld [vmem:[%s6 + $0x4] sm:$0xf]
        %v4677 = vld [vmem:[%s6 + $0x8] sm:$0xf]
        %v4678 = vld [vmem:[%s6 + $0xc] sm:$0xf]
        %v4679 = vld [vmem:[%s6 + $0x10] sm:$0xf]
        %v4680 = vld [vmem:[%s6 + $0x14] sm:$0xf]
        %v4681 = vld [vmem:[%s6 + $0x18] sm:$0xf]
        %v4682 = vld [vmem:[%s6 + $0x1c] sm:$0xf]
        %v4691 = vunpack.c.l.b16 %v4675
        %v4692 = vunpack.c.l.b16 %v4676
        %v4693 = vunpack.c.l.b16 %v4677
        %v4694 = vunpack.c.l.b16 %v4678
        %v4695 = vunpack.c.l.b16 %v4679
        %v4696 = vunpack.c.l.b16 %v4680
        %v4697 = vunpack.c.l.b16 %v4681
        %v4698 = vunpack.c.l.b16 %v4682
        %v4699 = vpack.c.b16 %v4692, %v4691
        %v4700 = vpack.c.b16 %v4694, %v4693
        %v4701 = vpack.c.b16 %v4696, %v4695
        %v4702 = vpack.c.b16 %v4698, %v4697
        %vm4707 = vcmask 523264
        %v4709 = vsel %vm4707, %v4659, 0
        %v4712 = vsel %vm4707, %v4660, 0
        %v4715 = vsel %vm4707, %v4661, 0
        %v4718 = vsel %vm4707, %v4662, 0
        %v4721 = vsel %vm4707, %v4663, 0
        %v4724 = vsel %vm4707, %v4664, 0
        %v4727 = vsel %vm4707, %v4665, 0
        %v4730 = vsel %vm4707, %v4666, 0
        %v4733 = vsel %vm4707, %v4667, 0
        %v4736 = vsel %vm4707, %v4668, 0
        %v4739 = vsel %vm4707, %v4669, 0
        %v4742 = vsel %vm4707, %v4670, 0
        %v4745 = vsel %vm4707, %v4671, 0
        %v4748 = vsel %vm4707, %v4672, 0
        %v4751 = vsel %vm4707, %v4673, 0
        %v4754 = vsel %vm4707, %v4674, 0
        %4756 = vmatpush.bf16.msra.mxu0 0
        %4757 = vmatpush.bf16.msra.mxu0 0
        %4758 = vmatpush.bf16.msra.mxu0 0
        %4759 = vmatpush.bf16.msra.mxu0 0
        %4760 = vmatpush.bf16.msra.mxu0 %v4702
        %4761 = vmatpush.bf16.msra.mxu0 %v4701
        %4762 = vmatpush.bf16.msra.mxu0 %v4700
        %4763 = vmatpush.bf16.msra.mxu0 %v4699
        %4764 = vmatmul.bf16.gmra.mxu0 %v4709
        %v4765 = vpop.f32.mrf.mxu0
        %v4766 = vadd.f32 0.0, %v4765
        %v4767 = vpop.f32.mrf.mxu0
        %v4768 = vadd.f32 0.0, %v4767
        %4769 = vmatmul.bf16.gmra.mxu0 %v4712
        %v4770 = vpop.f32.mrf.mxu0
        %v4771 = vadd.f32 0.0, %v4770
        %v4772 = vpop.f32.mrf.mxu0
        %v4773 = vadd.f32 0.0, %v4772
        %4774 = vmatmul.bf16.gmra.mxu0 %v4715
        %v4775 = vpop.f32.mrf.mxu0
        %v4776 = vadd.f32 0.0, %v4775
        %v4777 = vpop.f32.mrf.mxu0
        %v4778 = vadd.f32 0.0, %v4777
        %4779 = vmatmul.bf16.gmra.mxu0 %v4718
        %v4780 = vpop.f32.mrf.mxu0
        %v4781 = vadd.f32 0.0, %v4780
        %v4782 = vpop.f32.mrf.mxu0
        %v4783 = vadd.f32 0.0, %v4782
        %4784 = vmatmul.bf16.gmra.mxu0 %v4721
        %v4785 = vpop.f32.mrf.mxu0
        %v4786 = vadd.f32 0.0, %v4785
        %v4787 = vpop.f32.mrf.mxu0
        %v4788 = vadd.f32 0.0, %v4787
        %4789 = vmatmul.bf16.gmra.mxu0 %v4724
        %v4790 = vpop.f32.mrf.mxu0
        %v4791 = vadd.f32 0.0, %v4790
        %v4792 = vpop.f32.mrf.mxu0
        %v4793 = vadd.f32 0.0, %v4792
        %4794 = vmatmul.bf16.gmra.mxu0 %v4727
        %v4795 = vpop.f32.mrf.mxu0
        %v4796 = vadd.f32 0.0, %v4795
        %v4797 = vpop.f32.mrf.mxu0
        %v4798 = vadd.f32 0.0, %v4797
        %4799 = vmatmul.bf16.gmra.mxu0 %v4730
        %v4800 = vpop.f32.mrf.mxu0
        %v4801 = vadd.f32 0.0, %v4800
        %v4802 = vpop.f32.mrf.mxu0
        %v4803 = vadd.f32 0.0, %v4802
        %4804 = vmatmul.bf16.gmra.mxu0 %v4733
        %v4805 = vpop.f32.mrf.mxu0
        %v4806 = vadd.f32 0.0, %v4805
        %v4807 = vpop.f32.mrf.mxu0
        %v4808 = vadd.f32 0.0, %v4807
        %4809 = vmatmul.bf16.gmra.mxu0 %v4736
        %v4810 = vpop.f32.mrf.mxu0
        %v4811 = vadd.f32 0.0, %v4810
        %v4812 = vpop.f32.mrf.mxu0
        %v4813 = vadd.f32 0.0, %v4812
        %4814 = vmatmul.bf16.gmra.mxu0 %v4739
        %v4815 = vpop.f32.mrf.mxu0
        %v4816 = vadd.f32 0.0, %v4815
        %v4817 = vpop.f32.mrf.mxu0
        %v4818 = vadd.f32 0.0, %v4817
        %4819 = vmatmul.bf16.gmra.mxu0 %v4742
        %v4820 = vpop.f32.mrf.mxu0
        %v4821 = vadd.f32 0.0, %v4820
        %v4822 = vpop.f32.mrf.mxu0
        %v4823 = vadd.f32 0.0, %v4822
        %4824 = vmatmul.bf16.gmra.mxu0 %v4745
        %v4825 = vpop.f32.mrf.mxu0
        %v4826 = vadd.f32 0.0, %v4825
        %v4827 = vpop.f32.mrf.mxu0
        %v4828 = vadd.f32 0.0, %v4827
        %4829 = vmatmul.bf16.gmra.mxu0 %v4748
        %v4830 = vpop.f32.mrf.mxu0
        %v4831 = vadd.f32 0.0, %v4830
        %v4832 = vpop.f32.mrf.mxu0
        %v4833 = vadd.f32 0.0, %v4832
        %4834 = vmatmul.bf16.gmra.mxu0 %v4751
        %v4835 = vpop.f32.mrf.mxu0
        %v4836 = vadd.f32 0.0, %v4835
        %v4837 = vpop.f32.mrf.mxu0
        %v4838 = vadd.f32 0.0, %v4837
        %4839 = vmatmul.bf16.gmra.mxu0 %v4754
        %v4840 = vpop.f32.mrf.mxu0
        %v4841 = vadd.f32 0.0, %v4840
        %v4842 = vpop.f32.mrf.mxu0
        %v4843 = vadd.f32 0.0, %v4842
        %4844 = vdwg.mxu0
        %v4845 = vld [vmem:[%s7] sm:$0x1]
        %v4847 = vperm.slane %v4845, 0
        %v4849 = vmul.f32 %v4766, %v4847
        %v4850 = vmul.f32 %v4768, %v4847
        %v4851 = vmul.f32 %v4771, %v4847
        %v4852 = vmul.f32 %v4773, %v4847
        %v4853 = vmul.f32 %v4776, %v4847
        %v4854 = vmul.f32 %v4778, %v4847
        %v4855 = vmul.f32 %v4781, %v4847
        %v4856 = vmul.f32 %v4783, %v4847
        %v4857 = vmul.f32 %v4786, %v4847
        %v4858 = vmul.f32 %v4788, %v4847
        %v4859 = vmul.f32 %v4791, %v4847
        %v4860 = vmul.f32 %v4793, %v4847
        %v4861 = vmul.f32 %v4796, %v4847
        %v4862 = vmul.f32 %v4798, %v4847
        %v4863 = vmul.f32 %v4801, %v4847
        %v4864 = vmul.f32 %v4803, %v4847
        %v4865 = vmul.f32 %v4806, %v4847
        %v4866 = vmul.f32 %v4808, %v4847
        %v4867 = vmul.f32 %v4811, %v4847
        %v4868 = vmul.f32 %v4813, %v4847
        %v4869 = vmul.f32 %v4816, %v4847
        %v4870 = vmul.f32 %v4818, %v4847
        %v4871 = vmul.f32 %v4821, %v4847
        %v4872 = vmul.f32 %v4823, %v4847
        %v4873 = vmul.f32 %v4826, %v4847
        %v4874 = vmul.f32 %v4828, %v4847
        %v4875 = vmul.f32 %v4831, %v4847
        %v4876 = vmul.f32 %v4833, %v4847
        %v4877 = vmul.f32 %v4836, %v4847
        %v4878 = vmul.f32 %v4838, %v4847
        %v4879 = vmul.f32 %v4841, %v4847
        %v4880 = vmul.f32 %v4843, %v4847
        %v4881 = vld [vmem:[%s8] sm:$0x1]
        %v4883 = vperm.slane %v4881, 0
        %v4885 = vadd.f32 %v4849, %v4883
        %v4886 = vadd.f32 %v4850, %v4883
        %v4887 = vadd.f32 %v4851, %v4883
        %v4888 = vadd.f32 %v4852, %v4883
        %v4889 = vadd.f32 %v4853, %v4883
        %v4890 = vadd.f32 %v4854, %v4883
        %v4891 = vadd.f32 %v4855, %v4883
        %v4892 = vadd.f32 %v4856, %v4883
        %v4893 = vadd.f32 %v4857, %v4883
        %v4894 = vadd.f32 %v4858, %v4883
        %v4895 = vadd.f32 %v4859, %v4883
        %v4896 = vadd.f32 %v4860, %v4883
        %v4897 = vadd.f32 %v4861, %v4883
        %v4898 = vadd.f32 %v4862, %v4883
        %v4899 = vadd.f32 %v4863, %v4883
        %v4900 = vadd.f32 %v4864, %v4883
        %v4901 = vadd.f32 %v4865, %v4883
        %v4902 = vadd.f32 %v4866, %v4883
        %v4903 = vadd.f32 %v4867, %v4883
        %v4904 = vadd.f32 %v4868, %v4883
        %v4905 = vadd.f32 %v4869, %v4883
        %v4906 = vadd.f32 %v4870, %v4883
        %v4907 = vadd.f32 %v4871, %v4883
        %v4908 = vadd.f32 %v4872, %v4883
        %v4909 = vadd.f32 %v4873, %v4883
        %v4910 = vadd.f32 %v4874, %v4883
        %v4911 = vadd.f32 %v4875, %v4883
        %v4912 = vadd.f32 %v4876, %v4883
        %v4913 = vadd.f32 %v4877, %v4883
        %v4914 = vadd.f32 %v4878, %v4883
        %v4915 = vadd.f32 %v4879, %v4883
        %v4916 = vadd.f32 %v4880, %v4883
        %v4917 = vmax.f32 %v4885, 0.0
        %v4918 = vmax.f32 %v4886, 0.0
        %v4919 = vmax.f32 %v4887, 0.0
        %v4920 = vmax.f32 %v4888, 0.0
        %v4921 = vmax.f32 %v4889, 0.0
        %v4922 = vmax.f32 %v4890, 0.0
        %v4923 = vmax.f32 %v4891, 0.0
        %v4924 = vmax.f32 %v4892, 0.0
        %v4925 = vmax.f32 %v4893, 0.0
        %v4926 = vmax.f32 %v4894, 0.0
        %v4927 = vmax.f32 %v4895, 0.0
        %v4928 = vmax.f32 %v4896, 0.0
        %v4929 = vmax.f32 %v4897, 0.0
        %v4930 = vmax.f32 %v4898, 0.0
        %v4931 = vmax.f32 %v4899, 0.0
        %v4932 = vmax.f32 %v4900, 0.0
        %v4933 = vmax.f32 %v4901, 0.0
        %v4934 = vmax.f32 %v4902, 0.0
        %v4935 = vmax.f32 %v4903, 0.0
        %v4936 = vmax.f32 %v4904, 0.0
        %v4937 = vmax.f32 %v4905, 0.0
        %v4938 = vmax.f32 %v4906, 0.0
        %v4939 = vmax.f32 %v4907, 0.0
        %v4940 = vmax.f32 %v4908, 0.0
        %v4941 = vmax.f32 %v4909, 0.0
        %v4942 = vmax.f32 %v4910, 0.0
        %v4943 = vmax.f32 %v4911, 0.0
        %v4944 = vmax.f32 %v4912, 0.0
        %v4945 = vmax.f32 %v4913, 0.0
        %v4946 = vmax.f32 %v4914, 0.0
        %v4947 = vmax.f32 %v4915, 0.0
        %v4948 = vmax.f32 %v4916, 0.0
        %v4949 = vpack.c.bf16 %v4918, %v4917
        %v4950 = vpack.c.bf16 %v4920, %v4919
        %v4951 = vpack.c.bf16 %v4922, %v4921
        %v4952 = vpack.c.bf16 %v4924, %v4923
        %v4953 = vpack.c.bf16 %v4926, %v4925
        %v4954 = vpack.c.bf16 %v4928, %v4927
        %v4955 = vpack.c.bf16 %v4930, %v4929
        %v4956 = vpack.c.bf16 %v4932, %v4931
        %v4957 = vpack.c.bf16 %v4934, %v4933
        %v4958 = vpack.c.bf16 %v4936, %v4935
        %v4959 = vpack.c.bf16 %v4938, %v4937
        %v4960 = vpack.c.bf16 %v4940, %v4939
        %v4961 = vpack.c.bf16 %v4942, %v4941
        %v4962 = vpack.c.bf16 %v4944, %v4943
        %v4963 = vpack.c.bf16 %v4946, %v4945
        %v4964 = vpack.c.bf16 %v4948, %v4947
        %v4965 = vld [vmem:[%s9] sm:$0xf]
        %v4966 = vld [vmem:[%s9 + $0x4] sm:$0xf]
        %v4967 = vld [vmem:[%s9 + $0x8] sm:$0xf]
        %v4968 = vld [vmem:[%s9 + $0xc] sm:$0xf]
        %v4973 = vunpack.c.l.b16 %v4965
        %v4974 = vunpack.c.l.b16 %v4966
        %v4975 = vunpack.c.l.b16 %v4967
        %v4976 = vunpack.c.l.b16 %v4968
        %v4977 = vpack.c.b16 %v4974, %v4973
        %v4978 = vpack.c.b16 %v4976, %v4975
        %vm4981 = vcmask 261120
        %v4983 = vsel %vm4981, %v4949, 0
        %v4986 = vsel %vm4981, %v4950, 0
        %v4989 = vsel %vm4981, %v4951, 0
        %v4992 = vsel %vm4981, %v4952, 0
        %v4995 = vsel %vm4981, %v4953, 0
        %v4998 = vsel %vm4981, %v4954, 0
        %v5001 = vsel %vm4981, %v4955, 0
        %v5004 = vsel %vm4981, %v4956, 0
        %v5007 = vsel %vm4981, %v4957, 0
        %v5010 = vsel %vm4981, %v4958, 0
        %v5013 = vsel %vm4981, %v4959, 0
        %v5016 = vsel %vm4981, %v4960, 0
        %v5019 = vsel %vm4981, %v4961, 0
        %v5022 = vsel %vm4981, %v4962, 0
        %v5025 = vsel %vm4981, %v4963, 0
        %v5028 = vsel %vm4981, %v4964, 0
        %5030 = vmatpush.bf16.msra.mxu0 0
        %5031 = vmatpush.bf16.msra.mxu0 0
        %5032 = vmatpush.bf16.msra.mxu0 0
        %5033 = vmatpush.bf16.msra.mxu0 0
        %5034 = vmatpush.bf16.msra.mxu0 0
        %5035 = vmatpush.bf16.msra.mxu0 0
        %5036 = vmatpush.bf16.msra.mxu0 %v4978
        %5037 = vmatpush.bf16.msra.mxu0 %v4977
        %5038 = vmatmul.bf16.gmra.mxu0 %v4983
        %v5039 = vpop.f32.mrf.mxu0
        %v5040 = vadd.f32 0.0, %v5039
        %v5041 = vpop.f32.mrf.mxu0
        %v5042 = vadd.f32 0.0, %v5041
        %5043 = vmatmul.bf16.gmra.mxu0 %v4986
        %v5044 = vpop.f32.mrf.mxu0
        %v5045 = vadd.f32 0.0, %v5044
        %v5046 = vpop.f32.mrf.mxu0
        %v5047 = vadd.f32 0.0, %v5046
        %5048 = vmatmul.bf16.gmra.mxu0 %v4989
        %v5049 = vpop.f32.mrf.mxu0
        %v5050 = vadd.f32 0.0, %v5049
        %v5051 = vpop.f32.mrf.mxu0
        %v5052 = vadd.f32 0.0, %v5051
        %5053 = vmatmul.bf16.gmra.mxu0 %v4992
        %v5054 = vpop.f32.mrf.mxu0
        %v5055 = vadd.f32 0.0, %v5054
        %v5056 = vpop.f32.mrf.mxu0
        %v5057 = vadd.f32 0.0, %v5056
        %5058 = vmatmul.bf16.gmra.mxu0 %v4995
        %v5059 = vpop.f32.mrf.mxu0
        %v5060 = vadd.f32 0.0, %v5059
        %v5061 = vpop.f32.mrf.mxu0
        %v5062 = vadd.f32 0.0, %v5061
        %5063 = vmatmul.bf16.gmra.mxu0 %v4998
        %v5064 = vpop.f32.mrf.mxu0
        %v5065 = vadd.f32 0.0, %v5064
        %v5066 = vpop.f32.mrf.mxu0
        %v5067 = vadd.f32 0.0, %v5066
        %5068 = vmatmul.bf16.gmra.mxu0 %v5001
        %v5069 = vpop.f32.mrf.mxu0
        %v5070 = vadd.f32 0.0, %v5069
        %v5071 = vpop.f32.mrf.mxu0
        %v5072 = vadd.f32 0.0, %v5071
        %5073 = vmatmul.bf16.gmra.mxu0 %v5004
        %v5074 = vpop.f32.mrf.mxu0
        %v5075 = vadd.f32 0.0, %v5074
        %v5076 = vpop.f32.mrf.mxu0
        %v5077 = vadd.f32 0.0, %v5076
        %5078 = vmatmul.bf16.gmra.mxu0 %v5007
        %v5079 = vpop.f32.mrf.mxu0
        %v5080 = vadd.f32 0.0, %v5079
        %v5081 = vpop.f32.mrf.mxu0
        %v5082 = vadd.f32 0.0, %v5081
        %5083 = vmatmul.bf16.gmra.mxu0 %v5010
        %v5084 = vpop.f32.mrf.mxu0
        %v5085 = vadd.f32 0.0, %v5084
        %v5086 = vpop.f32.mrf.mxu0
        %v5087 = vadd.f32 0.0, %v5086
        %5088 = vmatmul.bf16.gmra.mxu0 %v5013
        %v5089 = vpop.f32.mrf.mxu0
        %v5090 = vadd.f32 0.0, %v5089
        %v5091 = vpop.f32.mrf.mxu0
        %v5092 = vadd.f32 0.0, %v5091
        %5093 = vmatmul.bf16.gmra.mxu0 %v5016
        %v5094 = vpop.f32.mrf.mxu0
        %v5095 = vadd.f32 0.0, %v5094
        %v5096 = vpop.f32.mrf.mxu0
        %v5097 = vadd.f32 0.0, %v5096
        %5098 = vmatmul.bf16.gmra.mxu0 %v5019
        %v5099 = vpop.f32.mrf.mxu0
        %v5100 = vadd.f32 0.0, %v5099
        %v5101 = vpop.f32.mrf.mxu0
        %v5102 = vadd.f32 0.0, %v5101
        %5103 = vmatmul.bf16.gmra.mxu0 %v5022
        %v5104 = vpop.f32.mrf.mxu0
        %v5105 = vadd.f32 0.0, %v5104
        %v5106 = vpop.f32.mrf.mxu0
        %v5107 = vadd.f32 0.0, %v5106
        %5108 = vmatmul.bf16.gmra.mxu0 %v5025
        %v5109 = vpop.f32.mrf.mxu0
        %v5110 = vadd.f32 0.0, %v5109
        %v5111 = vpop.f32.mrf.mxu0
        %v5112 = vadd.f32 0.0, %v5111
        %5113 = vmatmul.bf16.gmra.mxu0 %v5028
        %v5114 = vpop.f32.mrf.mxu0
        %v5115 = vadd.f32 0.0, %v5114
        %v5116 = vpop.f32.mrf.mxu0
        %v5117 = vadd.f32 0.0, %v5116
        %5118 = vdwg.mxu0
        %v5119 = vld [vmem:[%s10] sm:$0x1]
        %v5121 = vperm.slane %v5119, 0
        %v5123 = vmul.f32 %v5040, %v5121
        %v5124 = vmul.f32 %v5042, %v5121
        %v5125 = vmul.f32 %v5045, %v5121
        %v5126 = vmul.f32 %v5047, %v5121
        %v5127 = vmul.f32 %v5050, %v5121
        %v5128 = vmul.f32 %v5052, %v5121
        %v5129 = vmul.f32 %v5055, %v5121
        %v5130 = vmul.f32 %v5057, %v5121
        %v5131 = vmul.f32 %v5060, %v5121
        %v5132 = vmul.f32 %v5062, %v5121
        %v5133 = vmul.f32 %v5065, %v5121
        %v5134 = vmul.f32 %v5067, %v5121
        %v5135 = vmul.f32 %v5070, %v5121
        %v5136 = vmul.f32 %v5072, %v5121
        %v5137 = vmul.f32 %v5075, %v5121
        %v5138 = vmul.f32 %v5077, %v5121
        %v5139 = vmul.f32 %v5080, %v5121
        %v5140 = vmul.f32 %v5082, %v5121
        %v5141 = vmul.f32 %v5085, %v5121
        %v5142 = vmul.f32 %v5087, %v5121
        %v5143 = vmul.f32 %v5090, %v5121
        %v5144 = vmul.f32 %v5092, %v5121
        %v5145 = vmul.f32 %v5095, %v5121
        %v5146 = vmul.f32 %v5097, %v5121
        %v5147 = vmul.f32 %v5100, %v5121
        %v5148 = vmul.f32 %v5102, %v5121
        %v5149 = vmul.f32 %v5105, %v5121
        %v5150 = vmul.f32 %v5107, %v5121
        %v5151 = vmul.f32 %v5110, %v5121
        %v5152 = vmul.f32 %v5112, %v5121
        %v5153 = vmul.f32 %v5115, %v5121
        %v5154 = vmul.f32 %v5117, %v5121
        %v5155 = vld [vmem:[%s11] sm:$0x1]
        %v5157 = vperm.slane %v5155, 0
        %v5159 = vadd.f32 %v5123, %v5157
        %v5160 = vadd.f32 %v5124, %v5157
        %v5161 = vadd.f32 %v5125, %v5157
        %v5162 = vadd.f32 %v5126, %v5157
        %v5163 = vadd.f32 %v5127, %v5157
        %v5164 = vadd.f32 %v5128, %v5157
        %v5165 = vadd.f32 %v5129, %v5157
        %v5166 = vadd.f32 %v5130, %v5157
        %v5167 = vadd.f32 %v5131, %v5157
        %v5168 = vadd.f32 %v5132, %v5157
        %v5169 = vadd.f32 %v5133, %v5157
        %v5170 = vadd.f32 %v5134, %v5157
        %v5171 = vadd.f32 %v5135, %v5157
        %v5172 = vadd.f32 %v5136, %v5157
        %v5173 = vadd.f32 %v5137, %v5157
        %v5174 = vadd.f32 %v5138, %v5157
        %v5175 = vadd.f32 %v5139, %v5157
        %v5176 = vadd.f32 %v5140, %v5157
        %v5177 = vadd.f32 %v5141, %v5157
        %v5178 = vadd.f32 %v5142, %v5157
        %v5179 = vadd.f32 %v5143, %v5157
        %v5180 = vadd.f32 %v5144, %v5157
        %v5181 = vadd.f32 %v5145, %v5157
        %v5182 = vadd.f32 %v5146, %v5157
        %v5183 = vadd.f32 %v5147, %v5157
        %v5184 = vadd.f32 %v5148, %v5157
        %v5185 = vadd.f32 %v5149, %v5157
        %v5186 = vadd.f32 %v5150, %v5157
        %v5187 = vadd.f32 %v5151, %v5157
        %v5188 = vadd.f32 %v5152, %v5157
        %v5189 = vadd.f32 %v5153, %v5157
        %v5190 = vadd.f32 %v5154, %v5157
        %v5191 = vmax.f32 %v5159, 0.0
        %v5192 = vmax.f32 %v5160, 0.0
        %v5193 = vmax.f32 %v5161, 0.0
        %v5194 = vmax.f32 %v5162, 0.0
        %v5195 = vmax.f32 %v5163, 0.0
        %v5196 = vmax.f32 %v5164, 0.0
        %v5197 = vmax.f32 %v5165, 0.0
        %v5198 = vmax.f32 %v5166, 0.0
        %v5199 = vmax.f32 %v5167, 0.0
        %v5200 = vmax.f32 %v5168, 0.0
        %v5201 = vmax.f32 %v5169, 0.0
        %v5202 = vmax.f32 %v5170, 0.0
        %v5203 = vmax.f32 %v5171, 0.0
        %v5204 = vmax.f32 %v5172, 0.0
        %v5205 = vmax.f32 %v5173, 0.0
        %v5206 = vmax.f32 %v5174, 0.0
        %v5207 = vmax.f32 %v5175, 0.0
        %v5208 = vmax.f32 %v5176, 0.0
        %v5209 = vmax.f32 %v5177, 0.0
        %v5210 = vmax.f32 %v5178, 0.0
        %v5211 = vmax.f32 %v5179, 0.0
        %v5212 = vmax.f32 %v5180, 0.0
        %v5213 = vmax.f32 %v5181, 0.0
        %v5214 = vmax.f32 %v5182, 0.0
        %v5215 = vmax.f32 %v5183, 0.0
        %v5216 = vmax.f32 %v5184, 0.0
        %v5217 = vmax.f32 %v5185, 0.0
        %v5218 = vmax.f32 %v5186, 0.0
        %v5219 = vmax.f32 %v5187, 0.0
        %v5220 = vmax.f32 %v5188, 0.0
        %v5221 = vmax.f32 %v5189, 0.0
        %v5222 = vmax.f32 %v5190, 0.0
        %v5223 = vld [vmem:[%s12] sm:$0x1]
        %v5225 = vperm.slane %v5223, 0
        %v5227 = vmul.f32 %v5191, %v5225
        %v5228 = vmul.f32 %v5192, %v5225
        %v5229 = vmul.f32 %v5193, %v5225
        %v5230 = vmul.f32 %v5194, %v5225
        %v5231 = vmul.f32 %v5195, %v5225
        %v5232 = vmul.f32 %v5196, %v5225
        %v5233 = vmul.f32 %v5197, %v5225
        %v5234 = vmul.f32 %v5198, %v5225
        %v5235 = vmul.f32 %v5199, %v5225
        %v5236 = vmul.f32 %v5200, %v5225
        %v5237 = vmul.f32 %v5201, %v5225
        %v5238 = vmul.f32 %v5202, %v5225
        %v5239 = vmul.f32 %v5203, %v5225
        %v5240 = vmul.f32 %v5204, %v5225
        %v5241 = vmul.f32 %v5205, %v5225
        %v5242 = vmul.f32 %v5206, %v5225
        %v5243 = vmul.f32 %v5207, %v5225
        %v5244 = vmul.f32 %v5208, %v5225
        %v5245 = vmul.f32 %v5209, %v5225
        %v5246 = vmul.f32 %v5210, %v5225
        %v5247 = vmul.f32 %v5211, %v5225
        %v5248 = vmul.f32 %v5212, %v5225
        %v5249 = vmul.f32 %v5213, %v5225
        %v5250 = vmul.f32 %v5214, %v5225
        %v5251 = vmul.f32 %v5215, %v5225
        %v5252 = vmul.f32 %v5216, %v5225
        %v5253 = vmul.f32 %v5217, %v5225
        %v5254 = vmul.f32 %v5218, %v5225
        %v5255 = vmul.f32 %v5219, %v5225
        %v5256 = vmul.f32 %v5220, %v5225
        %v5257 = vmul.f32 %v5221, %v5225
        %v5258 = vmul.f32 %v5222, %v5225
        %vm5259 = vcmask 130048
        %v5260 = vsel %vm5259, %v5227, 0.0
        %5261 = vadd.xlane.f32.xlu0 %v5260
        %v5262 = vpop.xlane.xlu0 %5261
        %v5263 = vsel %vm5259, %v5228, 0.0
        %5264 = vadd.xlane.f32.xlu0 %v5263
        %v5265 = vpop.xlane.xlu0 %5264
        %v5266 = vsel %vm5259, %v5229, 0.0
        %5267 = vadd.xlane.f32.xlu0 %v5266
        %v5268 = vpop.xlane.xlu0 %5267
        %v5269 = vsel %vm5259, %v5230, 0.0
        %5270 = vadd.xlane.f32.xlu0 %v5269
        %v5271 = vpop.xlane.xlu0 %5270
        %v5272 = vsel %vm5259, %v5231, 0.0
        %5273 = vadd.xlane.f32.xlu0 %v5272
        %v5274 = vpop.xlane.xlu0 %5273
        %v5275 = vsel %vm5259, %v5232, 0.0
        %5276 = vadd.xlane.f32.xlu0 %v5275
        %v5277 = vpop.xlane.xlu0 %5276
        %v5278 = vsel %vm5259, %v5233, 0.0
        %5279 = vadd.xlane.f32.xlu0 %v5278
        %v5280 = vpop.xlane.xlu0 %5279
        %v5281 = vsel %vm5259, %v5234, 0.0
        %5282 = vadd.xlane.f32.xlu0 %v5281
        %v5283 = vpop.xlane.xlu0 %5282
        %v5284 = vsel %vm5259, %v5235, 0.0
        %5285 = vadd.xlane.f32.xlu0 %v5284
        %v5286 = vpop.xlane.xlu0 %5285
        %v5287 = vsel %vm5259, %v5236, 0.0
        %5288 = vadd.xlane.f32.xlu0 %v5287
        %v5289 = vpop.xlane.xlu0 %5288
        %v5290 = vsel %vm5259, %v5237, 0.0
        %5291 = vadd.xlane.f32.xlu0 %v5290
        %v5292 = vpop.xlane.xlu0 %5291
        %v5293 = vsel %vm5259, %v5238, 0.0
        %5294 = vadd.xlane.f32.xlu0 %v5293
        %v5295 = vpop.xlane.xlu0 %5294
        %v5296 = vsel %vm5259, %v5239, 0.0
        %5297 = vadd.xlane.f32.xlu0 %v5296
        %v5298 = vpop.xlane.xlu0 %5297
        %v5299 = vsel %vm5259, %v5240, 0.0
        %5300 = vadd.xlane.f32.xlu0 %v5299
        %v5301 = vpop.xlane.xlu0 %5300
        %v5302 = vsel %vm5259, %v5241, 0.0
        %5303 = vadd.xlane.f32.xlu0 %v5302
        %v5304 = vpop.xlane.xlu0 %5303
        %v5305 = vsel %vm5259, %v5242, 0.0
        %5306 = vadd.xlane.f32.xlu0 %v5305
        %v5307 = vpop.xlane.xlu0 %5306
        %v5308 = vsel %vm5259, %v5243, 0.0
        %5309 = vadd.xlane.f32.xlu0 %v5308
        %v5310 = vpop.xlane.xlu0 %5309
        %v5311 = vsel %vm5259, %v5244, 0.0
        %5312 = vadd.xlane.f32.xlu0 %v5311
        %v5313 = vpop.xlane.xlu0 %5312
        %v5314 = vsel %vm5259, %v5245, 0.0
        %5315 = vadd.xlane.f32.xlu0 %v5314
        %v5316 = vpop.xlane.xlu0 %5315
        %v5317 = vsel %vm5259, %v5246, 0.0
        %5318 = vadd.xlane.f32.xlu0 %v5317
        %v5319 = vpop.xlane.xlu0 %5318
        %v5320 = vsel %vm5259, %v5247, 0.0
        %5321 = vadd.xlane.f32.xlu0 %v5320
        %v5322 = vpop.xlane.xlu0 %5321
        %v5323 = vsel %vm5259, %v5248, 0.0
        %5324 = vadd.xlane.f32.xlu0 %v5323
        %v5325 = vpop.xlane.xlu0 %5324
        %v5326 = vsel %vm5259, %v5249, 0.0
        %5327 = vadd.xlane.f32.xlu0 %v5326
        %v5328 = vpop.xlane.xlu0 %5327
        %v5329 = vsel %vm5259, %v5250, 0.0
        %5330 = vadd.xlane.f32.xlu0 %v5329
        %v5331 = vpop.xlane.xlu0 %5330
        %v5332 = vsel %vm5259, %v5251, 0.0
        %5333 = vadd.xlane.f32.xlu0 %v5332
        %v5334 = vpop.xlane.xlu0 %5333
        %v5335 = vsel %vm5259, %v5252, 0.0
        %5336 = vadd.xlane.f32.xlu0 %v5335
        %v5337 = vpop.xlane.xlu0 %5336
        %v5338 = vsel %vm5259, %v5253, 0.0
        %5339 = vadd.xlane.f32.xlu0 %v5338
        %v5340 = vpop.xlane.xlu0 %5339
        %v5341 = vsel %vm5259, %v5254, 0.0
        %5342 = vadd.xlane.f32.xlu0 %v5341
        %v5343 = vpop.xlane.xlu0 %5342
        %v5344 = vsel %vm5259, %v5255, 0.0
        %5345 = vadd.xlane.f32.xlu0 %v5344
        %v5346 = vpop.xlane.xlu0 %5345
        %v5347 = vsel %vm5259, %v5256, 0.0
        %5348 = vadd.xlane.f32.xlu0 %v5347
        %v5349 = vpop.xlane.xlu0 %5348
        %v5350 = vsel %vm5259, %v5257, 0.0
        %5351 = vadd.xlane.f32.xlu0 %v5350
        %v5352 = vpop.xlane.xlu0 %5351
        %v5353 = vsel %vm5259, %v5258, 0.0
        %5354 = vadd.xlane.f32.xlu0 %v5353
        %v5355 = vpop.xlane.xlu0 %5354
        %v5356 = vld [vmem:[#allocation2] sm:$0x1]
        %v5358 = vperm.slane %v5356, 0
        %v5360 = vadd.f32 %v5262, %v5358
        %v5361 = vadd.f32 %v5265, %v5358
        %v5362 = vadd.f32 %v5268, %v5358
        %v5363 = vadd.f32 %v5271, %v5358
        %v5364 = vadd.f32 %v5274, %v5358
        %v5365 = vadd.f32 %v5277, %v5358
        %v5366 = vadd.f32 %v5280, %v5358
        %v5367 = vadd.f32 %v5283, %v5358
        %v5368 = vadd.f32 %v5286, %v5358
        %v5369 = vadd.f32 %v5289, %v5358
        %v5370 = vadd.f32 %v5292, %v5358
        %v5371 = vadd.f32 %v5295, %v5358
        %v5372 = vadd.f32 %v5298, %v5358
        %v5373 = vadd.f32 %v5301, %v5358
        %v5374 = vadd.f32 %v5304, %v5358
        %v5375 = vadd.f32 %v5307, %v5358
        %v5376 = vadd.f32 %v5310, %v5358
        %v5377 = vadd.f32 %v5313, %v5358
        %v5378 = vadd.f32 %v5316, %v5358
        %v5379 = vadd.f32 %v5319, %v5358
        %v5380 = vadd.f32 %v5322, %v5358
        %v5381 = vadd.f32 %v5325, %v5358
        %v5382 = vadd.f32 %v5328, %v5358
        %v5383 = vadd.f32 %v5331, %v5358
        %v5384 = vadd.f32 %v5334, %v5358
        %v5385 = vadd.f32 %v5337, %v5358
        %v5386 = vadd.f32 %v5340, %v5358
        %v5387 = vadd.f32 %v5343, %v5358
        %v5388 = vadd.f32 %v5346, %v5358
        %v5389 = vadd.f32 %v5349, %v5358
        %v5390 = vadd.f32 %v5352, %v5358
        %v5391 = vadd.f32 %v5355, %v5358
        %v5392 = vsub.f32 0.0, %v5360
        %v5393 = vsub.f32 0.0, %v5361
        %v5394 = vsub.f32 0.0, %v5362
        %v5395 = vsub.f32 0.0, %v5363
        %v5396 = vsub.f32 0.0, %v5364
        %v5397 = vsub.f32 0.0, %v5365
        %v5398 = vsub.f32 0.0, %v5366
        %v5399 = vsub.f32 0.0, %v5367
        %v5400 = vsub.f32 0.0, %v5368
        %v5401 = vsub.f32 0.0, %v5369
        %v5402 = vsub.f32 0.0, %v5370
        %v5403 = vsub.f32 0.0, %v5371
        %v5404 = vsub.f32 0.0, %v5372
        %v5405 = vsub.f32 0.0, %v5373
        %v5406 = vsub.f32 0.0, %v5374
        %v5407 = vsub.f32 0.0, %v5375
        %v5408 = vsub.f32 0.0, %v5376
        %v5409 = vsub.f32 0.0, %v5377
        %v5410 = vsub.f32 0.0, %v5378
        %v5411 = vsub.f32 0.0, %v5379
        %v5412 = vsub.f32 0.0, %v5380
        %v5413 = vsub.f32 0.0, %v5381
        %v5414 = vsub.f32 0.0, %v5382
        %v5415 = vsub.f32 0.0, %v5383
        %v5416 = vsub.f32 0.0, %v5384
        %v5417 = vsub.f32 0.0, %v5385
        %v5418 = vsub.f32 0.0, %v5386
        %v5419 = vsub.f32 0.0, %v5387
        %v5420 = vsub.f32 0.0, %v5388
        %v5421 = vsub.f32 0.0, %v5389
        %v5422 = vsub.f32 0.0, %v5390
        %v5423 = vsub.f32 0.0, %v5391
        %v5424 = vmul.f32 %v5392, 1.442695
        %v5425 = vpow.pop %v5424
        %v5426 = vmul.f32 %v5393, 1.442695
        %v5427 = vpow.pop %v5426
        %v5428 = vmul.f32 %v5394, 1.442695
        %v5429 = vpow.pop %v5428
        %v5430 = vmul.f32 %v5395, 1.442695
        %v5431 = vpow.pop %v5430
        %v5432 = vmul.f32 %v5396, 1.442695
        %v5433 = vpow.pop %v5432
        %v5434 = vmul.f32 %v5397, 1.442695
        %v5435 = vpow.pop %v5434
        %v5436 = vmul.f32 %v5398, 1.442695
        %v5437 = vpow.pop %v5436
        %v5438 = vmul.f32 %v5399, 1.442695
        %v5439 = vpow.pop %v5438
        %v5440 = vmul.f32 %v5400, 1.442695
        %v5441 = vpow.pop %v5440
        %v5442 = vmul.f32 %v5401, 1.442695
        %v5443 = vpow.pop %v5442
        %v5444 = vmul.f32 %v5402, 1.442695
        %v5445 = vpow.pop %v5444
        %v5446 = vmul.f32 %v5403, 1.442695
        %v5447 = vpow.pop %v5446
        %v5448 = vmul.f32 %v5404, 1.442695
        %v5449 = vpow.pop %v5448
        %v5450 = vmul.f32 %v5405, 1.442695
        %v5451 = vpow.pop %v5450
        %v5452 = vmul.f32 %v5406, 1.442695
        %v5453 = vpow.pop %v5452
        %v5454 = vmul.f32 %v5407, 1.442695
        %v5455 = vpow.pop %v5454
        %v5456 = vmul.f32 %v5408, 1.442695
        %v5457 = vpow.pop %v5456
        %v5458 = vmul.f32 %v5409, 1.442695
        %v5459 = vpow.pop %v5458
        %v5460 = vmul.f32 %v5410, 1.442695
        %v5461 = vpow.pop %v5460
        %v5462 = vmul.f32 %v5411, 1.442695
        %v5463 = vpow.pop %v5462
        %v5464 = vmul.f32 %v5412, 1.442695
        %v5465 = vpow.pop %v5464
        %v5466 = vmul.f32 %v5413, 1.442695
        %v5467 = vpow.pop %v5466
        %v5468 = vmul.f32 %v5414, 1.442695
        %v5469 = vpow.pop %v5468
        %v5470 = vmul.f32 %v5415, 1.442695
        %v5471 = vpow.pop %v5470
        %v5472 = vmul.f32 %v5416, 1.442695
        %v5473 = vpow.pop %v5472
        %v5474 = vmul.f32 %v5417, 1.442695
        %v5475 = vpow.pop %v5474
        %v5476 = vmul.f32 %v5418, 1.442695
        %v5477 = vpow.pop %v5476
        %v5478 = vmul.f32 %v5419, 1.442695
        %v5479 = vpow.pop %v5478
        %v5480 = vmul.f32 %v5420, 1.442695
        %v5481 = vpow.pop %v5480
        %v5482 = vmul.f32 %v5421, 1.442695
        %v5483 = vpow.pop %v5482
        %v5484 = vmul.f32 %v5422, 1.442695
        %v5485 = vpow.pop %v5484
        %v5486 = vmul.f32 %v5423, 1.442695
        %v5487 = vpow.pop %v5486
        %v5488 = vadd.f32 %v5425, 1.0
        %v5489 = vadd.f32 %v5427, 1.0
        %v5490 = vadd.f32 %v5429, 1.0
        %v5491 = vadd.f32 %v5431, 1.0
        %v5492 = vadd.f32 %v5433, 1.0
        %v5493 = vadd.f32 %v5435, 1.0
        %v5494 = vadd.f32 %v5437, 1.0
        %v5495 = vadd.f32 %v5439, 1.0
        %v5496 = vadd.f32 %v5441, 1.0
        %v5497 = vadd.f32 %v5443, 1.0
        %v5498 = vadd.f32 %v5445, 1.0
        %v5499 = vadd.f32 %v5447, 1.0
        %v5500 = vadd.f32 %v5449, 1.0
        %v5501 = vadd.f32 %v5451, 1.0
        %v5502 = vadd.f32 %v5453, 1.0
        %v5503 = vadd.f32 %v5455, 1.0
        %v5504 = vadd.f32 %v5457, 1.0
        %v5505 = vadd.f32 %v5459, 1.0
        %v5506 = vadd.f32 %v5461, 1.0
        %v5507 = vadd.f32 %v5463, 1.0
        %v5508 = vadd.f32 %v5465, 1.0
        %v5509 = vadd.f32 %v5467, 1.0
        %v5510 = vadd.f32 %v5469, 1.0
        %v5511 = vadd.f32 %v5471, 1.0
        %v5512 = vadd.f32 %v5473, 1.0
        %v5513 = vadd.f32 %v5475, 1.0
        %v5514 = vadd.f32 %v5477, 1.0
        %v5515 = vadd.f32 %v5479, 1.0
        %v5516 = vadd.f32 %v5481, 1.0
        %v5517 = vadd.f32 %v5483, 1.0
        %v5518 = vadd.f32 %v5485, 1.0
        %v5519 = vadd.f32 %v5487, 1.0
        %v5520 = vrcp.pop %v5488
        %v5521 = vmul.f32 %v5488, %v5520
        %v5522 = vsub.f32 1.0, %v5521
        %v5523 = vmul.f32 %v5520, %v5522
        %v5524 = vadd.f32 %v5520, %v5523
        %vm5525 = vweird.f32 %v5488
        %vm5526 = vweird.f32 %v5520
        %vm5527 = vmor %vm5525, %vm5526
        %v5528 = vsel %vm5527, %v5520, %v5524
        %v5529 = vand.u32 2147483647, %v5488
        %vm5530 = vcmp.eq.f32.partialorder %v5529, 8.507059e+37
        %v5531 = vand.u32 %v5488, 2147483648
        %v5532 = vor.u32 1.1754944e-38, %v5531
        %v5533 = vsel %vm5530, %v5532, %v5528
        %v5534 = vmul.f32 1.0, %v5533
        %v5535 = vrcp.pop %v5489
        %v5536 = vmul.f32 %v5489, %v5535
        %v5537 = vsub.f32 1.0, %v5536
        %v5538 = vmul.f32 %v5535, %v5537
        %v5539 = vadd.f32 %v5535, %v5538
        %vm5540 = vweird.f32 %v5489
        %vm5541 = vweird.f32 %v5535
        %vm5542 = vmor %vm5540, %vm5541
        %v5543 = vsel %vm5542, %v5535, %v5539
        %v5544 = vand.u32 2147483647, %v5489
        %vm5545 = vcmp.eq.f32.partialorder %v5544, 8.507059e+37
        %v5546 = vand.u32 %v5489, 2147483648
        %v5547 = vor.u32 1.1754944e-38, %v5546
        %v5548 = vsel %vm5545, %v5547, %v5543
        %v5549 = vmul.f32 1.0, %v5548
        %v5550 = vrcp.pop %v5490
        %v5551 = vmul.f32 %v5490, %v5550
        %v5552 = vsub.f32 1.0, %v5551
        %v5553 = vmul.f32 %v5550, %v5552
        %v5554 = vadd.f32 %v5550, %v5553
        %vm5555 = vweird.f32 %v5490
        %vm5556 = vweird.f32 %v5550
        %vm5557 = vmor %vm5555, %vm5556
        %v5558 = vsel %vm5557, %v5550, %v5554
        %v5559 = vand.u32 2147483647, %v5490
        %vm5560 = vcmp.eq.f32.partialorder %v5559, 8.507059e+37
        %v5561 = vand.u32 %v5490, 2147483648
        %v5562 = vor.u32 1.1754944e-38, %v5561
        %v5563 = vsel %vm5560, %v5562, %v5558
        %v5564 = vmul.f32 1.0, %v5563
        %v5565 = vrcp.pop %v5491
        %v5566 = vmul.f32 %v5491, %v5565
        %v5567 = vsub.f32 1.0, %v5566
        %v5568 = vmul.f32 %v5565, %v5567
        %v5569 = vadd.f32 %v5565, %v5568
        %vm5570 = vweird.f32 %v5491
        %vm5571 = vweird.f32 %v5565
        %vm5572 = vmor %vm5570, %vm5571
        %v5573 = vsel %vm5572, %v5565, %v5569
        %v5574 = vand.u32 2147483647, %v5491
        %vm5575 = vcmp.eq.f32.partialorder %v5574, 8.507059e+37
        %v5576 = vand.u32 %v5491, 2147483648
        %v5577 = vor.u32 1.1754944e-38, %v5576
        %v5578 = vsel %vm5575, %v5577, %v5573
        %v5579 = vmul.f32 1.0, %v5578
        %v5580 = vrcp.pop %v5492
        %v5581 = vmul.f32 %v5492, %v5580
        %v5582 = vsub.f32 1.0, %v5581
        %v5583 = vmul.f32 %v5580, %v5582
        %v5584 = vadd.f32 %v5580, %v5583
        %vm5585 = vweird.f32 %v5492
        %vm5586 = vweird.f32 %v5580
        %vm5587 = vmor %vm5585, %vm5586
        %v5588 = vsel %vm5587, %v5580, %v5584
        %v5589 = vand.u32 2147483647, %v5492
        %vm5590 = vcmp.eq.f32.partialorder %v5589, 8.507059e+37
        %v5591 = vand.u32 %v5492, 2147483648
        %v5592 = vor.u32 1.1754944e-38, %v5591
        %v5593 = vsel %vm5590, %v5592, %v5588
        %v5594 = vmul.f32 1.0, %v5593
        %v5595 = vrcp.pop %v5493
        %v5596 = vmul.f32 %v5493, %v5595
        %v5597 = vsub.f32 1.0, %v5596
        %v5598 = vmul.f32 %v5595, %v5597
        %v5599 = vadd.f32 %v5595, %v5598
        %vm5600 = vweird.f32 %v5493
        %vm5601 = vweird.f32 %v5595
        %vm5602 = vmor %vm5600, %vm5601
        %v5603 = vsel %vm5602, %v5595, %v5599
        %v5604 = vand.u32 2147483647, %v5493
        %vm5605 = vcmp.eq.f32.partialorder %v5604, 8.507059e+37
        %v5606 = vand.u32 %v5493, 2147483648
        %v5607 = vor.u32 1.1754944e-38, %v5606
        %v5608 = vsel %vm5605, %v5607, %v5603
        %v5609 = vmul.f32 1.0, %v5608
        %v5610 = vrcp.pop %v5494
        %v5611 = vmul.f32 %v5494, %v5610
        %v5612 = vsub.f32 1.0, %v5611
        %v5613 = vmul.f32 %v5610, %v5612
        %v5614 = vadd.f32 %v5610, %v5613
        %vm5615 = vweird.f32 %v5494
        %vm5616 = vweird.f32 %v5610
        %vm5617 = vmor %vm5615, %vm5616
        %v5618 = vsel %vm5617, %v5610, %v5614
        %v5619 = vand.u32 2147483647, %v5494
        %vm5620 = vcmp.eq.f32.partialorder %v5619, 8.507059e+37
        %v5621 = vand.u32 %v5494, 2147483648
        %v5622 = vor.u32 1.1754944e-38, %v5621
        %v5623 = vsel %vm5620, %v5622, %v5618
        %v5624 = vmul.f32 1.0, %v5623
        %v5625 = vrcp.pop %v5495
        %v5626 = vmul.f32 %v5495, %v5625
        %v5627 = vsub.f32 1.0, %v5626
        %v5628 = vmul.f32 %v5625, %v5627
        %v5629 = vadd.f32 %v5625, %v5628
        %vm5630 = vweird.f32 %v5495
        %vm5631 = vweird.f32 %v5625
        %vm5632 = vmor %vm5630, %vm5631
        %v5633 = vsel %vm5632, %v5625, %v5629
        %v5634 = vand.u32 2147483647, %v5495
        %vm5635 = vcmp.eq.f32.partialorder %v5634, 8.507059e+37
        %v5636 = vand.u32 %v5495, 2147483648
        %v5637 = vor.u32 1.1754944e-38, %v5636
        %v5638 = vsel %vm5635, %v5637, %v5633
        %v5639 = vmul.f32 1.0, %v5638
        %v5640 = vrcp.pop %v5496
        %v5641 = vmul.f32 %v5496, %v5640
        %v5642 = vsub.f32 1.0, %v5641
        %v5643 = vmul.f32 %v5640, %v5642
        %v5644 = vadd.f32 %v5640, %v5643
        %vm5645 = vweird.f32 %v5496
        %vm5646 = vweird.f32 %v5640
        %vm5647 = vmor %vm5645, %vm5646
        %v5648 = vsel %vm5647, %v5640, %v5644
        %v5649 = vand.u32 2147483647, %v5496
        %vm5650 = vcmp.eq.f32.partialorder %v5649, 8.507059e+37
        %v5651 = vand.u32 %v5496, 2147483648
        %v5652 = vor.u32 1.1754944e-38, %v5651
        %v5653 = vsel %vm5650, %v5652, %v5648
        %v5654 = vmul.f32 1.0, %v5653
        %v5655 = vrcp.pop %v5497
        %v5656 = vmul.f32 %v5497, %v5655
        %v5657 = vsub.f32 1.0, %v5656
        %v5658 = vmul.f32 %v5655, %v5657
        %v5659 = vadd.f32 %v5655, %v5658
        %vm5660 = vweird.f32 %v5497
        %vm5661 = vweird.f32 %v5655
        %vm5662 = vmor %vm5660, %vm5661
        %v5663 = vsel %vm5662, %v5655, %v5659
        %v5664 = vand.u32 2147483647, %v5497
        %vm5665 = vcmp.eq.f32.partialorder %v5664, 8.507059e+37
        %v5666 = vand.u32 %v5497, 2147483648
        %v5667 = vor.u32 1.1754944e-38, %v5666
        %v5668 = vsel %vm5665, %v5667, %v5663
        %v5669 = vmul.f32 1.0, %v5668
        %v5670 = vrcp.pop %v5498
        %v5671 = vmul.f32 %v5498, %v5670
        %v5672 = vsub.f32 1.0, %v5671
        %v5673 = vmul.f32 %v5670, %v5672
        %v5674 = vadd.f32 %v5670, %v5673
        %vm5675 = vweird.f32 %v5498
        %vm5676 = vweird.f32 %v5670
        %vm5677 = vmor %vm5675, %vm5676
        %v5678 = vsel %vm5677, %v5670, %v5674
        %v5679 = vand.u32 2147483647, %v5498
        %vm5680 = vcmp.eq.f32.partialorder %v5679, 8.507059e+37
        %v5681 = vand.u32 %v5498, 2147483648
        %v5682 = vor.u32 1.1754944e-38, %v5681
        %v5683 = vsel %vm5680, %v5682, %v5678
        %v5684 = vmul.f32 1.0, %v5683
        %v5685 = vrcp.pop %v5499
        %v5686 = vmul.f32 %v5499, %v5685
        %v5687 = vsub.f32 1.0, %v5686
        %v5688 = vmul.f32 %v5685, %v5687
        %v5689 = vadd.f32 %v5685, %v5688
        %vm5690 = vweird.f32 %v5499
        %vm5691 = vweird.f32 %v5685
        %vm5692 = vmor %vm5690, %vm5691
        %v5693 = vsel %vm5692, %v5685, %v5689
        %v5694 = vand.u32 2147483647, %v5499
        %vm5695 = vcmp.eq.f32.partialorder %v5694, 8.507059e+37
        %v5696 = vand.u32 %v5499, 2147483648
        %v5697 = vor.u32 1.1754944e-38, %v5696
        %v5698 = vsel %vm5695, %v5697, %v5693
        %v5699 = vmul.f32 1.0, %v5698
        %v5700 = vrcp.pop %v5500
        %v5701 = vmul.f32 %v5500, %v5700
        %v5702 = vsub.f32 1.0, %v5701
        %v5703 = vmul.f32 %v5700, %v5702
        %v5704 = vadd.f32 %v5700, %v5703
        %vm5705 = vweird.f32 %v5500
        %vm5706 = vweird.f32 %v5700
        %vm5707 = vmor %vm5705, %vm5706
        %v5708 = vsel %vm5707, %v5700, %v5704
        %v5709 = vand.u32 2147483647, %v5500
        %vm5710 = vcmp.eq.f32.partialorder %v5709, 8.507059e+37
        %v5711 = vand.u32 %v5500, 2147483648
        %v5712 = vor.u32 1.1754944e-38, %v5711
        %v5713 = vsel %vm5710, %v5712, %v5708
        %v5714 = vmul.f32 1.0, %v5713
        %v5715 = vrcp.pop %v5501
        %v5716 = vmul.f32 %v5501, %v5715
        %v5717 = vsub.f32 1.0, %v5716
        %v5718 = vmul.f32 %v5715, %v5717
        %v5719 = vadd.f32 %v5715, %v5718
        %vm5720 = vweird.f32 %v5501
        %vm5721 = vweird.f32 %v5715
        %vm5722 = vmor %vm5720, %vm5721
        %v5723 = vsel %vm5722, %v5715, %v5719
        %v5724 = vand.u32 2147483647, %v5501
        %vm5725 = vcmp.eq.f32.partialorder %v5724, 8.507059e+37
        %v5726 = vand.u32 %v5501, 2147483648
        %v5727 = vor.u32 1.1754944e-38, %v5726
        %v5728 = vsel %vm5725, %v5727, %v5723
        %v5729 = vmul.f32 1.0, %v5728
        %v5730 = vrcp.pop %v5502
        %v5731 = vmul.f32 %v5502, %v5730
        %v5732 = vsub.f32 1.0, %v5731
        %v5733 = vmul.f32 %v5730, %v5732
        %v5734 = vadd.f32 %v5730, %v5733
        %vm5735 = vweird.f32 %v5502
        %vm5736 = vweird.f32 %v5730
        %vm5737 = vmor %vm5735, %vm5736
        %v5738 = vsel %vm5737, %v5730, %v5734
        %v5739 = vand.u32 2147483647, %v5502
        %vm5740 = vcmp.eq.f32.partialorder %v5739, 8.507059e+37
        %v5741 = vand.u32 %v5502, 2147483648
        %v5742 = vor.u32 1.1754944e-38, %v5741
        %v5743 = vsel %vm5740, %v5742, %v5738
        %v5744 = vmul.f32 1.0, %v5743
        %v5745 = vrcp.pop %v5503
        %v5746 = vmul.f32 %v5503, %v5745
        %v5747 = vsub.f32 1.0, %v5746
        %v5748 = vmul.f32 %v5745, %v5747
        %v5749 = vadd.f32 %v5745, %v5748
        %vm5750 = vweird.f32 %v5503
        %vm5751 = vweird.f32 %v5745
        %vm5752 = vmor %vm5750, %vm5751
        %v5753 = vsel %vm5752, %v5745, %v5749
        %v5754 = vand.u32 2147483647, %v5503
        %vm5755 = vcmp.eq.f32.partialorder %v5754, 8.507059e+37
        %v5756 = vand.u32 %v5503, 2147483648
        %v5757 = vor.u32 1.1754944e-38, %v5756
        %v5758 = vsel %vm5755, %v5757, %v5753
        %v5759 = vmul.f32 1.0, %v5758
        %v5760 = vrcp.pop %v5504
        %v5761 = vmul.f32 %v5504, %v5760
        %v5762 = vsub.f32 1.0, %v5761
        %v5763 = vmul.f32 %v5760, %v5762
        %v5764 = vadd.f32 %v5760, %v5763
        %vm5765 = vweird.f32 %v5504
        %vm5766 = vweird.f32 %v5760
        %vm5767 = vmor %vm5765, %vm5766
        %v5768 = vsel %vm5767, %v5760, %v5764
        %v5769 = vand.u32 2147483647, %v5504
        %vm5770 = vcmp.eq.f32.partialorder %v5769, 8.507059e+37
        %v5771 = vand.u32 %v5504, 2147483648
        %v5772 = vor.u32 1.1754944e-38, %v5771
        %v5773 = vsel %vm5770, %v5772, %v5768
        %v5774 = vmul.f32 1.0, %v5773
        %v5775 = vrcp.pop %v5505
        %v5776 = vmul.f32 %v5505, %v5775
        %v5777 = vsub.f32 1.0, %v5776
        %v5778 = vmul.f32 %v5775, %v5777
        %v5779 = vadd.f32 %v5775, %v5778
        %vm5780 = vweird.f32 %v5505
        %vm5781 = vweird.f32 %v5775
        %vm5782 = vmor %vm5780, %vm5781
        %v5783 = vsel %vm5782, %v5775, %v5779
        %v5784 = vand.u32 2147483647, %v5505
        %vm5785 = vcmp.eq.f32.partialorder %v5784, 8.507059e+37
        %v5786 = vand.u32 %v5505, 2147483648
        %v5787 = vor.u32 1.1754944e-38, %v5786
        %v5788 = vsel %vm5785, %v5787, %v5783
        %v5789 = vmul.f32 1.0, %v5788
        %v5790 = vrcp.pop %v5506
        %v5791 = vmul.f32 %v5506, %v5790
        %v5792 = vsub.f32 1.0, %v5791
        %v5793 = vmul.f32 %v5790, %v5792
        %v5794 = vadd.f32 %v5790, %v5793
        %vm5795 = vweird.f32 %v5506
        %vm5796 = vweird.f32 %v5790
        %vm5797 = vmor %vm5795, %vm5796
        %v5798 = vsel %vm5797, %v5790, %v5794
        %v5799 = vand.u32 2147483647, %v5506
        %vm5800 = vcmp.eq.f32.partialorder %v5799, 8.507059e+37
        %v5801 = vand.u32 %v5506, 2147483648
        %v5802 = vor.u32 1.1754944e-38, %v5801
        %v5803 = vsel %vm5800, %v5802, %v5798
        %v5804 = vmul.f32 1.0, %v5803
        %v5805 = vrcp.pop %v5507
        %v5806 = vmul.f32 %v5507, %v5805
        %v5807 = vsub.f32 1.0, %v5806
        %v5808 = vmul.f32 %v5805, %v5807
        %v5809 = vadd.f32 %v5805, %v5808
        %vm5810 = vweird.f32 %v5507
        %vm5811 = vweird.f32 %v5805
        %vm5812 = vmor %vm5810, %vm5811
        %v5813 = vsel %vm5812, %v5805, %v5809
        %v5814 = vand.u32 2147483647, %v5507
        %vm5815 = vcmp.eq.f32.partialorder %v5814, 8.507059e+37
        %v5816 = vand.u32 %v5507, 2147483648
        %v5817 = vor.u32 1.1754944e-38, %v5816
        %v5818 = vsel %vm5815, %v5817, %v5813
        %v5819 = vmul.f32 1.0, %v5818
        %v5820 = vrcp.pop %v5508
        %v5821 = vmul.f32 %v5508, %v5820
        %v5822 = vsub.f32 1.0, %v5821
        %v5823 = vmul.f32 %v5820, %v5822
        %v5824 = vadd.f32 %v5820, %v5823
        %vm5825 = vweird.f32 %v5508
        %vm5826 = vweird.f32 %v5820
        %vm5827 = vmor %vm5825, %vm5826
        %v5828 = vsel %vm5827, %v5820, %v5824
        %v5829 = vand.u32 2147483647, %v5508
        %vm5830 = vcmp.eq.f32.partialorder %v5829, 8.507059e+37
        %v5831 = vand.u32 %v5508, 2147483648
        %v5832 = vor.u32 1.1754944e-38, %v5831
        %v5833 = vsel %vm5830, %v5832, %v5828
        %v5834 = vmul.f32 1.0, %v5833
        %v5835 = vrcp.pop %v5509
        %v5836 = vmul.f32 %v5509, %v5835
        %v5837 = vsub.f32 1.0, %v5836
        %v5838 = vmul.f32 %v5835, %v5837
        %v5839 = vadd.f32 %v5835, %v5838
        %vm5840 = vweird.f32 %v5509
        %vm5841 = vweird.f32 %v5835
        %vm5842 = vmor %vm5840, %vm5841
        %v5843 = vsel %vm5842, %v5835, %v5839
        %v5844 = vand.u32 2147483647, %v5509
        %vm5845 = vcmp.eq.f32.partialorder %v5844, 8.507059e+37
        %v5846 = vand.u32 %v5509, 2147483648
        %v5847 = vor.u32 1.1754944e-38, %v5846
        %v5848 = vsel %vm5845, %v5847, %v5843
        %v5849 = vmul.f32 1.0, %v5848
        %v5850 = vrcp.pop %v5510
        %v5851 = vmul.f32 %v5510, %v5850
        %v5852 = vsub.f32 1.0, %v5851
        %v5853 = vmul.f32 %v5850, %v5852
        %v5854 = vadd.f32 %v5850, %v5853
        %vm5855 = vweird.f32 %v5510
        %vm5856 = vweird.f32 %v5850
        %vm5857 = vmor %vm5855, %vm5856
        %v5858 = vsel %vm5857, %v5850, %v5854
        %v5859 = vand.u32 2147483647, %v5510
        %vm5860 = vcmp.eq.f32.partialorder %v5859, 8.507059e+37
        %v5861 = vand.u32 %v5510, 2147483648
        %v5862 = vor.u32 1.1754944e-38, %v5861
        %v5863 = vsel %vm5860, %v5862, %v5858
        %v5864 = vmul.f32 1.0, %v5863
        %v5865 = vrcp.pop %v5511
        %v5866 = vmul.f32 %v5511, %v5865
        %v5867 = vsub.f32 1.0, %v5866
        %v5868 = vmul.f32 %v5865, %v5867
        %v5869 = vadd.f32 %v5865, %v5868
        %vm5870 = vweird.f32 %v5511
        %vm5871 = vweird.f32 %v5865
        %vm5872 = vmor %vm5870, %vm5871
        %v5873 = vsel %vm5872, %v5865, %v5869
        %v5874 = vand.u32 2147483647, %v5511
        %vm5875 = vcmp.eq.f32.partialorder %v5874, 8.507059e+37
        %v5876 = vand.u32 %v5511, 2147483648
        %v5877 = vor.u32 1.1754944e-38, %v5876
        %v5878 = vsel %vm5875, %v5877, %v5873
        %v5879 = vmul.f32 1.0, %v5878
        %v5880 = vrcp.pop %v5512
        %v5881 = vmul.f32 %v5512, %v5880
        %v5882 = vsub.f32 1.0, %v5881
        %v5883 = vmul.f32 %v5880, %v5882
        %v5884 = vadd.f32 %v5880, %v5883
        %vm5885 = vweird.f32 %v5512
        %vm5886 = vweird.f32 %v5880
        %vm5887 = vmor %vm5885, %vm5886
        %v5888 = vsel %vm5887, %v5880, %v5884
        %v5889 = vand.u32 2147483647, %v5512
        %vm5890 = vcmp.eq.f32.partialorder %v5889, 8.507059e+37
        %v5891 = vand.u32 %v5512, 2147483648
        %v5892 = vor.u32 1.1754944e-38, %v5891
        %v5893 = vsel %vm5890, %v5892, %v5888
        %v5894 = vmul.f32 1.0, %v5893
        %v5895 = vrcp.pop %v5513
        %v5896 = vmul.f32 %v5513, %v5895
        %v5897 = vsub.f32 1.0, %v5896
        %v5898 = vmul.f32 %v5895, %v5897
        %v5899 = vadd.f32 %v5895, %v5898
        %vm5900 = vweird.f32 %v5513
        %vm5901 = vweird.f32 %v5895
        %vm5902 = vmor %vm5900, %vm5901
        %v5903 = vsel %vm5902, %v5895, %v5899
        %v5904 = vand.u32 2147483647, %v5513
        %vm5905 = vcmp.eq.f32.partialorder %v5904, 8.507059e+37
        %v5906 = vand.u32 %v5513, 2147483648
        %v5907 = vor.u32 1.1754944e-38, %v5906
        %v5908 = vsel %vm5905, %v5907, %v5903
        %v5909 = vmul.f32 1.0, %v5908
        %v5910 = vrcp.pop %v5514
        %v5911 = vmul.f32 %v5514, %v5910
        %v5912 = vsub.f32 1.0, %v5911
        %v5913 = vmul.f32 %v5910, %v5912
        %v5914 = vadd.f32 %v5910, %v5913
        %vm5915 = vweird.f32 %v5514
        %vm5916 = vweird.f32 %v5910
        %vm5917 = vmor %vm5915, %vm5916
        %v5918 = vsel %vm5917, %v5910, %v5914
        %v5919 = vand.u32 2147483647, %v5514
        %vm5920 = vcmp.eq.f32.partialorder %v5919, 8.507059e+37
        %v5921 = vand.u32 %v5514, 2147483648
        %v5922 = vor.u32 1.1754944e-38, %v5921
        %v5923 = vsel %vm5920, %v5922, %v5918
        %v5924 = vmul.f32 1.0, %v5923
        %v5925 = vrcp.pop %v5515
        %v5926 = vmul.f32 %v5515, %v5925
        %v5927 = vsub.f32 1.0, %v5926
        %v5928 = vmul.f32 %v5925, %v5927
        %v5929 = vadd.f32 %v5925, %v5928
        %vm5930 = vweird.f32 %v5515
        %vm5931 = vweird.f32 %v5925
        %vm5932 = vmor %vm5930, %vm5931
        %v5933 = vsel %vm5932, %v5925, %v5929
        %v5934 = vand.u32 2147483647, %v5515
        %vm5935 = vcmp.eq.f32.partialorder %v5934, 8.507059e+37
        %v5936 = vand.u32 %v5515, 2147483648
        %v5937 = vor.u32 1.1754944e-38, %v5936
        %v5938 = vsel %vm5935, %v5937, %v5933
        %v5939 = vmul.f32 1.0, %v5938
        %v5940 = vrcp.pop %v5516
        %v5941 = vmul.f32 %v5516, %v5940
        %v5942 = vsub.f32 1.0, %v5941
        %v5943 = vmul.f32 %v5940, %v5942
        %v5944 = vadd.f32 %v5940, %v5943
        %vm5945 = vweird.f32 %v5516
        %vm5946 = vweird.f32 %v5940
        %vm5947 = vmor %vm5945, %vm5946
        %v5948 = vsel %vm5947, %v5940, %v5944
        %v5949 = vand.u32 2147483647, %v5516
        %vm5950 = vcmp.eq.f32.partialorder %v5949, 8.507059e+37
        %v5951 = vand.u32 %v5516, 2147483648
        %v5952 = vor.u32 1.1754944e-38, %v5951
        %v5953 = vsel %vm5950, %v5952, %v5948
        %v5954 = vmul.f32 1.0, %v5953
        %v5955 = vrcp.pop %v5517
        %v5956 = vmul.f32 %v5517, %v5955
        %v5957 = vsub.f32 1.0, %v5956
        %v5958 = vmul.f32 %v5955, %v5957
        %v5959 = vadd.f32 %v5955, %v5958
        %vm5960 = vweird.f32 %v5517
        %vm5961 = vweird.f32 %v5955
        %vm5962 = vmor %vm5960, %vm5961
        %v5963 = vsel %vm5962, %v5955, %v5959
        %v5964 = vand.u32 2147483647, %v5517
        %vm5965 = vcmp.eq.f32.partialorder %v5964, 8.507059e+37
        %v5966 = vand.u32 %v5517, 2147483648
        %v5967 = vor.u32 1.1754944e-38, %v5966
        %v5968 = vsel %vm5965, %v5967, %v5963
        %v5969 = vmul.f32 1.0, %v5968
        %v5970 = vrcp.pop %v5518
        %v5971 = vmul.f32 %v5518, %v5970
        %v5972 = vsub.f32 1.0, %v5971
        %v5973 = vmul.f32 %v5970, %v5972
        %v5974 = vadd.f32 %v5970, %v5973
        %vm5975 = vweird.f32 %v5518
        %vm5976 = vweird.f32 %v5970
        %vm5977 = vmor %vm5975, %vm5976
        %v5978 = vsel %vm5977, %v5970, %v5974
        %v5979 = vand.u32 2147483647, %v5518
        %vm5980 = vcmp.eq.f32.partialorder %v5979, 8.507059e+37
        %v5981 = vand.u32 %v5518, 2147483648
        %v5982 = vor.u32 1.1754944e-38, %v5981
        %v5983 = vsel %vm5980, %v5982, %v5978
        %v5984 = vmul.f32 1.0, %v5983
        %v5985 = vrcp.pop %v5519
        %v5986 = vmul.f32 %v5519, %v5985
        %v5987 = vsub.f32 1.0, %v5986
        %v5988 = vmul.f32 %v5985, %v5987
        %v5989 = vadd.f32 %v5985, %v5988
        %vm5990 = vweird.f32 %v5519
        %vm5991 = vweird.f32 %v5985
        %vm5992 = vmor %vm5990, %vm5991
        %v5993 = vsel %vm5992, %v5985, %v5989
        %v5994 = vand.u32 2147483647, %v5519
        %vm5995 = vcmp.eq.f32.partialorder %v5994, 8.507059e+37
        %v5996 = vand.u32 %v5519, 2147483648
        %v5997 = vor.u32 1.1754944e-38, %v5996
        %v5998 = vsel %vm5995, %v5997, %v5993
        %v5999 = vmul.f32 1.0, %v5998
        %vm6000 = vcmask 7168
        %6001 = vst.msk [vmem:[%s476] sm:$0xff] %vm6000, %v5534
        %6002 = vst.msk [vmem:[%s476 + $0x8] sm:$0xff] %vm6000, %v5549
        %6003 = vst.msk [vmem:[%s476 + $0x10] sm:$0xff] %vm6000, %v5564
        %6004 = vst.msk [vmem:[%s476 + $0x18] sm:$0xff] %vm6000, %v5579
        %6005 = vst.msk [vmem:[%s476 + $0x20] sm:$0xff] %vm6000, %v5594
        %6006 = vst.msk [vmem:[%s476 + $0x28] sm:$0xff] %vm6000, %v5609
        %6007 = vst.msk [vmem:[%s476 + $0x30] sm:$0xff] %vm6000, %v5624
        %6008 = vst.msk [vmem:[%s476 + $0x38] sm:$0xff] %vm6000, %v5639
        %6009 = vst.msk [vmem:[%s476 + $0x40] sm:$0xff] %vm6000, %v5654
        %6010 = vst.msk [vmem:[%s476 + $0x48] sm:$0xff] %vm6000, %v5669
        %6011 = vst.msk [vmem:[%s476 + $0x50] sm:$0xff] %vm6000, %v5684
        %6012 = vst.msk [vmem:[%s476 + $0x58] sm:$0xff] %vm6000, %v5699
        %6013 = vst.msk [vmem:[%s476 + $0x60] sm:$0xff] %vm6000, %v5714
        %6014 = vst.msk [vmem:[%s476 + $0x68] sm:$0xff] %vm6000, %v5729
        %6015 = vst.msk [vmem:[%s476 + $0x70] sm:$0xff] %vm6000, %v5744
        %6016 = vst.msk [vmem:[%s476 + $0x78] sm:$0xff] %vm6000, %v5759
        %6017 = vst.msk [vmem:[%s476 + $0x80] sm:$0xff] %vm6000, %v5774
        %6018 = vst.msk [vmem:[%s476 + $0x88] sm:$0xff] %vm6000, %v5789
        %6019 = vst.msk [vmem:[%s476 + $0x90] sm:$0xff] %vm6000, %v5804
        %6020 = vst.msk [vmem:[%s476 + $0x98] sm:$0xff] %vm6000, %v5819
        %6021 = vst.msk [vmem:[%s476 + $0xa0] sm:$0xff] %vm6000, %v5834
        %6022 = vst.msk [vmem:[%s476 + $0xa8] sm:$0xff] %vm6000, %v5849
        %6023 = vst.msk [vmem:[%s476 + $0xb0] sm:$0xff] %vm6000, %v5864
        %6024 = vst.msk [vmem:[%s476 + $0xb8] sm:$0xff] %vm6000, %v5879
        %6025 = vst.msk [vmem:[%s476 + $0xc0] sm:$0xff] %vm6000, %v5894
        %6026 = vst.msk [vmem:[%s476 + $0xc8] sm:$0xff] %vm6000, %v5909
        %6027 = vst.msk [vmem:[%s476 + $0xd0] sm:$0xff] %vm6000, %v5924
        %6028 = vst.msk [vmem:[%s476 + $0xd8] sm:$0xff] %vm6000, %v5939
        %6029 = vst.msk [vmem:[%s476 + $0xe0] sm:$0xff] %vm6000, %v5954
        %6030 = vst.msk [vmem:[%s476 + $0xe8] sm:$0xff] %vm6000, %v5969
        %6031 = vst.msk [vmem:[%s476 + $0xf0] sm:$0xff] %vm6000, %v5984
        %6032 = vst.msk [vmem:[%s476 + $0xf8] sm:$0xff] %vm6000, %v5999
        %s6033 = sand.u32 %s334, 1
        %s6034 = sand.u32 %s334, 1
        %s6035 = smul.addr %s6034, 256
        %s6036 = scalar_lea.vmem [#allocation3], %s6035
        // Predicated region
        $region77: #{tpu_custom_call.1} parent=75 // pred_check
          %p6037 = pneg %p344
        $region78: #{tpu_custom_call.1} parent=75 // pred_check_branch
          %6039 = sbr.rel (%p6037) target = $region80
        $region79: #{tpu_custom_call.1} parent=75 // pred_region
          %s6040 = smul.u32 32, %s27
          %s6041 = ssub.s32 63, %s6040
          %p6042 = scmp.lt.s32.totalorder %s6041, 32
          %s6043 = scalar_select %p6042, %s6041, 32
          %s6044 = smul.u32 8, %s6043
          %p6045 = scmp.ne.s32.totalorder 0, %s6044
          %s6046 = smul.addr %s6040, 8
          %s6047 = scalar_lea.vmem %s14, %s6046
          // Predicated region
          $region81: #{tpu_custom_call.1} parent=79 // pred_check
            %p6048 = pneg %p6045
          $region82: #{tpu_custom_call.1} parent=79 // pred_check_branch
            %6050 = sbr.rel (%p6048) target = $region84
          $region83: #{tpu_custom_call.1} parent=79 // pred_region
            // Predicated region
            $region85: #{tpu_custom_call.1} parent=83 // pred_check
              _
            $region86: #{tpu_custom_call.1} parent=83 // pred_check_branch
              %6052 = sbr.rel (0) target = $region88
            $region87: #{tpu_custom_call.1} parent=83 // pred_region
              // Predicated region
              $region107: #{tpu_custom_call.1} parent=87 // pred_check
                _
              $region108: #{tpu_custom_call.1} parent=87 // pred_check_branch
                %6164 = sbr.rel (0) target = $region110
              $region109: #{tpu_custom_call.1} parent=87 // pred_region
                %s6165 = sshrl.u32 %s6043, 5
                // While loop
                $region111: #{tpu_custom_call.1} parent=109 // loop_pre_header
                  _
                $region112: #{tpu_custom_call.1} parent=109 // loop_header
                  %s6167 = sphi 0, %s6169
                  %p6168 = scmp.ge.s32.totalorder %s6167, %s6165
                  %s6172 = sphi 0, %s6241
                  %s6173 = sphi %s6036, %s6244
                  %s6174 = sphi %s6047, %s6245
                $region113: #{tpu_custom_call.1} parent=109 // loop_header_branch
                  %6171 = sbr.rel (%p6168) target = $region117
                $region114: #{tpu_custom_call.1} parent=109 // loop_body
                  %v6175 = vld [vmem:[%s6173] sm:$0xff]
                  %6176 = vst [vmem:[%s6174] sm:$0xff] %v6175
                  %v6177 = vld [vmem:[%s6173 + $0x8] sm:$0xff]
                  %6178 = vst [vmem:[%s6174 + $0x8] sm:$0xff] %v6177
                  %v6179 = vld [vmem:[%s6173 + $0x10] sm:$0xff]
                  %6180 = vst [vmem:[%s6174 + $0x10] sm:$0xff] %v6179
                  %v6181 = vld [vmem:[%s6173 + $0x18] sm:$0xff]
                  %6182 = vst [vmem:[%s6174 + $0x18] sm:$0xff] %v6181
                  %v6183 = vld [vmem:[%s6173 + $0x20] sm:$0xff]
                  %6184 = vst [vmem:[%s6174 + $0x20] sm:$0xff] %v6183
                  %v6185 = vld [vmem:[%s6173 + $0x28] sm:$0xff]
                  %6186 = vst [vmem:[%s6174 + $0x28] sm:$0xff] %v6185
                  %v6187 = vld [vmem:[%s6173 + $0x30] sm:$0xff]
                  %6188 = vst [vmem:[%s6174 + $0x30] sm:$0xff] %v6187
                  %v6189 = vld [vmem:[%s6173 + $0x38] sm:$0xff]
                  %6190 = vst [vmem:[%s6174 + $0x38] sm:$0xff] %v6189
                  %v6191 = vld [vmem:[%s6173 + $0x40] sm:$0xff]
                  %6192 = vst [vmem:[%s6174 + $0x40] sm:$0xff] %v6191
                  %v6193 = vld [vmem:[%s6173 + $0x48] sm:$0xff]
                  %6194 = vst [vmem:[%s6174 + $0x48] sm:$0xff] %v6193
                  %v6195 = vld [vmem:[%s6173 + $0x50] sm:$0xff]
                  %6196 = vst [vmem:[%s6174 + $0x50] sm:$0xff] %v6195
                  %v6197 = vld [vmem:[%s6173 + $0x58] sm:$0xff]
                  %6198 = vst [vmem:[%s6174 + $0x58] sm:$0xff] %v6197
                  %v6199 = vld [vmem:[%s6173 + $0x60] sm:$0xff]
                  %6200 = vst [vmem:[%s6174 + $0x60] sm:$0xff] %v6199
                  %v6201 = vld [vmem:[%s6173 + $0x68] sm:$0xff]
                  %6202 = vst [vmem:[%s6174 + $0x68] sm:$0xff] %v6201
                  %v6203 = vld [vmem:[%s6173 + $0x70] sm:$0xff]
                  %6204 = vst [vmem:[%s6174 + $0x70] sm:$0xff] %v6203
                  %v6205 = vld [vmem:[%s6173 + $0x78] sm:$0xff]
                  %6206 = vst [vmem:[%s6174 + $0x78] sm:$0xff] %v6205
                  %v6207 = vld [vmem:[%s6173 + $0x80] sm:$0xff]
                  %6208 = vst [vmem:[%s6174 + $0x80] sm:$0xff] %v6207
                  %v6209 = vld [vmem:[%s6173 + $0x88] sm:$0xff]
                  %6210 = vst [vmem:[%s6174 + $0x88] sm:$0xff] %v6209
                  %v6211 = vld [vmem:[%s6173 + $0x90] sm:$0xff]
                  %6212 = vst [vmem:[%s6174 + $0x90] sm:$0xff] %v6211
                  %v6213 = vld [vmem:[%s6173 + $0x98] sm:$0xff]
                  %6214 = vst [vmem:[%s6174 + $0x98] sm:$0xff] %v6213
                  %v6215 = vld [vmem:[%s6173 + $0xa0] sm:$0xff]
                  %6216 = vst [vmem:[%s6174 + $0xa0] sm:$0xff] %v6215
                  %v6217 = vld [vmem:[%s6173 + $0xa8] sm:$0xff]
                  %6218 = vst [vmem:[%s6174 + $0xa8] sm:$0xff] %v6217
                  %v6219 = vld [vmem:[%s6173 + $0xb0] sm:$0xff]
                  %6220 = vst [vmem:[%s6174 + $0xb0] sm:$0xff] %v6219
                  %v6221 = vld [vmem:[%s6173 + $0xb8] sm:$0xff]
                  %6222 = vst [vmem:[%s6174 + $0xb8] sm:$0xff] %v6221
                  %v6223 = vld [vmem:[%s6173 + $0xc0] sm:$0xff]
                  %6224 = vst [vmem:[%s6174 + $0xc0] sm:$0xff] %v6223
                  %v6225 = vld [vmem:[%s6173 + $0xc8] sm:$0xff]
                  %6226 = vst [vmem:[%s6174 + $0xc8] sm:$0xff] %v6225
                  %v6227 = vld [vmem:[%s6173 + $0xd0] sm:$0xff]
                  %6228 = vst [vmem:[%s6174 + $0xd0] sm:$0xff] %v6227
                  %v6229 = vld [vmem:[%s6173 + $0xd8] sm:$0xff]
                  %6230 = vst [vmem:[%s6174 + $0xd8] sm:$0xff] %v6229
                  %v6231 = vld [vmem:[%s6173 + $0xe0] sm:$0xff]
                  %6232 = vst [vmem:[%s6174 + $0xe0] sm:$0xff] %v6231
                  %v6233 = vld [vmem:[%s6173 + $0xe8] sm:$0xff]
                  %6234 = vst [vmem:[%s6174 + $0xe8] sm:$0xff] %v6233
                  %v6235 = vld [vmem:[%s6173 + $0xf0] sm:$0xff]
                  %6236 = vst [vmem:[%s6174 + $0xf0] sm:$0xff] %v6235
                  %v6237 = vld [vmem:[%s6173 + $0xf8] sm:$0xff]
                  %6238 = vst [vmem:[%s6174 + $0xf8] sm:$0xff] %v6237
                  %s6239 = sadd.s32 1, %s6172
                  %p6240 = scmp.ge.s32.totalorder %s6239, %s6165
                  %s6241 = scalar_select %p6240, 0, %s6239
                  %s6242 = smul.u32 %s6241, 256
                  %s6243 = smul.u32 %s6241, 256
                  %s6244 = scalar_lea.vmem %s6036, %s6242 [#allocation3]
                  %s6245 = scalar_lea.vmem %s6047, %s6243
                $region115: #{tpu_custom_call.1} parent=109 // loop_footer
                  %s6169 = sadd.s32 %s6167, 1
                $region116: #{tpu_custom_call.1} parent=109 // loop_footer_branch
                  %6166 = sbr.rel target = $region112
                $region117: #{tpu_custom_call.1} parent=109 // loop_exit
                  _
                %s6246 = sshrl.u32 %s6043, 5
                %s6247 = sand.u32 %s6043, 31
                %s6248 = smul.u32 %s6246, 32
                %s6249 = smul.u32 8, %s6248
                %s6250 = scalar_lea.vmem %s6036, %s6249 [#allocation3]
                %s6251 = smul.u32 8, %s6248
                %s6252 = scalar_lea.vmem %s6047, %s6251
                // While loop
                $region118: #{tpu_custom_call.1} parent=109 // loop_pre_header
                  _
                $region119: #{tpu_custom_call.1} parent=109 // loop_header
                  %s6254 = sphi 0, %s6256
                  %p6255 = scmp.ge.s32.totalorder %s6254, %s6247
                  %s6259 = sphi 0, %s6266
                  %s6260 = sphi %s6250, %s6269
                  %s6261 = sphi %s6252, %s6270
                $region120: #{tpu_custom_call.1} parent=109 // loop_header_branch
                  %6258 = sbr.rel (%p6255) target = $region124
                $region121: #{tpu_custom_call.1} parent=109 // loop_body
                  %v6262 = vld [vmem:[%s6260] sm:$0xff]
                  %6263 = vst [vmem:[%s6261] sm:$0xff] %v6262
                  %s6264 = sadd.s32 1, %s6259
                  %p6265 = scmp.ge.s32.totalorder %s6264, %s6247
                  %s6266 = scalar_select %p6265, 0, %s6264
                  %s6267 = smul.u32 %s6266, 8
                  %s6268 = smul.u32 %s6266, 8
                  %s6269 = scalar_lea.vmem %s6250, %s6267 [#allocation3]
                  %s6270 = scalar_lea.vmem %s6252, %s6268
                $region122: #{tpu_custom_call.1} parent=109 // loop_footer
                  %s6256 = sadd.s32 %s6254, 1
                $region123: #{tpu_custom_call.1} parent=109 // loop_footer_branch
                  %6253 = sbr.rel target = $region119
                $region124: #{tpu_custom_call.1} parent=109 // loop_exit
                  _
              $region110: #{tpu_custom_call.1} parent=87 // pred_fallthru
                _
              // Predicated region
              $region125: #{tpu_custom_call.1} parent=87 // pred_check
                _
              $region126: #{tpu_custom_call.1} parent=87 // pred_check_branch
                %6272 = sbr.rel target = $region128
              $region127: #{tpu_custom_call.1} parent=87 // pred_region
                _
              $region128: #{tpu_custom_call.1} parent=87 // pred_fallthru
                _
            $region88: #{tpu_custom_call.1} parent=83 // pred_fallthru
              _
            // Predicated region
            $region89: #{tpu_custom_call.1} parent=83 // pred_check
              _
            $region90: #{tpu_custom_call.1} parent=83 // pred_check_branch
              %6054 = sbr.rel target = $region92
            $region91: #{tpu_custom_call.1} parent=83 // pred_region
              %s6056 = ssub.s32 256, 1
              %s6057 = sshrl.u32 %s6043, 5
              // While loop
              $region93: #{tpu_custom_call.1} parent=91 // loop_pre_header
                _
              $region94: #{tpu_custom_call.1} parent=91 // loop_header
                %s6059 = sphi 0, %s6061
                %p6060 = scmp.ge.s32.totalorder %s6059, %s6057
                %s6064 = sphi 0, %s6133
                %s6065 = sphi %s6036, %s6136
                %s6066 = sphi %s6047, %s6137
              $region95: #{tpu_custom_call.1} parent=91 // loop_header_branch
                %6063 = sbr.rel (%p6060) target = $region99
              $region96: #{tpu_custom_call.1} parent=91 // loop_body
                %v6067 = vld [vmem:[%s6065] sm:%s6056]
                %6068 = vst [vmem:[%s6066] sm:%s6056] %v6067
                %v6069 = vld [vmem:[%s6065 + $0x8] sm:%s6056]
                %6070 = vst [vmem:[%s6066 + $0x8] sm:%s6056] %v6069
                %v6071 = vld [vmem:[%s6065 + $0x10] sm:%s6056]
                %6072 = vst [vmem:[%s6066 + $0x10] sm:%s6056] %v6071
                %v6073 = vld [vmem:[%s6065 + $0x18] sm:%s6056]
                %6074 = vst [vmem:[%s6066 + $0x18] sm:%s6056] %v6073
                %v6075 = vld [vmem:[%s6065 + $0x20] sm:%s6056]
                %6076 = vst [vmem:[%s6066 + $0x20] sm:%s6056] %v6075
                %v6077 = vld [vmem:[%s6065 + $0x28] sm:%s6056]
                %6078 = vst [vmem:[%s6066 + $0x28] sm:%s6056] %v6077
                %v6079 = vld [vmem:[%s6065 + $0x30] sm:%s6056]
                %6080 = vst [vmem:[%s6066 + $0x30] sm:%s6056] %v6079
                %v6081 = vld [vmem:[%s6065 + $0x38] sm:%s6056]
                %6082 = vst [vmem:[%s6066 + $0x38] sm:%s6056] %v6081
                %v6083 = vld [vmem:[%s6065 + $0x40] sm:%s6056]
                %6084 = vst [vmem:[%s6066 + $0x40] sm:%s6056] %v6083
                %v6085 = vld [vmem:[%s6065 + $0x48] sm:%s6056]
                %6086 = vst [vmem:[%s6066 + $0x48] sm:%s6056] %v6085
                %v6087 = vld [vmem:[%s6065 + $0x50] sm:%s6056]
                %6088 = vst [vmem:[%s6066 + $0x50] sm:%s6056] %v6087
                %v6089 = vld [vmem:[%s6065 + $0x58] sm:%s6056]
                %6090 = vst [vmem:[%s6066 + $0x58] sm:%s6056] %v6089
                %v6091 = vld [vmem:[%s6065 + $0x60] sm:%s6056]
                %6092 = vst [vmem:[%s6066 + $0x60] sm:%s6056] %v6091
                %v6093 = vld [vmem:[%s6065 + $0x68] sm:%s6056]
                %6094 = vst [vmem:[%s6066 + $0x68] sm:%s6056] %v6093
                %v6095 = vld [vmem:[%s6065 + $0x70] sm:%s6056]
                %6096 = vst [vmem:[%s6066 + $0x70] sm:%s6056] %v6095
                %v6097 = vld [vmem:[%s6065 + $0x78] sm:%s6056]
                %6098 = vst [vmem:[%s6066 + $0x78] sm:%s6056] %v6097
                %v6099 = vld [vmem:[%s6065 + $0x80] sm:%s6056]
                %6100 = vst [vmem:[%s6066 + $0x80] sm:%s6056] %v6099
                %v6101 = vld [vmem:[%s6065 + $0x88] sm:%s6056]
                %6102 = vst [vmem:[%s6066 + $0x88] sm:%s6056] %v6101
                %v6103 = vld [vmem:[%s6065 + $0x90] sm:%s6056]
                %6104 = vst [vmem:[%s6066 + $0x90] sm:%s6056] %v6103
                %v6105 = vld [vmem:[%s6065 + $0x98] sm:%s6056]
                %6106 = vst [vmem:[%s6066 + $0x98] sm:%s6056] %v6105
                %v6107 = vld [vmem:[%s6065 + $0xa0] sm:%s6056]
                %6108 = vst [vmem:[%s6066 + $0xa0] sm:%s6056] %v6107
                %v6109 = vld [vmem:[%s6065 + $0xa8] sm:%s6056]
                %6110 = vst [vmem:[%s6066 + $0xa8] sm:%s6056] %v6109
                %v6111 = vld [vmem:[%s6065 + $0xb0] sm:%s6056]
                %6112 = vst [vmem:[%s6066 + $0xb0] sm:%s6056] %v6111
                %v6113 = vld [vmem:[%s6065 + $0xb8] sm:%s6056]
                %6114 = vst [vmem:[%s6066 + $0xb8] sm:%s6056] %v6113
                %v6115 = vld [vmem:[%s6065 + $0xc0] sm:%s6056]
                %6116 = vst [vmem:[%s6066 + $0xc0] sm:%s6056] %v6115
                %v6117 = vld [vmem:[%s6065 + $0xc8] sm:%s6056]
                %6118 = vst [vmem:[%s6066 + $0xc8] sm:%s6056] %v6117
                %v6119 = vld [vmem:[%s6065 + $0xd0] sm:%s6056]
                %6120 = vst [vmem:[%s6066 + $0xd0] sm:%s6056] %v6119
                %v6121 = vld [vmem:[%s6065 + $0xd8] sm:%s6056]
                %6122 = vst [vmem:[%s6066 + $0xd8] sm:%s6056] %v6121
                %v6123 = vld [vmem:[%s6065 + $0xe0] sm:%s6056]
                %6124 = vst [vmem:[%s6066 + $0xe0] sm:%s6056] %v6123
                %v6125 = vld [vmem:[%s6065 + $0xe8] sm:%s6056]
                %6126 = vst [vmem:[%s6066 + $0xe8] sm:%s6056] %v6125
                %v6127 = vld [vmem:[%s6065 + $0xf0] sm:%s6056]
                %6128 = vst [vmem:[%s6066 + $0xf0] sm:%s6056] %v6127
                %v6129 = vld [vmem:[%s6065 + $0xf8] sm:%s6056]
                %6130 = vst [vmem:[%s6066 + $0xf8] sm:%s6056] %v6129
                %s6131 = sadd.s32 1, %s6064
                %p6132 = scmp.ge.s32.totalorder %s6131, %s6057
                %s6133 = scalar_select %p6132, 0, %s6131
                %s6134 = smul.u32 %s6133, 256
                %s6135 = smul.u32 %s6133, 256
                %s6136 = scalar_lea.vmem %s6036, %s6134 [#allocation3]
                %s6137 = scalar_lea.vmem %s6047, %s6135
              $region97: #{tpu_custom_call.1} parent=91 // loop_footer
                %s6061 = sadd.s32 %s6059, 1
              $region98: #{tpu_custom_call.1} parent=91 // loop_footer_branch
                %6058 = sbr.rel target = $region94
              $region99: #{tpu_custom_call.1} parent=91 // loop_exit
                _
              %s6138 = sshrl.u32 %s6043, 5
              %s6139 = sand.u32 %s6043, 31
              %s6140 = smul.u32 %s6138, 32
              %s6141 = smul.u32 8, %s6140
              %s6142 = scalar_lea.vmem %s6036, %s6141 [#allocation3]
              %s6143 = smul.u32 8, %s6140
              %s6144 = scalar_lea.vmem %s6047, %s6143
              // While loop
              $region100: #{tpu_custom_call.1} parent=91 // loop_pre_header
                _
              $region101: #{tpu_custom_call.1} parent=91 // loop_header
                %s6146 = sphi 0, %s6148
                %p6147 = scmp.ge.s32.totalorder %s6146, %s6139
                %s6151 = sphi 0, %s6158
                %s6152 = sphi %s6142, %s6161
                %s6153 = sphi %s6144, %s6162
              $region102: #{tpu_custom_call.1} parent=91 // loop_header_branch
                %6150 = sbr.rel (%p6147) target = $region106
              $region103: #{tpu_custom_call.1} parent=91 // loop_body
                %v6154 = vld [vmem:[%s6152] sm:%s6056]
                %6155 = vst [vmem:[%s6153] sm:%s6056] %v6154
                %s6156 = sadd.s32 1, %s6151
                %p6157 = scmp.ge.s32.totalorder %s6156, %s6139
                %s6158 = scalar_select %p6157, 0, %s6156
                %s6159 = smul.u32 %s6158, 8
                %s6160 = smul.u32 %s6158, 8
                %s6161 = scalar_lea.vmem %s6142, %s6159 [#allocation3]
                %s6162 = scalar_lea.vmem %s6144, %s6160
              $region104: #{tpu_custom_call.1} parent=91 // loop_footer
                %s6148 = sadd.s32 %s6146, 1
              $region105: #{tpu_custom_call.1} parent=91 // loop_footer_branch
                %6145 = sbr.rel target = $region101
              $region106: #{tpu_custom_call.1} parent=91 // loop_exit
                _
            $region92: #{tpu_custom_call.1} parent=83 // pred_fallthru
              _
          $region84: #{tpu_custom_call.1} parent=79 // pred_fallthru
            _
          %6273 = vnop
        $region80: #{tpu_custom_call.1} parent=75 // pred_fallthru
          _
      $region76: #{tpu_custom_call.1} parent=5 // pred_fallthru
        _
      %p6274 = scmp.le.s32.totalorder 2, %s22
      // Predicated region
      $region129: #{tpu_custom_call.1} parent=5 // pred_check
        %p6275 = pneg %p6274
      $region130: #{tpu_custom_call.1} parent=5 // pred_check_branch
        %6277 = sbr.rel (%p6275) target = $region132
      $region131: #{tpu_custom_call.1} parent=5 // pred_region
        %s6278 = ssub.s32 %s22, 2
        // Predicated region
        $region133: #{tpu_custom_call.1} parent=131 // pred_check
          %p6279 = pneg %p350
        $region134: #{tpu_custom_call.1} parent=131 // pred_check_branch
          %6281 = sbr.rel (%p6279) target = $region136
        $region135: #{tpu_custom_call.1} parent=131 // pred_region
          %s6282 = sand.u32 %s335, 1
          %s6283 = sand.u32 %s335, 1
          %s6284 = smul.addr %s6283, 256
          %s6285 = scalar_lea.vmem [#allocation3], %s6284
        $region136: #{tpu_custom_call.1} parent=131 // pred_fallthru
          _
      $region132: #{tpu_custom_call.1} parent=5 // pred_fallthru
        _
    $region6: #{tpu_custom_call.1} parent=1 // loop_footer
      %s26 = sadd.s32 1, %s22
    $region7: #{tpu_custom_call.1} parent=1 // loop_footer_branch
      %21 = sbr.rel target = $region3
    $region8: #{tpu_custom_call.1} parent=1 // loop_exit
      _

</llo_original>
